<compile_context>
chip_gen: v7x
topology: tpu7x:2x2x1
jax: 0.10.0
libtpu: 0.0.40
codegen_flags: <defaults>
</compile_context>

<pallas_src>
import functools

import jax
import jax.numpy as jnp
from jax import lax
from jax.experimental import pallas as pl
from jax.experimental.pallas import tpu as pltpu


def _round_up(x, m):
    return ((x + m - 1) // m) * m


# ----------------------------- kernel body ----------------------------------

def _joint_kernel(k, d_p, topk_dtype,
                  x_ref, wenc_ref, benc_ref, wcat_ref, embsq_ref,
                  linb_ref, m1w_ref, m1b_ref, m2w_ref, m2b_ref,
                  final_ref, feat_ref, recon_ref, lin_ref, inter_ref):
    cdt = wcat_ref.dtype          # MXU operand dtype (f32 or bf16)

    # --- Primary SAE encoder: Linear + ReLU (f32 accumulation) --------------
    feats = jnp.maximum(
        jnp.dot(x_ref[...], wenc_ref[...],
                preferred_element_type=jnp.float32) + benc_ref[...],
        0.0)                                                    # [TB, F] f32

    # --- TopK sparsity -------------------------------------------------------
    # k is a static Python int -> fully unrolled; ONE cross-lane max-reduce per
    # step.  feats >= 0 post-ReLU, so taken lanes are poisoned to -1 and the
    # final mask is simply f_work < 0 (no bool accumulator).  All lanes tied
    # with the current max are taken together: exact for the all-zeros tail,
    # measure-zero relaxation of first-occurrence order otherwise.  On the
    # bf16 path the selection state is bf16 (v6e/v7x VPU is bf16-native); the
    # values written out are always the f32 feats.
    f_work = feats.astype(topk_dtype)
    for _ in range(k):
        cur_max = jnp.max(f_work, axis=-1, keepdims=True)
        f_work = jnp.where(f_work == cur_max, -1.0, f_work)
    sparse = jnp.where(f_work < 0.0, feats, 0.0)                # [TB, F] f32
    feat_ref[...] = sparse

    # --- One wide MXU matmul: [w_dec | lin_w | emb] --------------------------
    sparse_c = sparse.astype(cdt)
    big = jnp.dot(sparse_c, wcat_ref[...],
                  preferred_element_type=jnp.float32)           # [TB, 2Dp+Ep]
    prim_recon = big[:, :d_p]                                   # SAE decoder
    lin = big[:, d_p:2 * d_p] + linb_ref[...]                   # NFM linear
    sum_emb = big[:, 2 * d_p:]                                  # sum_f f_i*e_i
    recon_ref[...] = prim_recon
    lin_ref[...] = lin

    # --- NFM bilinear pooling (emb*emb precomputed once at prep time) -------
    sum_sq = jnp.dot((sparse * sparse).astype(cdt), embsq_ref[...],
                     preferred_element_type=jnp.float32)        # [TB, Ep]
    inter_vec = 0.5 * (sum_emb * sum_emb - sum_sq)              # [TB, Ep]

    # --- Interaction MLP (Dropout == identity in eval mode) -----------------
    h = jnp.maximum(
        jnp.dot(inter_vec.astype(cdt), m1w_ref[...],
                preferred_element_type=jnp.float32) + m1b_ref[...],
        0.0)                                                    # [TB, Ep]
    inter = (jnp.dot(h.astype(cdt), m2w_ref[...],
                     preferred_element_type=jnp.float32) + m2b_ref[...])
    inter_ref[...] = inter                                      # [TB, Dp]

    # --- Final reconstruction -------------------------------------------------
    final_ref[...] = prim_recon + lin + inter


# ----------------------------- host wrappers ---------------------------------

def prepare_joint_weights(params, compute_dtype=jnp.bfloat16):
    """One-time weight prep.  Call ONCE and reuse across forward calls.

    Pads the NFM embedding dim and the output dim up to full 128-lane tiles,
    fuses the three sparse-LHS weights into one wide matrix, precomputes
    emb**2, and casts MXU operands to `compute_dtype` (biases stay f32).
    """
    D, F = params["w_enc"].shape
    E = params["emb"].shape[1]
    D_p = _round_up(D, 128)
    E_p = _round_up(E, 128)
    pad_d = D_p - D
    pad_e = E_p - E
    cdt = compute_dtype

    emb_p = jnp.pad(params["emb"], ((0, 0), (0, pad_e)))
    w_dec_p = jnp.pad(params["w_dec"], ((0, 0), (0, pad_d)))
    lin_w_p = jnp.pad(params["lin_w"], ((0, 0), (0, pad_d)))
    w_cat = jnp.concatenate([w_dec_p, lin_w_p, emb_p], axis=1).astype(cdt)

    weights = {
        "w_enc": params["w_enc"].astype(cdt),                          # [D, F]
        "b_enc": params["b_enc"].astype(jnp.float32),                  # [1, F]
        "w_cat": w_cat,                                                # [F, 2Dp+Ep]
        "emb_sq": (emb_p * emb_p).astype(cdt),                         # [F, Ep]
        "lin_b": jnp.pad(params["lin_b"],
                         ((0, 0), (0, pad_d))).astype(jnp.float32),    # [1, Dp]
        "m1_w": jnp.pad(params["m1_w"],
                        ((0, pad_e), (0, pad_e))).astype(cdt),         # [Ep, Ep]
        "m1_b": jnp.pad(params["m1_b"],
                        ((0, 0), (0, pad_e))).astype(jnp.float32),     # [1, Ep]
        "m2_w": jnp.pad(params["m2_w"],
                        ((0, pad_e), (0, pad_d))).astype(cdt),         # [Ep, Dp]
        "m2_b": jnp.pad(params["m2_b"],
                        ((0, 0), (0, pad_d))).astype(jnp.float32),     # [1, Dp]
    }
    meta = {"d": D, "d_p": D_p, "e": E, "e_p": E_p, "f": F,
            "compute_dtype": cdt}
    return weights, meta


def _default_tb(B):
    # 256-row tiles only when that still leaves >= 2 grid steps (v7x has two
    # TensorCores and the "parallel" batch axis is what shards across them);
    # otherwise 128-row tiles (fills v5e's MXU, half-fills v6e/v7x but keeps
    # 2-core occupancy); otherwise a single whole-batch tile.
    if B >= 512 and B % 256 == 0:
        return 256
    if B >= 256 and B % 128 == 0:
        return 128
    return B


def joint_sae_nfm_forward(x, weights, meta, k, *, tb=None):
    """Fused JointSAENFM forward using weights from prepare_joint_weights."""
    B, D = x.shape
    assert D == meta["d"], "input dim does not match prepared weights"
    F, D_p, E_p = meta["f"], meta["d_p"], meta["e_p"]
    cdt = meta["compute_dtype"]
    assert k <= F, "TopK k must not exceed the number of SAE features"

    if tb is None:
        tb = _default_tb(B)
    tb = min(tb, B)
    assert B % tb == 0 and (tb % 8 == 0 or tb == B)

    n_cat = 2 * D_p + E_p
    topk_dtype = jnp.bfloat16 if cdt == jnp.bfloat16 else jnp.float32
    itemsize = jnp.dtype(cdt).itemsize

    row = lambda i: (i, 0)
    full = lambda i: (0, 0)
    once = pl.Buffered(1)   # constant-index weights: no double buffering

    in_specs = [
        pl.BlockSpec((tb, D), row),                                  # x
        pl.BlockSpec((D, F), full, pipeline_mode=once),              # w_enc
        pl.BlockSpec((1, F), full, pipeline_mode=once),              # b_enc
        pl.BlockSpec((F, n_cat), full, pipeline_mode=once),          # w_cat
        pl.BlockSpec((F, E_p), full, pipeline_mode=once),            # emb**2
        pl.BlockSpec((1, D_p), full, pipeline_mode=once),            # lin_b
        pl.BlockSpec((E_p, E_p), full, pipeline_mode=once),          # m1_w
        pl.BlockSpec((1, E_p), full, pipeline_mode=once),            # m1_b
        pl.BlockSpec((E_p, D_p), full, pipeline_mode=once),          # m2_w
        pl.BlockSpec((1, D_p), full, pipeline_mode=once),            # m2_b
    ]
    out_specs = (
        pl.BlockSpec((tb, D_p), row),      # final_reconstruction
        pl.BlockSpec((tb, F), row),        # primary_features (sparse)
        pl.BlockSpec((tb, D_p), row),      # primary_recon
        pl.BlockSpec((tb, D_p), row),      # linear_out
        pl.BlockSpec((tb, D_p), row),      # interaction_out
    )
    out_shape = (
        jax.ShapeDtypeStruct((B, D_p), jnp.float32),
        jax.ShapeDtypeStruct((B, F), jnp.float32),
        jax.ShapeDtypeStruct((B, D_p), jnp.float32),
        jax.ShapeDtypeStruct((B, D_p), jnp.float32),
        jax.ShapeDtypeStruct((B, D_p), jnp.float32),
    )

    # VMEM budget: single-buffered weights + double-buffered activation tiles
    # + headroom for in-kernel intermediates / compiler scratch.
    w_bytes = (D * F * itemsize + F * n_cat * itemsize + F * E_p * itemsize
               + E_p * E_p * itemsize + E_p * D_p * itemsize
               + 4 * (F + 2 * E_p + 3 * D_p))
    act_bytes = tb * D * itemsize + tb * (4 * D_p + F) * 4
    vmem_limit = int(min(96 * 2 ** 20,
                         max(16 * 2 ** 20,
                             2 * (w_bytes + 2 * act_bytes) + 4 * 2 ** 20)))

    flops = 2 * B * (F * (D + n_cat + E_p) + E_p * E_p + E_p * D_p)
    bytes_accessed = w_bytes + B * D * itemsize + B * (4 * D_p + F) * 4
    cost = pl.CostEstimate(flops=flops, transcendentals=0,
                           bytes_accessed=bytes_accessed)

    outs = pl.pallas_call(
        functools.partial(_joint_kernel, k, D_p, topk_dtype),
        grid=(B // tb,),
        in_specs=in_specs,
        out_specs=out_specs,
        out_shape=out_shape,
        cost_estimate=cost,
        compiler_params=pltpu.CompilerParams(
            dimension_semantics=("parallel",),
            vmem_limit_bytes=vmem_limit),
    )(x.astype(cdt), weights["w_enc"], weights["b_enc"], weights["w_cat"],
      weights["emb_sq"], weights["lin_b"], weights["m1_w"], weights["m1_b"],
      weights["m2_w"], weights["m2_b"])

    final, feat, recon, lin, inter = outs
    if D_p != D:   # slice the lane padding back off (no-op when D % 128 == 0)
        final, recon, lin, inter = (a[:, :D] for a in (final, recon, lin, inter))
    return final, feat, recon, lin, inter


def joint_sae_nfm(x, params, k, *, tb=None, compute_dtype=jnp.bfloat16):
    """Convenience one-shot wrapper.  For repeated calls, run
    prepare_joint_weights() once and call joint_sae_nfm_forward()."""
    weights, meta = prepare_joint_weights(params, compute_dtype)
    return joint_sae_nfm_forward(x, weights, meta, k, tb=tb)


# ---------------------------- pure-JAX reference -----------------------------

def _hdot(a, b):
    return jnp.dot(a, b, precision="highest")


def encoder_ref(x, p):
    return jnp.maximum(_hdot(x, p["w_enc"]) + p["b_enc"], 0.0)


def topk_ref(feats, k):
    vals, idx = lax.top_k(feats, k)
    return jnp.zeros_like(feats).at[
        jnp.arange(feats.shape[0])[:, None], idx].set(vals)


def downstream_ref(sparse, p):
    """NFM + decoder pathways, given the sparse SAE features."""
    prim_recon = _hdot(sparse, p["w_dec"])
    sum_emb = _hdot(sparse, p["emb"])
    sum_sq = _hdot(sparse ** 2, p["emb"] ** 2)
    inter_vec = 0.5 * (sum_emb ** 2 - sum_sq)
    h = jnp.maximum(_hdot(inter_vec, p["m1_w"]) + p["m1_b"], 0.0)
    inter = _hdot(h, p["m2_w"]) + p["m2_b"]
    lin = _hdot(sparse, p["lin_w"]) + p["lin_b"]
    return prim_recon + lin + inter, prim_recon, lin, inter


def joint_sae_nfm_ref(x, p, k):
    feats = encoder_ref(x, p)
    sparse = topk_ref(feats, k)
    final, prim_recon, lin, inter = downstream_ref(sparse, p)
    return final, sparse, prim_recon, lin, inter


def make_params(key, D, F, E):
    ks = jax.random.split(key, 10)
    s = 0.05
    return {
        "w_enc": s * jax.random.normal(ks[0], (D, F), jnp.float32),
        "b_enc": s * jax.random.normal(ks[1], (1, F), jnp.float32),
        "w_dec": s * jax.random.normal(ks[2], (F, D), jnp.float32),
        "emb":   s * jax.random.normal(ks[3], (F, E), jnp.float32),
        "lin_w": s * jax.random.normal(ks[4], (F, D), jnp.float32),
        "lin_b": s * jax.random.normal(ks[5], (1, D), jnp.float32),
        "m1_w":  s * jax.random.normal(ks[6], (E, E), jnp.float32),
        "m1_b":  s * jax.random.normal(ks[7], (1, E), jnp.float32),
        "m2_w":  s * jax.random.normal(ks[8], (E, D), jnp.float32),
        "m2_b":  s * jax.random.normal(ks[9], (1, D), jnp.float32),
    }


if __name__ == "__main__":
    # batch, input_dim, sae_features, nfm_embedding_dim, sae_k
    B, D, F, E, K = 256, 128, 256, 64, 16

    key = jax.random.PRNGKey(0)
    k_x, k_p = jax.random.split(key)
    x = jax.random.normal(k_x, (B, D), jnp.float32)
    params = make_params(k_p, D, F, E)

    # ---- strict correctness run: f32 operands, weights prepared once -------
    w32, meta32 = prepare_joint_weights(params, compute_dtype=jnp.float32)
    outs = jax.block_until_ready(joint_sae_nfm_forward(x, w32, meta32, K))
    final_k, sparse_k, recon_k, lin_k, inter_k = outs

    refs = joint_sae_nfm_ref(x, params, K)
    for o, r in zip(outs, refs):
        assert o.shape == r.shape, (o.shape, r.shape)

    tol = 1e-4
    # (1) Validate the TopK selection against the reference encoder features.
    #     (Elementwise compare could flip on near-tied values at the k-th
    #      boundary, so check selection validity instead.)
    feats_ref = encoder_ref(x, params)
    kth_val = lax.top_k(feats_ref, K)[0][:, K - 1:K]
    nz = sparse_k > 0
    assert jnp.allclose(jnp.where(nz, sparse_k, 0.0),
                        jnp.where(nz, feats_ref, 0.0),
                        rtol=tol, atol=tol), "selected values mismatch"
    assert bool(jnp.all(jnp.where(nz, feats_ref, jnp.inf) >= kth_val - tol)), \
        "a selected feature is below the top-k threshold"
    assert bool(jnp.all(jnp.where(nz, -jnp.inf, feats_ref) <= kth_val + tol)), \
        "an unselected feature is above the top-k threshold"

    # (2) Validate every downstream pathway on the kernel's own sparse
    #     features (deterministic given the selection).
    final_r, recon_r, lin_r, inter_r = downstream_ref(sparse_k, params)
    assert jnp.allclose(recon_k, recon_r, rtol=tol, atol=tol), "recon mismatch"
    assert jnp.allclose(lin_k, lin_r, rtol=tol, atol=tol), "linear mismatch"
    assert jnp.allclose(inter_k, inter_r, rtol=tol, atol=tol), "interaction mismatch"
    assert jnp.allclose(final_k, final_r, rtol=tol, atol=tol), "final mismatch"

    # ---- default fast path: bf16 MXU operands, f32 accumulation ------------
    wbf, metabf = prepare_joint_weights(params)            # bf16 default
    outs_bf = jax.block_until_ready(joint_sae_nfm_forward(x, wbf, metabf, K))
    assert all(bool(jnp.all(jnp.isfinite(o))) for o in outs_bf)
    final_bf_ref = downstream_ref(outs_bf[1], params)[0]
    assert jnp.allclose(outs_bf[0], final_bf_ref, rtol=0.1, atol=0.1), \
        "bf16 path diverged from reference beyond bf16 tolerance"

    print("KERNEL_OK")
</pallas_src>

<mosaic_0001>
module attributes {stable_mosaic.version = 11 : i64} {
  func.func @_joint_kernel(%arg0: i32, %arg1: memref<128x128xf32, #tpu.memory_space<vmem>>, %arg2: memref<128x256xf32, #tpu.memory_space<vmem>>, %arg3: memref<1x256xf32, #tpu.memory_space<vmem>>, %arg4: memref<256x384xf32, #tpu.memory_space<vmem>>, %arg5: memref<256x128xf32, #tpu.memory_space<vmem>>, %arg6: memref<1x128xf32, #tpu.memory_space<vmem>>, %arg7: memref<128x128xf32, #tpu.memory_space<vmem>>, %arg8: memref<1x128xf32, #tpu.memory_space<vmem>>, %arg9: memref<128x128xf32, #tpu.memory_space<vmem>>, %arg10: memref<1x128xf32, #tpu.memory_space<vmem>>, %arg11: memref<128x128xf32, #tpu.memory_space<vmem>>, %arg12: memref<128x256xf32, #tpu.memory_space<vmem>>, %arg13: memref<128x128xf32, #tpu.memory_space<vmem>>, %arg14: memref<128x128xf32, #tpu.memory_space<vmem>>, %arg15: memref<128x128xf32, #tpu.memory_space<vmem>>) attributes {dimension_semantics = [#tpu.dimension_semantics<parallel>], iteration_bounds = array<i64: 2>, scalar_prefetch = 0 : i64, scratch_operands = 0 : i64, tpu.core_type = #tpu.core_type<tc>, window_params = [{transform_indices = @transform_0, window_bounds = array<i64: 128, 128>}, {pipeline_mode = #tpu.pipeline_mode<synchronous>, transform_indices = @transform_1, window_bounds = array<i64: 128, 256>}, {pipeline_mode = #tpu.pipeline_mode<synchronous>, transform_indices = @transform_2, window_bounds = array<i64: 1, 256>}, {pipeline_mode = #tpu.pipeline_mode<synchronous>, transform_indices = @transform_3, window_bounds = array<i64: 256, 384>}, {pipeline_mode = #tpu.pipeline_mode<synchronous>, transform_indices = @transform_4, window_bounds = array<i64: 256, 128>}, {pipeline_mode = #tpu.pipeline_mode<synchronous>, transform_indices = @transform_5, window_bounds = array<i64: 1, 128>}, {pipeline_mode = #tpu.pipeline_mode<synchronous>, transform_indices = @transform_6, window_bounds = array<i64: 128, 128>}, {pipeline_mode = #tpu.pipeline_mode<synchronous>, transform_indices = @transform_7, window_bounds = array<i64: 1, 128>}, {pipeline_mode = #tpu.pipeline_mode<synchronous>, transform_indices = @transform_8, window_bounds = array<i64: 128, 128>}, {pipeline_mode = #tpu.pipeline_mode<synchronous>, transform_indices = @transform_9, window_bounds = array<i64: 1, 128>}, {transform_indices = @transform_10, window_bounds = array<i64: 128, 128>}, {transform_indices = @transform_11, window_bounds = array<i64: 128, 256>}, {transform_indices = @transform_12, window_bounds = array<i64: 128, 128>}, {transform_indices = @transform_13, window_bounds = array<i64: 128, 128>}, {transform_indices = @transform_14, window_bounds = array<i64: 128, 128>}]} {
    %c0 = arith.constant 0 : index
    %c0_0 = arith.constant 0 : index
    %0 = vector.load %arg1[%c0, %c0_0] : memref<128x128xf32, #tpu.memory_space<vmem>>, vector<128x128xf32>
    %c0_1 = arith.constant 0 : index
    %c0_2 = arith.constant 0 : index
    %1 = vector.load %arg2[%c0_1, %c0_2] : memref<128x256xf32, #tpu.memory_space<vmem>>, vector<128x256xf32>
    %cst = arith.constant dense<0.000000e+00> : vector<128x256xf32>
    %2 = tpu.matmul %0, %1, %cst {dimension_numbers = #tpu.dot_dimension_numbers<[1], [0], [0], [1], [0, 0, 1, 1], [], []>} : vector<128x128xf32>, vector<128x256xf32>, vector<128x256xf32> -> vector<128x256xf32>
    %c0_3 = arith.constant 0 : index
    %c0_4 = arith.constant 0 : index
    %3 = vector.load %arg3[%c0_3, %c0_4] : memref<1x256xf32, #tpu.memory_space<vmem>>, vector<1x256xf32>
    %4 = vector.broadcast %3 : vector<1x256xf32> to vector<128x256xf32>
    %5 = arith.addf %2, %4 : vector<128x256xf32>
    %cst_5 = arith.constant 0.000000e+00 : f32
    %6 = vector.broadcast %cst_5 : f32 to vector<128x256xf32>
    %7 = arith.maximumf %5, %6 : vector<128x256xf32>
    %cst_6 = arith.constant dense<0xFF800000> : vector<128xf32>
    %8 = vector.multi_reduction <maximumf>, %7, %cst_6 [1] : vector<128x256xf32> to vector<128xf32>
    %9 = vector.shape_cast %8 : vector<128xf32> to vector<128x1xf32>
    %10 = vector.broadcast %9 : vector<128x1xf32> to vector<128x256xf32>
    %11 = arith.cmpf oeq, %7, %10 : vector<128x256xf32>
    %cst_7 = arith.constant -1.000000e+00 : f32
    %12 = vector.broadcast %cst_7 : f32 to vector<128x256xf32>
    %13 = arith.select %11, %12, %7 : vector<128x256xi1>, vector<128x256xf32>
    %cst_8 = arith.constant dense<0xFF800000> : vector<128xf32>
    %14 = vector.multi_reduction <maximumf>, %13, %cst_8 [1] : vector<128x256xf32> to vector<128xf32>
    %15 = vector.shape_cast %14 : vector<128xf32> to vector<128x1xf32>
    %16 = vector.broadcast %15 : vector<128x1xf32> to vector<128x256xf32>
    %17 = arith.cmpf oeq, %13, %16 : vector<128x256xf32>
    %cst_9 = arith.constant -1.000000e+00 : f32
    %18 = vector.broadcast %cst_9 : f32 to vector<128x256xf32>
    %19 = arith.select %17, %18, %13 : vector<128x256xi1>, vector<128x256xf32>
    %cst_10 = arith.constant dense<0xFF800000> : vector<128xf32>
    %20 = vector.multi_reduction <maximumf>, %19, %cst_10 [1] : vector<128x256xf32> to vector<128xf32>
    %21 = vector.shape_cast %20 : vector<128xf32> to vector<128x1xf32>
    %22 = vector.broadcast %21 : vector<128x1xf32> to vector<128x256xf32>
    %23 = arith.cmpf oeq, %19, %22 : vector<128x256xf32>
    %cst_11 = arith.constant -1.000000e+00 : f32
    %24 = vector.broadcast %cst_11 : f32 to vector<128x256xf32>
    %25 = arith.select %23, %24, %19 : vector<128x256xi1>, vector<128x256xf32>
    %cst_12 = arith.constant dense<0xFF800000> : vector<128xf32>
    %26 = vector.multi_reduction <maximumf>, %25, %cst_12 [1] : vector<128x256xf32> to vector<128xf32>
    %27 = vector.shape_cast %26 : vector<128xf32> to vector<128x1xf32>
    %28 = vector.broadcast %27 : vector<128x1xf32> to vector<128x256xf32>
    %29 = arith.cmpf oeq, %25, %28 : vector<128x256xf32>
    %cst_13 = arith.constant -1.000000e+00 : f32
    %30 = vector.broadcast %cst_13 : f32 to vector<128x256xf32>
    %31 = arith.select %29, %30, %25 : vector<128x256xi1>, vector<128x256xf32>
    %cst_14 = arith.constant dense<0xFF800000> : vector<128xf32>
    %32 = vector.multi_reduction <maximumf>, %31, %cst_14 [1] : vector<128x256xf32> to vector<128xf32>
    %33 = vector.shape_cast %32 : vector<128xf32> to vector<128x1xf32>
    %34 = vector.broadcast %33 : vector<128x1xf32> to vector<128x256xf32>
    %35 = arith.cmpf oeq, %31, %34 : vector<128x256xf32>
    %cst_15 = arith.constant -1.000000e+00 : f32
    %36 = vector.broadcast %cst_15 : f32 to vector<128x256xf32>
    %37 = arith.select %35, %36, %31 : vector<128x256xi1>, vector<128x256xf32>
    %cst_16 = arith.constant dense<0xFF800000> : vector<128xf32>
    %38 = vector.multi_reduction <maximumf>, %37, %cst_16 [1] : vector<128x256xf32> to vector<128xf32>
    %39 = vector.shape_cast %38 : vector<128xf32> to vector<128x1xf32>
    %40 = vector.broadcast %39 : vector<128x1xf32> to vector<128x256xf32>
    %41 = arith.cmpf oeq, %37, %40 : vector<128x256xf32>
    %cst_17 = arith.constant -1.000000e+00 : f32
    %42 = vector.broadcast %cst_17 : f32 to vector<128x256xf32>
    %43 = arith.select %41, %42, %37 : vector<128x256xi1>, vector<128x256xf32>
    %cst_18 = arith.constant dense<0xFF800000> : vector<128xf32>
    %44 = vector.multi_reduction <maximumf>, %43, %cst_18 [1] : vector<128x256xf32> to vector<128xf32>
    %45 = vector.shape_cast %44 : vector<128xf32> to vector<128x1xf32>
    %46 = vector.broadcast %45 : vector<128x1xf32> to vector<128x256xf32>
    %47 = arith.cmpf oeq, %43, %46 : vector<128x256xf32>
    %cst_19 = arith.constant -1.000000e+00 : f32
    %48 = vector.broadcast %cst_19 : f32 to vector<128x256xf32>
    %49 = arith.select %47, %48, %43 : vector<128x256xi1>, vector<128x256xf32>
    %cst_20 = arith.constant dense<0xFF800000> : vector<128xf32>
    %50 = vector.multi_reduction <maximumf>, %49, %cst_20 [1] : vector<128x256xf32> to vector<128xf32>
    %51 = vector.shape_cast %50 : vector<128xf32> to vector<128x1xf32>
    %52 = vector.broadcast %51 : vector<128x1xf32> to vector<128x256xf32>
    %53 = arith.cmpf oeq, %49, %52 : vector<128x256xf32>
    %cst_21 = arith.constant -1.000000e+00 : f32
    %54 = vector.broadcast %cst_21 : f32 to vector<128x256xf32>
    %55 = arith.select %53, %54, %49 : vector<128x256xi1>, vector<128x256xf32>
    %cst_22 = arith.constant dense<0xFF800000> : vector<128xf32>
    %56 = vector.multi_reduction <maximumf>, %55, %cst_22 [1] : vector<128x256xf32> to vector<128xf32>
    %57 = vector.shape_cast %56 : vector<128xf32> to vector<128x1xf32>
    %58 = vector.broadcast %57 : vector<128x1xf32> to vector<128x256xf32>
    %59 = arith.cmpf oeq, %55, %58 : vector<128x256xf32>
    %cst_23 = arith.constant -1.000000e+00 : f32
    %60 = vector.broadcast %cst_23 : f32 to vector<128x256xf32>
    %61 = arith.select %59, %60, %55 : vector<128x256xi1>, vector<128x256xf32>
    %cst_24 = arith.constant dense<0xFF800000> : vector<128xf32>
    %62 = vector.multi_reduction <maximumf>, %61, %cst_24 [1] : vector<128x256xf32> to vector<128xf32>
    %63 = vector.shape_cast %62 : vector<128xf32> to vector<128x1xf32>
    %64 = vector.broadcast %63 : vector<128x1xf32> to vector<128x256xf32>
    %65 = arith.cmpf oeq, %61, %64 : vector<128x256xf32>
    %cst_25 = arith.constant -1.000000e+00 : f32
    %66 = vector.broadcast %cst_25 : f32 to vector<128x256xf32>
    %67 = arith.select %65, %66, %61 : vector<128x256xi1>, vector<128x256xf32>
    %cst_26 = arith.constant dense<0xFF800000> : vector<128xf32>
    %68 = vector.multi_reduction <maximumf>, %67, %cst_26 [1] : vector<128x256xf32> to vector<128xf32>
    %69 = vector.shape_cast %68 : vector<128xf32> to vector<128x1xf32>
    %70 = vector.broadcast %69 : vector<128x1xf32> to vector<128x256xf32>
    %71 = arith.cmpf oeq, %67, %70 : vector<128x256xf32>
    %cst_27 = arith.constant -1.000000e+00 : f32
    %72 = vector.broadcast %cst_27 : f32 to vector<128x256xf32>
    %73 = arith.select %71, %72, %67 : vector<128x256xi1>, vector<128x256xf32>
    %cst_28 = arith.constant dense<0xFF800000> : vector<128xf32>
    %74 = vector.multi_reduction <maximumf>, %73, %cst_28 [1] : vector<128x256xf32> to vector<128xf32>
    %75 = vector.shape_cast %74 : vector<128xf32> to vector<128x1xf32>
    %76 = vector.broadcast %75 : vector<128x1xf32> to vector<128x256xf32>
    %77 = arith.cmpf oeq, %73, %76 : vector<128x256xf32>
    %cst_29 = arith.constant -1.000000e+00 : f32
    %78 = vector.broadcast %cst_29 : f32 to vector<128x256xf32>
    %79 = arith.select %77, %78, %73 : vector<128x256xi1>, vector<128x256xf32>
    %cst_30 = arith.constant dense<0xFF800000> : vector<128xf32>
    %80 = vector.multi_reduction <maximumf>, %79, %cst_30 [1] : vector<128x256xf32> to vector<128xf32>
    %81 = vector.shape_cast %80 : vector<128xf32> to vector<128x1xf32>
    %82 = vector.broadcast %81 : vector<128x1xf32> to vector<128x256xf32>
    %83 = arith.cmpf oeq, %79, %82 : vector<128x256xf32>
    %cst_31 = arith.constant -1.000000e+00 : f32
    %84 = vector.broadcast %cst_31 : f32 to vector<128x256xf32>
    %85 = arith.select %83, %84, %79 : vector<128x256xi1>, vector<128x256xf32>
    %cst_32 = arith.constant dense<0xFF800000> : vector<128xf32>
    %86 = vector.multi_reduction <maximumf>, %85, %cst_32 [1] : vector<128x256xf32> to vector<128xf32>
    %87 = vector.shape_cast %86 : vector<128xf32> to vector<128x1xf32>
    %88 = vector.broadcast %87 : vector<128x1xf32> to vector<128x256xf32>
    %89 = arith.cmpf oeq, %85, %88 : vector<128x256xf32>
    %cst_33 = arith.constant -1.000000e+00 : f32
    %90 = vector.broadcast %cst_33 : f32 to vector<128x256xf32>
    %91 = arith.select %89, %90, %85 : vector<128x256xi1>, vector<128x256xf32>
    %cst_34 = arith.constant dense<0xFF800000> : vector<128xf32>
    %92 = vector.multi_reduction <maximumf>, %91, %cst_34 [1] : vector<128x256xf32> to vector<128xf32>
    %93 = vector.shape_cast %92 : vector<128xf32> to vector<128x1xf32>
    %94 = vector.broadcast %93 : vector<128x1xf32> to vector<128x256xf32>
    %95 = arith.cmpf oeq, %91, %94 : vector<128x256xf32>
    %cst_35 = arith.constant -1.000000e+00 : f32
    %96 = vector.broadcast %cst_35 : f32 to vector<128x256xf32>
    %97 = arith.select %95, %96, %91 : vector<128x256xi1>, vector<128x256xf32>
    %cst_36 = arith.constant dense<0xFF800000> : vector<128xf32>
    %98 = vector.multi_reduction <maximumf>, %97, %cst_36 [1] : vector<128x256xf32> to vector<128xf32>
    %99 = vector.shape_cast %98 : vector<128xf32> to vector<128x1xf32>
    %100 = vector.broadcast %99 : vector<128x1xf32> to vector<128x256xf32>
    %101 = arith.cmpf oeq, %97, %100 : vector<128x256xf32>
    %cst_37 = arith.constant -1.000000e+00 : f32
    %102 = vector.broadcast %cst_37 : f32 to vector<128x256xf32>
    %103 = arith.select %101, %102, %97 : vector<128x256xi1>, vector<128x256xf32>
    %cst_38 = arith.constant 0.000000e+00 : f32
    %104 = vector.broadcast %cst_38 : f32 to vector<128x256xf32>
    %105 = arith.cmpf olt, %103, %104 : vector<128x256xf32>
    %cst_39 = arith.constant 0.000000e+00 : f32
    %106 = vector.broadcast %cst_39 : f32 to vector<128x256xf32>
    %107 = arith.select %105, %7, %106 : vector<128x256xi1>, vector<128x256xf32>
    %c0_40 = arith.constant 0 : index
    %c0_41 = arith.constant 0 : index
    %108 = vector.load %arg12[%c0_40, %c0_41] : memref<128x256xf32, #tpu.memory_space<vmem>>, vector<128x256xf32>
    tpu.vector_store %arg12[%c0_40, %c0_41], %107 {strides = array<i32>} : memref<128x256xf32, #tpu.memory_space<vmem>>, vector<128x256xf32>,
    %c0_42 = arith.constant 0 : index
    %c0_43 = arith.constant 0 : index
    %109 = vector.load %arg4[%c0_42, %c0_43] : memref<256x384xf32, #tpu.memory_space<vmem>>, vector<256x384xf32>
    %cst_44 = arith.constant dense<0.000000e+00> : vector<128x384xf32>
    %110 = tpu.matmul %107, %109, %cst_44 {dimension_numbers = #tpu.dot_dimension_numbers<[1], [0], [0], [1], [0, 0, 1, 1], [], []>} : vector<128x256xf32>, vector<256x384xf32>, vector<128x384xf32> -> vector<128x384xf32>
    %111 = vector.extract_strided_slice %110 {offsets = [0, 0], sizes = [128, 128], strides = [1, 1]} : vector<128x384xf32> to vector<128x128xf32>
    %112 = vector.extract_strided_slice %110 {offsets = [0, 128], sizes = [128, 128], strides = [1, 1]} : vector<128x384xf32> to vector<128x128xf32>
    %c0_45 = arith.constant 0 : index
    %c0_46 = arith.constant 0 : index
    %113 = vector.load %arg6[%c0_45, %c0_46] : memref<1x128xf32, #tpu.memory_space<vmem>>, vector<1x128xf32>
    %114 = vector.broadcast %113 : vector<1x128xf32> to vector<128x128xf32>
    %115 = arith.addf %112, %114 : vector<128x128xf32>
    %116 = vector.extract_strided_slice %110 {offsets = [0, 256], sizes = [128, 128], strides = [1, 1]} : vector<128x384xf32> to vector<128x128xf32>
    %c0_47 = arith.constant 0 : index
    %c0_48 = arith.constant 0 : index
    %117 = vector.load %arg13[%c0_47, %c0_48] : memref<128x128xf32, #tpu.memory_space<vmem>>, vector<128x128xf32>
    tpu.vector_store %arg13[%c0_47, %c0_48], %111 {strides = array<i32>} : memref<128x128xf32, #tpu.memory_space<vmem>>, vector<128x128xf32>,
    %c0_49 = arith.constant 0 : index
    %c0_50 = arith.constant 0 : index
    %118 = vector.load %arg14[%c0_49, %c0_50] : memref<128x128xf32, #tpu.memory_space<vmem>>, vector<128x128xf32>
    tpu.vector_store %arg14[%c0_49, %c0_50], %115 {strides = array<i32>} : memref<128x128xf32, #tpu.memory_space<vmem>>, vector<128x128xf32>,
    %119 = arith.mulf %107, %107 : vector<128x256xf32>
    %c0_51 = arith.constant 0 : index
    %c0_52 = arith.constant 0 : index
    %120 = vector.load %arg5[%c0_51, %c0_52] : memref<256x128xf32, #tpu.memory_space<vmem>>, vector<256x128xf32>
    %cst_53 = arith.constant dense<0.000000e+00> : vector<128x128xf32>
    %121 = tpu.matmul %119, %120, %cst_53 {dimension_numbers = #tpu.dot_dimension_numbers<[1], [0], [0], [1], [0, 0, 1, 1], [], []>} : vector<128x256xf32>, vector<256x128xf32>, vector<128x128xf32> -> vector<128x128xf32>
    %122 = arith.mulf %116, %116 : vector<128x128xf32>
    %123 = arith.subf %122, %121 : vector<128x128xf32>
    %cst_54 = arith.constant 5.000000e-01 : f32
    %124 = vector.broadcast %cst_54 : f32 to vector<128x128xf32>
    %125 = arith.mulf %124, %123 : vector<128x128xf32>
    %c0_55 = arith.constant 0 : index
    %c0_56 = arith.constant 0 : index
    %126 = vector.load %arg7[%c0_55, %c0_56] : memref<128x128xf32, #tpu.memory_space<vmem>>, vector<128x128xf32>
    %cst_57 = arith.constant dense<0.000000e+00> : vector<128x128xf32>
    %127 = tpu.matmul %125, %126, %cst_57 {dimension_numbers = #tpu.dot_dimension_numbers<[1], [0], [0], [1], [0, 0, 1, 1], [], []>} : vector<128x128xf32>, vector<128x128xf32>, vector<128x128xf32> -> vector<128x128xf32>
    %c0_58 = arith.constant 0 : index
    %c0_59 = arith.constant 0 : index
    %128 = vector.load %arg8[%c0_58, %c0_59] : memref<1x128xf32, #tpu.memory_space<vmem>>, vector<1x128xf32>
    %129 = vector.broadcast %128 : vector<1x128xf32> to vector<128x128xf32>
    %130 = arith.addf %127, %129 : vector<128x128xf32>
    %cst_60 = arith.constant 0.000000e+00 : f32
    %131 = vector.broadcast %cst_60 : f32 to vector<128x128xf32>
    %132 = arith.maximumf %130, %131 : vector<128x128xf32>
    %c0_61 = arith.constant 0 : index
    %c0_62 = arith.constant 0 : index
    %133 = vector.load %arg9[%c0_61, %c0_62] : memref<128x128xf32, #tpu.memory_space<vmem>>, vector<128x128xf32>
    %cst_63 = arith.constant dense<0.000000e+00> : vector<128x128xf32>
    %134 = tpu.matmul %132, %133, %cst_63 {dimension_numbers = #tpu.dot_dimension_numbers<[1], [0], [0], [1], [0, 0, 1, 1], [], []>} : vector<128x128xf32>, vector<128x128xf32>, vector<128x128xf32> -> vector<128x128xf32>
    %c0_64 = arith.constant 0 : index
    %c0_65 = arith.constant 0 : index
    %135 = vector.load %arg10[%c0_64, %c0_65] : memref<1x128xf32, #tpu.memory_space<vmem>>, vector<1x128xf32>
    %136 = vector.broadcast %135 : vector<1x128xf32> to vector<128x128xf32>
    %137 = arith.addf %134, %136 : vector<128x128xf32>
    %c0_66 = arith.constant 0 : index
    %c0_67 = arith.constant 0 : index
    %138 = vector.load %arg15[%c0_66, %c0_67] : memref<128x128xf32, #tpu.memory_space<vmem>>, vector<128x128xf32>
    tpu.vector_store %arg15[%c0_66, %c0_67], %137 {strides = array<i32>} : memref<128x128xf32, #tpu.memory_space<vmem>>, vector<128x128xf32>,
    %139 = arith.addf %111, %115 : vector<128x128xf32>
    %140 = arith.addf %139, %137 : vector<128x128xf32>
    %c0_68 = arith.constant 0 : index
    %c0_69 = arith.constant 0 : index
    %141 = vector.load %arg11[%c0_68, %c0_69] : memref<128x128xf32, #tpu.memory_space<vmem>>, vector<128x128xf32>
    tpu.vector_store %arg11[%c0_68, %c0_69], %140 {strides = array<i32>} : memref<128x128xf32, #tpu.memory_space<vmem>>, vector<128x128xf32>,
    return
  }
  func.func @transform_0(%arg0: i32) -> (i32, i32) {
    %c0_i32 = arith.constant 0 : i32
    %c0_i32_0 = arith.constant 0 : i32
    return %arg0, %c0_i32 : i32, i32
  }
  func.func @transform_1(%arg0: i32) -> (i32, i32) {
    %c0_i32 = arith.constant 0 : i32
    %c0_i32_0 = arith.constant 0 : i32
    %c0_i32_1 = arith.constant 0 : i32
    return %c0_i32, %c0_i32_0 : i32, i32
  }
  func.func @transform_2(%arg0: i32) -> (i32, i32) {
    %c0_i32 = arith.constant 0 : i32
    %c0_i32_0 = arith.constant 0 : i32
    %c0_i32_1 = arith.constant 0 : i32
    return %c0_i32, %c0_i32_0 : i32, i32
  }
  func.func @transform_3(%arg0: i32) -> (i32, i32) {
    %c0_i32 = arith.constant 0 : i32
    %c0_i32_0 = arith.constant 0 : i32
    %c0_i32_1 = arith.constant 0 : i32
    return %c0_i32, %c0_i32_0 : i32, i32
  }
  func.func @transform_4(%arg0: i32) -> (i32, i32) {
    %c0_i32 = arith.constant 0 : i32
    %c0_i32_0 = arith.constant 0 : i32
    %c0_i32_1 = arith.constant 0 : i32
    return %c0_i32, %c0_i32_0 : i32, i32
  }
  func.func @transform_5(%arg0: i32) -> (i32, i32) {
    %c0_i32 = arith.constant 0 : i32
    %c0_i32_0 = arith.constant 0 : i32
    %c0_i32_1 = arith.constant 0 : i32
    return %c0_i32, %c0_i32_0 : i32, i32
  }
  func.func @transform_6(%arg0: i32) -> (i32, i32) {
    %c0_i32 = arith.constant 0 : i32
    %c0_i32_0 = arith.constant 0 : i32
    %c0_i32_1 = arith.constant 0 : i32
    return %c0_i32, %c0_i32_0 : i32, i32
  }
  func.func @transform_7(%arg0: i32) -> (i32, i32) {
    %c0_i32 = arith.constant 0 : i32
    %c0_i32_0 = arith.constant 0 : i32
    %c0_i32_1 = arith.constant 0 : i32
    return %c0_i32, %c0_i32_0 : i32, i32
  }
  func.func @transform_8(%arg0: i32) -> (i32, i32) {
    %c0_i32 = arith.constant 0 : i32
    %c0_i32_0 = arith.constant 0 : i32
    %c0_i32_1 = arith.constant 0 : i32
    return %c0_i32, %c0_i32_0 : i32, i32
  }
  func.func @transform_9(%arg0: i32) -> (i32, i32) {
    %c0_i32 = arith.constant 0 : i32
    %c0_i32_0 = arith.constant 0 : i32
    %c0_i32_1 = arith.constant 0 : i32
    return %c0_i32, %c0_i32_0 : i32, i32
  }
  func.func @transform_10(%arg0: i32) -> (i32, i32) {
    %c0_i32 = arith.constant 0 : i32
    %c0_i32_0 = arith.constant 0 : i32
    return %arg0, %c0_i32 : i32, i32
  }
  func.func @transform_11(%arg0: i32) -> (i32, i32) {
    %c0_i32 = arith.constant 0 : i32
    %c0_i32_0 = arith.constant 0 : i32
    return %arg0, %c0_i32 : i32, i32
  }
  func.func @transform_12(%arg0: i32) -> (i32, i32) {
    %c0_i32 = arith.constant 0 : i32
    %c0_i32_0 = arith.constant 0 : i32
    return %arg0, %c0_i32 : i32, i32
  }
  func.func @transform_13(%arg0: i32) -> (i32, i32) {
    %c0_i32 = arith.constant 0 : i32
    %c0_i32_0 = arith.constant 0 : i32
    return %arg0, %c0_i32 : i32, i32
  }
  func.func @transform_14(%arg0: i32) -> (i32, i32) {
    %c0_i32 = arith.constant 0 : i32
    %c0_i32_0 = arith.constant 0 : i32
    return %arg0, %c0_i32 : i32, i32
  }
}

</mosaic_0001>

<llo_original>
// kernel: tpu_custom_call.1
$region0: #{tpu_custom_call.1}
  #allocation0 [shape = 'u32[]', space=smem, size = 0x4, offset = 0x4, fixed_abs, tag = 'smem constant byte address 0x4 - core index']
  #allocation1 [shape = 'u32[144,128]{1,0:T(1,128)}', space=vmem, size = 0x12000, scoped, tag = 'internal scratch']
  %s0 = inlined_call_operand.hbm [shape: f32[256,128], index: 0, kind: input, shape index: {}]
  %s1 = inlined_call_operand.hbm [shape: f32[128,256], index: 1, kind: input, shape index: {}]
  %s2 = inlined_call_operand.vmem [shape: f32[1,256], index: 2, kind: input, shape index: {}]
  %s3 = inlined_call_operand.hbm [shape: f32[256,384], index: 3, kind: input, shape index: {}]
  %s4 = inlined_call_operand.hbm [shape: f32[256,128], index: 4, kind: input, shape index: {}]
  %s5 = inlined_call_operand.vmem [shape: f32[1,128], index: 5, kind: input, shape index: {}]
  %s6 = inlined_call_operand.hbm [shape: f32[128,128], index: 6, kind: input, shape index: {}]
  %s7 = inlined_call_operand.vmem [shape: f32[1,128], index: 7, kind: input, shape index: {}]
  %s8 = inlined_call_operand.hbm [shape: f32[128,128], index: 8, kind: input, shape index: {}]
  %s9 = inlined_call_operand.vmem [shape: f32[1,128], index: 9, kind: input, shape index: {}]
  %s10 = inlined_call_operand.hbm [shape: f32[256,128], index: 10, kind: output, shape index: {0}]
  %s11 = inlined_call_operand.hbm [shape: f32[256,256], index: 11, kind: output, shape index: {1}]
  %s12 = inlined_call_operand.hbm [shape: f32[256,128], index: 12, kind: output, shape index: {2}]
  %s13 = inlined_call_operand.hbm [shape: f32[256,128], index: 13, kind: output, shape index: {3}]
  %s14 = inlined_call_operand.hbm [shape: f32[256,128], index: 14, kind: output, shape index: {4}]
  %15 = xla_tuple %s10, %s11, %s12, %s13, %s14
  %s16 = sld [smem:[#allocation0]]
  $region129: #{tpu_custom_call.1} parent=0
    _
  %s18 = ssub.s32 1, %s16
  %s19 = scalar_select 0, %s18, %s16
  $region1: #{tpu_custom_call.1} parent=0
    #allocation2 [shape = 'u8[131072]{0}', space=vmem, size = 0x20000, scoped, tag = 'input window, operand 0']
    #allocation3 [shape = 's32[2]{0}', space=sflag, size = 0x8, scoped, tag = 'scoped memory for tpu_custom_call.1']
    #allocation4 [shape = 's32[2]{0}', space=sflag, size = 0x8, scoped, tag = 'scoped memory for tpu_custom_call.1']
    #allocation5 [shape = 'u8[131072]{0}', space=vmem, size = 0x20000, scoped, tag = 'input window, operand 1, single buffered']
    #allocation6 [shape = 's32[1]{0}', space=sflag, size = 0x4, scoped, tag = 'scoped memory for tpu_custom_call.1']
    #allocation7 [shape = 'u8[393216]{0}', space=vmem, size = 0x60000, scoped, tag = 'input window, operand 3, single buffered']
    #allocation8 [shape = 'u8[131072]{0}', space=vmem, size = 0x20000, scoped, tag = 'input window, operand 4, single buffered']
    #allocation9 [shape = 's32[1]{0}', space=sflag, size = 0x4, scoped, tag = 'scoped memory for tpu_custom_call.1']
    #allocation10 [shape = 'u8[65536]{0}', space=vmem, size = 0x10000, scoped, tag = 'input window, operand 6, single buffered']
    #allocation11 [shape = 'u8[65536]{0}', space=vmem, size = 0x10000, scoped, tag = 'input window, operand 8, single buffered']
    #allocation12 [shape = 's32[1]{0}', space=sflag, size = 0x4, scoped, tag = 'scoped memory for tpu_custom_call.1']
    #allocation13 [shape = 'u8[131072]{0}', space=vmem, size = 0x20000, scoped, tag = 'output window, operand 0']
    #allocation14 [shape = 'u8[262144]{0}', space=vmem, size = 0x40000, scoped, tag = 'output window, operand 1']
    #allocation15 [shape = 's32[2]{0}', space=sflag, size = 0x8, scoped, tag = 'scoped memory for tpu_custom_call.1']
    #allocation16 [shape = 'u8[131072]{0}', space=vmem, size = 0x20000, scoped, tag = 'output window, operand 2']
    #allocation17 [shape = 'u8[131072]{0}', space=vmem, size = 0x20000, scoped, tag = 'output window, operand 3']
    #allocation18 [shape = 's32[2]{0}', space=sflag, size = 0x8, scoped, tag = 'scoped memory for tpu_custom_call.1']
    #allocation19 [shape = 'u8[131072]{0}', space=vmem, size = 0x20000, scoped, tag = 'output window, operand 4']
    %20 = vsyncpa [#allocation3], 0
    %s21 = scalar_lea.sflag [#allocation3], 1
    %22 = vsyncpa %s21, 0
    %23 = vsyncpa [#allocation6], 0
    %24 = vsyncpa [#allocation9], 0
    %25 = vsyncpa [#allocation12], 0
    %26 = vsyncpa [#allocation4], 0
    %s27 = scalar_lea.sflag [#allocation4], 1
    %28 = vsyncpa %s27, 0
    %29 = vsyncpa [#allocation15], 0
    %s30 = scalar_lea.sflag [#allocation15], 1
    %31 = vsyncpa %s30, 0
    %32 = vsyncpa [#allocation18], 0
    %s33 = scalar_lea.sflag [#allocation18], 1
    %34 = vsyncpa %s33, 0
    loop: start=0, step=1, limit=4
    $region2: #{tpu_custom_call.1} parent=1 // loop_pre_header
      _
    $region3: #{tpu_custom_call.1} parent=1 // loop_header
      %s36 = sphi 0, %s40
      %p37 = scmp.ge.s32.totalorder %s36, 4
      %s46 = sphi 0, %s48
      %s49 = sphi 0, %s46
      %s50 = sphi 0, %s49
      %s66 = sphi 0, %s50
      %s70 = sphi 0, %s70
      %s72 = sphi 0, %s70
      %s73 = sphi 0, %s72
      %s87 = sphi 0, %s73
      %s91 = sphi 0, %s91
      %s93 = sphi 0, %s91
      %s94 = sphi 0, %s93
      %s108 = sphi 0, %s94
      %s112 = sphi 0, %s112
      %s114 = sphi 0, %s112
      %s115 = sphi 0, %s114
      %s129 = sphi 0, %s115
      %s133 = sphi 0, %s133
      %s135 = sphi 0, %s133
      %s136 = sphi 0, %s135
      %s150 = sphi 0, %s136
      %s154 = sphi 0, %s154
      %s156 = sphi 0, %s154
      %s157 = sphi 0, %s156
      %s171 = sphi 0, %s157
      %s175 = sphi 0, %s175
      %s177 = sphi 0, %s175
      %s178 = sphi 0, %s177
      %s192 = sphi 0, %s178
      %s196 = sphi 0, %s196
      %s198 = sphi 0, %s196
      %s199 = sphi 0, %s198
      %s213 = sphi 0, %s199
      %s217 = sphi 0, %s217
      %s219 = sphi 0, %s217
      %s220 = sphi 0, %s219
      %s234 = sphi 0, %s220
      %s238 = sphi 0, %s238
      %s240 = sphi 0, %s238
      %s241 = sphi 0, %s240
      %s255 = sphi 0, %s241
      %s261 = sphi 0, %s263
      %s264 = sphi 0, %s261
      %s265 = sphi 0, %s264
      %s281 = sphi 0, %s265
      %s287 = sphi 0, %s289
      %s290 = sphi 0, %s287
      %s291 = sphi 0, %s290
      %s307 = sphi 0, %s291
      %s313 = sphi 0, %s315
      %s316 = sphi 0, %s313
      %s317 = sphi 0, %s316
      %s333 = sphi 0, %s317
      %s339 = sphi 0, %s341
      %s342 = sphi 0, %s339
      %s343 = sphi 0, %s342
      %s359 = sphi 0, %s343
      %s365 = sphi 0, %s367
      %s368 = sphi 0, %s365
      %s369 = sphi 0, %s368
      %s385 = sphi 0, %s369
    $region4: #{tpu_custom_call.1} parent=1 // loop_header_branch
      %39 = sbr.rel (%p37) target = $region8
    $region5: #{tpu_custom_call.1} parent=1 // loop_body
      %s41 = ssub.s32 %s36, 1
      %s42 = ssub.s32 %s36, 2
      %s43 = sadd.s32 %s36, 1
      %s44 = ssub.s32 %s36, %s43
      %p45 = scmp.eq.s32.totalorder %s44, 0
      %s47 = sadd.s32 %s46, 1
      %s48 = scalar_select %p45, %s46, %s47
      %p51 = pneg %p45
      %p52 = scmp.eq.s32.totalorder %s36, 1
      %p53 = por %p51, %p52
      %p54 = scmp.ne.s32.totalorder %s46, %s49
      %p55 = scmp.eq.s32.totalorder %s36, 0
      %p56 = por %p54, %p55
      %p57 = scmp.ne.s32.totalorder %s46, %s49
      %p58 = scmp.eq.s32.totalorder %s41, 1
      %p59 = por %p57, %p58
      %p60 = scmp.ne.s32.totalorder %s49, %s50
      %p61 = scmp.eq.s32.totalorder %s41, 0
      %p62 = por %p60, %p61
      %p63 = scmp.ne.s32.totalorder %s49, %s50
      %p64 = scmp.eq.s32.totalorder %s42, 1
      %p65 = por %p63, %p64
      %p67 = scmp.ne.s32.totalorder %s50, %s66
      %p68 = scmp.eq.s32.totalorder %s42, 0
      %p69 = por %p67, %p68
      %s71 = sadd.s32 %s70, 1
      %p74 = scmp.eq.s32.totalorder %s36, 1
      %p75 = scmp.ne.s32.totalorder %s70, %s72
      %p76 = scmp.eq.s32.totalorder %s36, 0
      %p77 = por %p75, %p76
      %p78 = scmp.ne.s32.totalorder %s70, %s72
      %p79 = scmp.eq.s32.totalorder %s41, 1
      %p80 = por %p78, %p79
      %p81 = scmp.ne.s32.totalorder %s72, %s73
      %p82 = scmp.eq.s32.totalorder %s41, 0
      %p83 = por %p81, %p82
      %p84 = scmp.ne.s32.totalorder %s72, %s73
      %p85 = scmp.eq.s32.totalorder %s42, 1
      %p86 = por %p84, %p85
      %p88 = scmp.ne.s32.totalorder %s73, %s87
      %p89 = scmp.eq.s32.totalorder %s42, 0
      %p90 = por %p88, %p89
      %s92 = sadd.s32 %s91, 1
      %p95 = scmp.eq.s32.totalorder %s36, 1
      %p96 = scmp.ne.s32.totalorder %s91, %s93
      %p97 = scmp.eq.s32.totalorder %s36, 0
      %p98 = por %p96, %p97
      %p99 = scmp.ne.s32.totalorder %s91, %s93
      %p100 = scmp.eq.s32.totalorder %s41, 1
      %p101 = por %p99, %p100
      %p102 = scmp.ne.s32.totalorder %s93, %s94
      %p103 = scmp.eq.s32.totalorder %s41, 0
      %p104 = por %p102, %p103
      %p105 = scmp.ne.s32.totalorder %s93, %s94
      %p106 = scmp.eq.s32.totalorder %s42, 1
      %p107 = por %p105, %p106
      %p109 = scmp.ne.s32.totalorder %s94, %s108
      %p110 = scmp.eq.s32.totalorder %s42, 0
      %p111 = por %p109, %p110
      %s113 = sadd.s32 %s112, 1
      %p116 = scmp.eq.s32.totalorder %s36, 1
      %p117 = scmp.ne.s32.totalorder %s112, %s114
      %p118 = scmp.eq.s32.totalorder %s36, 0
      %p119 = por %p117, %p118
      %p120 = scmp.ne.s32.totalorder %s112, %s114
      %p121 = scmp.eq.s32.totalorder %s41, 1
      %p122 = por %p120, %p121
      %p123 = scmp.ne.s32.totalorder %s114, %s115
      %p124 = scmp.eq.s32.totalorder %s41, 0
      %p125 = por %p123, %p124
      %p126 = scmp.ne.s32.totalorder %s114, %s115
      %p127 = scmp.eq.s32.totalorder %s42, 1
      %p128 = por %p126, %p127
      %p130 = scmp.ne.s32.totalorder %s115, %s129
      %p131 = scmp.eq.s32.totalorder %s42, 0
      %p132 = por %p130, %p131
      %s134 = sadd.s32 %s133, 1
      %p137 = scmp.eq.s32.totalorder %s36, 1
      %p138 = scmp.ne.s32.totalorder %s133, %s135
      %p139 = scmp.eq.s32.totalorder %s36, 0
      %p140 = por %p138, %p139
      %p141 = scmp.ne.s32.totalorder %s133, %s135
      %p142 = scmp.eq.s32.totalorder %s41, 1
      %p143 = por %p141, %p142
      %p144 = scmp.ne.s32.totalorder %s135, %s136
      %p145 = scmp.eq.s32.totalorder %s41, 0
      %p146 = por %p144, %p145
      %p147 = scmp.ne.s32.totalorder %s135, %s136
      %p148 = scmp.eq.s32.totalorder %s42, 1
      %p149 = por %p147, %p148
      %p151 = scmp.ne.s32.totalorder %s136, %s150
      %p152 = scmp.eq.s32.totalorder %s42, 0
      %p153 = por %p151, %p152
      %s155 = sadd.s32 %s154, 1
      %p158 = scmp.eq.s32.totalorder %s36, 1
      %p159 = scmp.ne.s32.totalorder %s154, %s156
      %p160 = scmp.eq.s32.totalorder %s36, 0
      %p161 = por %p159, %p160
      %p162 = scmp.ne.s32.totalorder %s154, %s156
      %p163 = scmp.eq.s32.totalorder %s41, 1
      %p164 = por %p162, %p163
      %p165 = scmp.ne.s32.totalorder %s156, %s157
      %p166 = scmp.eq.s32.totalorder %s41, 0
      %p167 = por %p165, %p166
      %p168 = scmp.ne.s32.totalorder %s156, %s157
      %p169 = scmp.eq.s32.totalorder %s42, 1
      %p170 = por %p168, %p169
      %p172 = scmp.ne.s32.totalorder %s157, %s171
      %p173 = scmp.eq.s32.totalorder %s42, 0
      %p174 = por %p172, %p173
      %s176 = sadd.s32 %s175, 1
      %p179 = scmp.eq.s32.totalorder %s36, 1
      %p180 = scmp.ne.s32.totalorder %s175, %s177
      %p181 = scmp.eq.s32.totalorder %s36, 0
      %p182 = por %p180, %p181
      %p183 = scmp.ne.s32.totalorder %s175, %s177
      %p184 = scmp.eq.s32.totalorder %s41, 1
      %p185 = por %p183, %p184
      %p186 = scmp.ne.s32.totalorder %s177, %s178
      %p187 = scmp.eq.s32.totalorder %s41, 0
      %p188 = por %p186, %p187
      %p189 = scmp.ne.s32.totalorder %s177, %s178
      %p190 = scmp.eq.s32.totalorder %s42, 1
      %p191 = por %p189, %p190
      %p193 = scmp.ne.s32.totalorder %s178, %s192
      %p194 = scmp.eq.s32.totalorder %s42, 0
      %p195 = por %p193, %p194
      %s197 = sadd.s32 %s196, 1
      %p200 = scmp.eq.s32.totalorder %s36, 1
      %p201 = scmp.ne.s32.totalorder %s196, %s198
      %p202 = scmp.eq.s32.totalorder %s36, 0
      %p203 = por %p201, %p202
      %p204 = scmp.ne.s32.totalorder %s196, %s198
      %p205 = scmp.eq.s32.totalorder %s41, 1
      %p206 = por %p204, %p205
      %p207 = scmp.ne.s32.totalorder %s198, %s199
      %p208 = scmp.eq.s32.totalorder %s41, 0
      %p209 = por %p207, %p208
      %p210 = scmp.ne.s32.totalorder %s198, %s199
      %p211 = scmp.eq.s32.totalorder %s42, 1
      %p212 = por %p210, %p211
      %p214 = scmp.ne.s32.totalorder %s199, %s213
      %p215 = scmp.eq.s32.totalorder %s42, 0
      %p216 = por %p214, %p215
      %s218 = sadd.s32 %s217, 1
      %p221 = scmp.eq.s32.totalorder %s36, 1
      %p222 = scmp.ne.s32.totalorder %s217, %s219
      %p223 = scmp.eq.s32.totalorder %s36, 0
      %p224 = por %p222, %p223
      %p225 = scmp.ne.s32.totalorder %s217, %s219
      %p226 = scmp.eq.s32.totalorder %s41, 1
      %p227 = por %p225, %p226
      %p228 = scmp.ne.s32.totalorder %s219, %s220
      %p229 = scmp.eq.s32.totalorder %s41, 0
      %p230 = por %p228, %p229
      %p231 = scmp.ne.s32.totalorder %s219, %s220
      %p232 = scmp.eq.s32.totalorder %s42, 1
      %p233 = por %p231, %p232
      %p235 = scmp.ne.s32.totalorder %s220, %s234
      %p236 = scmp.eq.s32.totalorder %s42, 0
      %p237 = por %p235, %p236
      %s239 = sadd.s32 %s238, 1
      %p242 = scmp.eq.s32.totalorder %s36, 1
      %p243 = scmp.ne.s32.totalorder %s238, %s240
      %p244 = scmp.eq.s32.totalorder %s36, 0
      %p245 = por %p243, %p244
      %p246 = scmp.ne.s32.totalorder %s238, %s240
      %p247 = scmp.eq.s32.totalorder %s41, 1
      %p248 = por %p246, %p247
      %p249 = scmp.ne.s32.totalorder %s240, %s241
      %p250 = scmp.eq.s32.totalorder %s41, 0
      %p251 = por %p249, %p250
      %p252 = scmp.ne.s32.totalorder %s240, %s241
      %p253 = scmp.eq.s32.totalorder %s42, 1
      %p254 = por %p252, %p253
      %p256 = scmp.ne.s32.totalorder %s241, %s255
      %p257 = scmp.eq.s32.totalorder %s42, 0
      %p258 = por %p256, %p257
      %s259 = ssub.s32 %s36, %s43
      %p260 = scmp.eq.s32.totalorder %s259, 0
      %s262 = sadd.s32 %s261, 1
      %s263 = scalar_select %p260, %s261, %s262
      %p266 = pneg %p260
      %p267 = scmp.eq.s32.totalorder %s36, 1
      %p268 = por %p266, %p267
      %p269 = scmp.ne.s32.totalorder %s261, %s264
      %p270 = scmp.eq.s32.totalorder %s36, 0
      %p271 = por %p269, %p270
      %p272 = scmp.ne.s32.totalorder %s261, %s264
      %p273 = scmp.eq.s32.totalorder %s41, 1
      %p274 = por %p272, %p273
      %p275 = scmp.ne.s32.totalorder %s264, %s265
      %p276 = scmp.eq.s32.totalorder %s41, 0
      %p277 = por %p275, %p276
      %p278 = scmp.ne.s32.totalorder %s264, %s265
      %p279 = scmp.eq.s32.totalorder %s42, 1
      %p280 = por %p278, %p279
      %p282 = scmp.ne.s32.totalorder %s265, %s281
      %p283 = scmp.eq.s32.totalorder %s42, 0
      %p284 = por %p282, %p283
      %s285 = ssub.s32 %s36, %s43
      %p286 = scmp.eq.s32.totalorder %s285, 0
      %s288 = sadd.s32 %s287, 1
      %s289 = scalar_select %p286, %s287, %s288
      %p292 = pneg %p286
      %p293 = scmp.eq.s32.totalorder %s36, 1
      %p294 = por %p292, %p293
      %p295 = scmp.ne.s32.totalorder %s287, %s290
      %p296 = scmp.eq.s32.totalorder %s36, 0
      %p297 = por %p295, %p296
      %p298 = scmp.ne.s32.totalorder %s287, %s290
      %p299 = scmp.eq.s32.totalorder %s41, 1
      %p300 = por %p298, %p299
      %p301 = scmp.ne.s32.totalorder %s290, %s291
      %p302 = scmp.eq.s32.totalorder %s41, 0
      %p303 = por %p301, %p302
      %p304 = scmp.ne.s32.totalorder %s290, %s291
      %p305 = scmp.eq.s32.totalorder %s42, 1
      %p306 = por %p304, %p305
      %p308 = scmp.ne.s32.totalorder %s291, %s307
      %p309 = scmp.eq.s32.totalorder %s42, 0
      %p310 = por %p308, %p309
      %s311 = ssub.s32 %s36, %s43
      %p312 = scmp.eq.s32.totalorder %s311, 0
      %s314 = sadd.s32 %s313, 1
      %s315 = scalar_select %p312, %s313, %s314
      %p318 = pneg %p312
      %p319 = scmp.eq.s32.totalorder %s36, 1
      %p320 = por %p318, %p319
      %p321 = scmp.ne.s32.totalorder %s313, %s316
      %p322 = scmp.eq.s32.totalorder %s36, 0
      %p323 = por %p321, %p322
      %p324 = scmp.ne.s32.totalorder %s313, %s316
      %p325 = scmp.eq.s32.totalorder %s41, 1
      %p326 = por %p324, %p325
      %p327 = scmp.ne.s32.totalorder %s316, %s317
      %p328 = scmp.eq.s32.totalorder %s41, 0
      %p329 = por %p327, %p328
      %p330 = scmp.ne.s32.totalorder %s316, %s317
      %p331 = scmp.eq.s32.totalorder %s42, 1
      %p332 = por %p330, %p331
      %p334 = scmp.ne.s32.totalorder %s317, %s333
      %p335 = scmp.eq.s32.totalorder %s42, 0
      %p336 = por %p334, %p335
      %s337 = ssub.s32 %s36, %s43
      %p338 = scmp.eq.s32.totalorder %s337, 0
      %s340 = sadd.s32 %s339, 1
      %s341 = scalar_select %p338, %s339, %s340
      %p344 = pneg %p338
      %p345 = scmp.eq.s32.totalorder %s36, 1
      %p346 = por %p344, %p345
      %p347 = scmp.ne.s32.totalorder %s339, %s342
      %p348 = scmp.eq.s32.totalorder %s36, 0
      %p349 = por %p347, %p348
      %p350 = scmp.ne.s32.totalorder %s339, %s342
      %p351 = scmp.eq.s32.totalorder %s41, 1
      %p352 = por %p350, %p351
      %p353 = scmp.ne.s32.totalorder %s342, %s343
      %p354 = scmp.eq.s32.totalorder %s41, 0
      %p355 = por %p353, %p354
      %p356 = scmp.ne.s32.totalorder %s342, %s343
      %p357 = scmp.eq.s32.totalorder %s42, 1
      %p358 = por %p356, %p357
      %p360 = scmp.ne.s32.totalorder %s343, %s359
      %p361 = scmp.eq.s32.totalorder %s42, 0
      %p362 = por %p360, %p361
      %s363 = ssub.s32 %s36, %s43
      %p364 = scmp.eq.s32.totalorder %s363, 0
      %s366 = sadd.s32 %s365, 1
      %s367 = scalar_select %p364, %s365, %s366
      %p370 = pneg %p364
      %p371 = scmp.eq.s32.totalorder %s36, 1
      %p372 = por %p370, %p371
      %p373 = scmp.ne.s32.totalorder %s365, %s368
      %p374 = scmp.eq.s32.totalorder %s36, 0
      %p375 = por %p373, %p374
      %p376 = scmp.ne.s32.totalorder %s365, %s368
      %p377 = scmp.eq.s32.totalorder %s41, 1
      %p378 = por %p376, %p377
      %p379 = scmp.ne.s32.totalorder %s368, %s369
      %p380 = scmp.eq.s32.totalorder %s41, 0
      %p381 = por %p379, %p380
      %p382 = scmp.ne.s32.totalorder %s368, %s369
      %p383 = scmp.eq.s32.totalorder %s42, 1
      %p384 = por %p382, %p383
      %p386 = scmp.ne.s32.totalorder %s369, %s385
      %p387 = scmp.eq.s32.totalorder %s42, 0
      %p388 = por %p386, %p387
      %p389 = scmp.le.s32.totalorder 1, %s36
      %p390 = scmp.lt.s32.totalorder %s36, 3
      %p391 = pnand %p389, %p390
      %p392 = pneg %p391
      // Predicated region
      $region9: #{tpu_custom_call.1} parent=5 // pred_check
        _
      $region10: #{tpu_custom_call.1} parent=5 // pred_check_branch
        %394 = sbr.rel (%p391) target = $region12
      $region11: #{tpu_custom_call.1} parent=5 // pred_region
        %s395 = ssub.s32 %s36, 1
        // Predicated region
        $region13: #{tpu_custom_call.1} parent=11 // pred_check
          %p396 = pneg %p83
        $region14: #{tpu_custom_call.1} parent=11 // pred_check_branch
          %398 = sbr.rel (%p396) target = $region16
        $region15: #{tpu_custom_call.1} parent=11 // pred_region
          %s400 = ssub.s32 4096, 4096
          %401 = vsyncadd [#allocation6], %s400
          %s402 = sshll.u32 [#allocation5], 4
          %s403 = int_to_ptr.vmem [resolvable:$true] %s402
          %408 = dma.hbm_to_vmem [thread:$0]  %s1, 4096, %s403, [#allocation6], 256, 256, 16
        $region16: #{tpu_custom_call.1} parent=11 // pred_fallthru
          _
        // Predicated region
        $region17: #{tpu_custom_call.1} parent=11 // pred_check
          %p409 = pneg %p104
        $region18: #{tpu_custom_call.1} parent=11 // pred_check_branch
          %411 = sbr.rel (%p409) target = $region20
        $region19: #{tpu_custom_call.1} parent=11 // pred_region
          _
        $region20: #{tpu_custom_call.1} parent=11 // pred_fallthru
          _
        // Predicated region
        $region21: #{tpu_custom_call.1} parent=11 // pred_check
          %p412 = pneg %p125
        $region22: #{tpu_custom_call.1} parent=11 // pred_check_branch
          %414 = sbr.rel (%p412) target = $region24
        $region23: #{tpu_custom_call.1} parent=11 // pred_region
          %s416 = ssub.s32 12288, 12288
          %417 = vsyncadd [#allocation6], %s416
          %s418 = sshll.u32 [#allocation7], 4
          %s419 = int_to_ptr.vmem [resolvable:$true] %s418
          %424 = dma.hbm_to_vmem [thread:$0]  %s3, 12288, %s419, [#allocation6], 384, 384, 24
        $region24: #{tpu_custom_call.1} parent=11 // pred_fallthru
          _
        // Predicated region
        $region25: #{tpu_custom_call.1} parent=11 // pred_check
          %p425 = pneg %p146
        $region26: #{tpu_custom_call.1} parent=11 // pred_check_branch
          %427 = sbr.rel (%p425) target = $region28
        $region27: #{tpu_custom_call.1} parent=11 // pred_region
          %s429 = ssub.s32 4096, 4096
          %430 = vsyncadd [#allocation9], %s429
          %s431 = sshll.u32 [#allocation8], 4
          %s432 = int_to_ptr.vmem [resolvable:$true] %s431
          %437 = dma.hbm_to_vmem [thread:$0]  %s4, 4096, %s432, [#allocation9], 128, 128, 8
        $region28: #{tpu_custom_call.1} parent=11 // pred_fallthru
          _
        // Predicated region
        $region29: #{tpu_custom_call.1} parent=11 // pred_check
          %p438 = pneg %p167
        $region30: #{tpu_custom_call.1} parent=11 // pred_check_branch
          %440 = sbr.rel (%p438) target = $region32
        $region31: #{tpu_custom_call.1} parent=11 // pred_region
          _
        $region32: #{tpu_custom_call.1} parent=11 // pred_fallthru
          _
        // Predicated region
        $region33: #{tpu_custom_call.1} parent=11 // pred_check
          %p441 = pneg %p188
        $region34: #{tpu_custom_call.1} parent=11 // pred_check_branch
          %443 = sbr.rel (%p441) target = $region36
        $region35: #{tpu_custom_call.1} parent=11 // pred_region
          %s445 = ssub.s32 2048, 2048
          %446 = vsyncadd [#allocation9], %s445
          %s447 = sshll.u32 [#allocation10], 4
          %s448 = int_to_ptr.vmem [resolvable:$true] %s447
          %453 = dma.hbm_to_vmem [thread:$0]  %s6, 2048, %s448, [#allocation9], 128, 128, 8
        $region36: #{tpu_custom_call.1} parent=11 // pred_fallthru
          _
        // Predicated region
        $region37: #{tpu_custom_call.1} parent=11 // pred_check
          %p454 = pneg %p209
        $region38: #{tpu_custom_call.1} parent=11 // pred_check_branch
          %456 = sbr.rel (%p454) target = $region40
        $region39: #{tpu_custom_call.1} parent=11 // pred_region
          _
        $region40: #{tpu_custom_call.1} parent=11 // pred_fallthru
          _
        // Predicated region
        $region41: #{tpu_custom_call.1} parent=11 // pred_check
          %p457 = pneg %p230
        $region42: #{tpu_custom_call.1} parent=11 // pred_check_branch
          %459 = sbr.rel (%p457) target = $region44
        $region43: #{tpu_custom_call.1} parent=11 // pred_region
          %s461 = ssub.s32 2048, 2048
          %462 = vsyncadd [#allocation12], %s461
          %s463 = sshll.u32 [#allocation11], 4
          %s464 = int_to_ptr.vmem [resolvable:$true] %s463
          %469 = dma.hbm_to_vmem [thread:$0]  %s8, 2048, %s464, [#allocation12], 128, 128, 8
        $region44: #{tpu_custom_call.1} parent=11 // pred_fallthru
          _
        // Predicated region
        $region45: #{tpu_custom_call.1} parent=11 // pred_check
          %p470 = pneg %p251
        $region46: #{tpu_custom_call.1} parent=11 // pred_check_branch
          %472 = sbr.rel (%p470) target = $region48
        $region47: #{tpu_custom_call.1} parent=11 // pred_region
          _
        $region48: #{tpu_custom_call.1} parent=11 // pred_fallthru
          _
      $region12: #{tpu_custom_call.1} parent=5 // pred_fallthru
        _
      %p473 = scmp.lt.s32.totalorder %s36, 2
      // Predicated region
      $region49: #{tpu_custom_call.1} parent=5 // pred_check
        %p474 = pneg %p473
      $region50: #{tpu_custom_call.1} parent=5 // pred_check_branch
        %476 = sbr.rel (%p474) target = $region52
      $region51: #{tpu_custom_call.1} parent=5 // pred_region
        // Predicated region
        $region53: #{tpu_custom_call.1} parent=51 // pred_check
          %p477 = pneg %p56
        $region54: #{tpu_custom_call.1} parent=51 // pred_check_branch
          %479 = sbr.rel (%p477) target = $region56
        $region55: #{tpu_custom_call.1} parent=51 // pred_region
          %s480 = sand.u32 %s46, 1
          %s481 = scalar_lea.sflag [#allocation3], %s480
          %s482 = sand.u32 %s46, 1
          %s483 = smul.addr %s482, 128
          %s484 = scalar_lea.vmem [#allocation2], %s483
          %s485 = smul.u32 16, %s36
          %s487 = ssub.s32 2048, 2048
          %488 = vsyncadd %s481, %s487
          %s489 = smul.addr %s485, 128
          %s490 = scalar_lea.hbm %s0, %s489
          %s491 = sshll.u32 %s484, 4
          %s492 = int_to_ptr.vmem [resolvable:$true] %s491
          %497 = dma.hbm_to_vmem [thread:$0]  %s490, 2048, %s492, %s481, 128, 128, 8
        $region56: #{tpu_custom_call.1} parent=51 // pred_fallthru
          _
      $region52: #{tpu_custom_call.1} parent=5 // pred_fallthru
        _
      %p498 = scmp.le.s32.totalorder 1, %s36
      %p499 = scmp.lt.s32.totalorder %s36, 3
      %p500 = pnand %p498, %p499
      %p501 = pneg %p500
      // Predicated region
      $region57: #{tpu_custom_call.1} parent=5 // pred_check
        _
      $region58: #{tpu_custom_call.1} parent=5 // pred_check_branch
        %503 = sbr.rel (%p500) target = $region60
      $region59: #{tpu_custom_call.1} parent=5 // pred_region
        %s504 = ssub.s32 %s36, 1
        %s505 = sand.u32 %s49, 1
        %s506 = scalar_lea.sflag [#allocation3], %s505
        %s507 = sand.u32 %s49, 1
        %s508 = smul.addr %s507, 128
        %s509 = scalar_lea.vmem [#allocation2], %s508
        // Predicated region
        $region61: #{tpu_custom_call.1} parent=59 // pred_check
          %p510 = pneg %p62
        $region62: #{tpu_custom_call.1} parent=59 // pred_check_branch
          %512 = sbr.rel (%p510) target = $region64
        $region63: #{tpu_custom_call.1} parent=59 // pred_region
          %513 = dma.done %s506, 2048
        $region64: #{tpu_custom_call.1} parent=59 // pred_fallthru
          _
        // Predicated region
        $region65: #{tpu_custom_call.1} parent=59 // pred_check
          %p514 = pneg %p83
        $region66: #{tpu_custom_call.1} parent=59 // pred_check_branch
          %516 = sbr.rel (%p514) target = $region68
        $region67: #{tpu_custom_call.1} parent=59 // pred_region
          %517 = dma.done [#allocation6], 4096
        $region68: #{tpu_custom_call.1} parent=59 // pred_fallthru
          _
        // Predicated region
        $region69: #{tpu_custom_call.1} parent=59 // pred_check
          %p518 = pneg %p125
        $region70: #{tpu_custom_call.1} parent=59 // pred_check_branch
          %520 = sbr.rel (%p518) target = $region72
        $region71: #{tpu_custom_call.1} parent=59 // pred_region
          %521 = dma.done [#allocation6], 12288
        $region72: #{tpu_custom_call.1} parent=59 // pred_fallthru
          _
        // Predicated region
        $region73: #{tpu_custom_call.1} parent=59 // pred_check
          %p522 = pneg %p146
        $region74: #{tpu_custom_call.1} parent=59 // pred_check_branch
          %524 = sbr.rel (%p522) target = $region76
        $region75: #{tpu_custom_call.1} parent=59 // pred_region
          %525 = dma.done [#allocation9], 4096
        $region76: #{tpu_custom_call.1} parent=59 // pred_fallthru
          _
        // Predicated region
        $region77: #{tpu_custom_call.1} parent=59 // pred_check
          %p526 = pneg %p188
        $region78: #{tpu_custom_call.1} parent=59 // pred_check_branch
          %528 = sbr.rel (%p526) target = $region80
        $region79: #{tpu_custom_call.1} parent=59 // pred_region
          %529 = dma.done [#allocation9], 2048
        $region80: #{tpu_custom_call.1} parent=59 // pred_fallthru
          _
        // Predicated region
        $region81: #{tpu_custom_call.1} parent=59 // pred_check
          %p530 = pneg %p230
        $region82: #{tpu_custom_call.1} parent=59 // pred_check_branch
          %532 = sbr.rel (%p530) target = $region84
        $region83: #{tpu_custom_call.1} parent=59 // pred_region
          %533 = dma.done [#allocation12], 2048
        $region84: #{tpu_custom_call.1} parent=59 // pred_fallthru
          _
        %s534 = sand.u32 %s49, 1
        %s535 = scalar_lea.sflag [#allocation3], %s534
        %s536 = sand.u32 %s49, 1
        %s537 = smul.addr %s536, 128
        %s538 = scalar_lea.vmem [#allocation2], %s537
        %p539 = pneg %p62
        %p540 = pneg %p59
        %p541 = pneg %p83
        %p542 = pneg %p80
        %p543 = pneg %p104
        %p544 = pneg %p101
        %p545 = pneg %p125
        %p546 = pneg %p122
        %p547 = pneg %p146
        %p548 = pneg %p143
        %p549 = pneg %p167
        %p550 = pneg %p164
        %p551 = pneg %p188
        %p552 = pneg %p185
        %p553 = pneg %p209
        %p554 = pneg %p206
        %p555 = pneg %p230
        %p556 = pneg %p227
        %p557 = pneg %p251
        %p558 = pneg %p248
        %p559 = pneg %p277
        %p560 = pneg %p274
        %s561 = sand.u32 %s264, 1
        %s562 = scalar_lea.sflag [#allocation4], %s561
        %s563 = sand.u32 %s264, 1
        %s564 = smul.addr %s563, 128
        %s565 = scalar_lea.vmem [#allocation13], %s564
        %p566 = pneg %p303
        %p567 = pneg %p300
        %s568 = sand.u32 %s41, 1
        %s569 = scalar_lea.sflag [#allocation15], %s568
        %s570 = sand.u32 %s290, 1
        %s571 = smul.addr %s570, 256
        %s572 = scalar_lea.vmem [#allocation14], %s571
        %p573 = pneg %p329
        %p574 = pneg %p326
        %s575 = sand.u32 %s41, 1
        %s576 = scalar_lea.sflag [#allocation15], %s575
        %s577 = sand.u32 %s316, 1
        %s578 = smul.addr %s577, 128
        %s579 = scalar_lea.vmem [#allocation16], %s578
        %p580 = pneg %p355
        %p581 = pneg %p352
        %s582 = sand.u32 %s41, 1
        %s583 = scalar_lea.sflag [#allocation18], %s582
        %s584 = sand.u32 %s342, 1
        %s585 = smul.addr %s584, 128
        %s586 = scalar_lea.vmem [#allocation17], %s585
        %p587 = pneg %p381
        %p588 = pneg %p378
        %s589 = sand.u32 %s41, 1
        %s590 = scalar_lea.sflag [#allocation18], %s589
        %s591 = sand.u32 %s368, 1
        %s592 = smul.addr %s591, 128
        %s593 = scalar_lea.vmem [#allocation19], %s592
        %s594 = smul.u32 16, %s41
        %s595 = smul.u32 16, %s41
        %s596 = smul.u32 16, %s41
        %s597 = smul.u32 16, %s41
        %s598 = smul.u32 16, %s41
        %s599 = smul.u32 16, %s41
        %v600 = vld [vmem:[%s509] sm:$0xff]
        %v601 = vld [vmem:[%s509 + $0x8] sm:$0xff]
        %v602 = vld [vmem:[%s509 + $0x10] sm:$0xff]
        %v603 = vld [vmem:[%s509 + $0x18] sm:$0xff]
        %v604 = vld [vmem:[%s509 + $0x20] sm:$0xff]
        %v605 = vld [vmem:[%s509 + $0x28] sm:$0xff]
        %v606 = vld [vmem:[%s509 + $0x30] sm:$0xff]
        %v607 = vld [vmem:[%s509 + $0x38] sm:$0xff]
        %v608 = vld [vmem:[%s509 + $0x40] sm:$0xff]
        %v609 = vld [vmem:[%s509 + $0x48] sm:$0xff]
        %v610 = vld [vmem:[%s509 + $0x50] sm:$0xff]
        %v611 = vld [vmem:[%s509 + $0x58] sm:$0xff]
        %v612 = vld [vmem:[%s509 + $0x60] sm:$0xff]
        %v613 = vld [vmem:[%s509 + $0x68] sm:$0xff]
        %v614 = vld [vmem:[%s509 + $0x70] sm:$0xff]
        %v615 = vld [vmem:[%s509 + $0x78] sm:$0xff]
        %v616 = vld [vmem:[#allocation5] sm:$0xff]
        %v617 = vld [vmem:[#allocation5 + $0x8] sm:$0xff]
        %v618 = vld [vmem:[#allocation5 + $0x10] sm:$0xff]
        %v619 = vld [vmem:[#allocation5 + $0x18] sm:$0xff]
        %v620 = vld [vmem:[#allocation5 + $0x20] sm:$0xff]
        %v621 = vld [vmem:[#allocation5 + $0x28] sm:$0xff]
        %v622 = vld [vmem:[#allocation5 + $0x30] sm:$0xff]
        %v623 = vld [vmem:[#allocation5 + $0x38] sm:$0xff]
        %v624 = vld [vmem:[#allocation5 + $0x40] sm:$0xff]
        %v625 = vld [vmem:[#allocation5 + $0x48] sm:$0xff]
        %v626 = vld [vmem:[#allocation5 + $0x50] sm:$0xff]
        %v627 = vld [vmem:[#allocation5 + $0x58] sm:$0xff]
        %v628 = vld [vmem:[#allocation5 + $0x60] sm:$0xff]
        %v629 = vld [vmem:[#allocation5 + $0x68] sm:$0xff]
        %v630 = vld [vmem:[#allocation5 + $0x70] sm:$0xff]
        %v631 = vld [vmem:[#allocation5 + $0x78] sm:$0xff]
        %v632 = vld [vmem:[#allocation5 + $0x80] sm:$0xff]
        %v633 = vld [vmem:[#allocation5 + $0x88] sm:$0xff]
        %v634 = vld [vmem:[#allocation5 + $0x90] sm:$0xff]
        %v635 = vld [vmem:[#allocation5 + $0x98] sm:$0xff]
        %v636 = vld [vmem:[#allocation5 + $0xa0] sm:$0xff]
        %v637 = vld [vmem:[#allocation5 + $0xa8] sm:$0xff]
        %v638 = vld [vmem:[#allocation5 + $0xb0] sm:$0xff]
        %v639 = vld [vmem:[#allocation5 + $0xb8] sm:$0xff]
        %v640 = vld [vmem:[#allocation5 + $0xc0] sm:$0xff]
        %v641 = vld [vmem:[#allocation5 + $0xc8] sm:$0xff]
        %v642 = vld [vmem:[#allocation5 + $0xd0] sm:$0xff]
        %v643 = vld [vmem:[#allocation5 + $0xd8] sm:$0xff]
        %v644 = vld [vmem:[#allocation5 + $0xe0] sm:$0xff]
        %v645 = vld [vmem:[#allocation5 + $0xe8] sm:$0xff]
        %v646 = vld [vmem:[#allocation5 + $0xf0] sm:$0xff]
        %v647 = vld [vmem:[#allocation5 + $0xf8] sm:$0xff]
        %v648 = vld [vmem:[%s2] sm:$0x3]
        %v650 = vlaneseq
        %v651 = vshrl.u32 %v650, 7
        %v652 = vsub.s32 0, %v651
        %v653 = vrot.slane %v648, %v652
        %v654 = vlaneseq
        %v655 = vshrl.u32 %v654, 7
        %v656 = vsub.s32 1, %v655
        %v657 = vrot.slane %v648, %v656
        %660 = vmatprep.subr.mxu0 %v617
        %661 = vmatpush1.msra.mxu0 %v616
        %662 = vmatprep.subr.mxu0 %v619
        %663 = vmatpush1.msra.mxu0 %v618
        %664 = vmatprep.subr.mxu0 %v621
        %665 = vmatpush1.msra.mxu0 %v620
        %666 = vmatprep.subr.mxu0 %v623
        %667 = vmatpush1.msra.mxu0 %v622
        %668 = vmatprep.subr.mxu0 %v625
        %669 = vmatpush1.msra.mxu0 %v624
        %670 = vmatprep.subr.mxu0 %v627
        %671 = vmatpush1.msra.mxu0 %v626
        %672 = vmatprep.subr.mxu0 %v629
        %673 = vmatpush1.msra.mxu0 %v628
        %674 = vmatprep.subr.mxu0 %v631
        %675 = vmatpush1.msra.mxu0 %v630
        %676 = vmatprep.subr.mxu0 %v633
        %677 = vmatpush1.msra.mxu0 %v632
        %678 = vmatprep.subr.mxu0 %v635
        %679 = vmatpush1.msra.mxu0 %v634
        %680 = vmatprep.subr.mxu0 %v637
        %681 = vmatpush1.msra.mxu0 %v636
        %682 = vmatprep.subr.mxu0 %v639
        %683 = vmatpush1.msra.mxu0 %v638
        %684 = vmatprep.subr.mxu0 %v641
        %685 = vmatpush1.msra.mxu0 %v640
        %686 = vmatprep.subr.mxu0 %v643
        %687 = vmatpush1.msra.mxu0 %v642
        %688 = vmatprep.subr.mxu0 %v645
        %689 = vmatpush1.msra.mxu0 %v644
        %690 = vmatprep.subr.mxu0 %v647
        %691 = vmatpush1.msra.mxu0 %v646
        %692 = vmatprep.subr.mxu0 0.0
        %693 = vmatpush1.msra.mxu0 0.0
        %694 = vmatprep.subr.mxu0 0.0
        %695 = vmatpush1.msra.mxu0 0.0
        %696 = vmatprep.subr.mxu0 0.0
        %697 = vmatpush1.msra.mxu0 0.0
        %698 = vmatprep.subr.mxu0 0.0
        %699 = vmatpush1.msra.mxu0 0.0
        %700 = vmatprep.subr.mxu0 0.0
        %701 = vmatpush1.msra.mxu0 0.0
        %702 = vmatprep.subr.mxu0 0.0
        %703 = vmatpush1.msra.mxu0 0.0
        %704 = vmatprep.subr.mxu0 0.0
        %705 = vmatpush1.msra.mxu0 0.0
        %706 = vmatprep.subr.mxu0 0.0
        %707 = vmatpush1.msra.mxu0 0.0
        %708 = vmatprep.subr.mxu0 0.0
        %709 = vmatpush1.msra.mxu0 0.0
        %710 = vmatprep.subr.mxu0 0.0
        %711 = vmatpush1.msra.mxu0 0.0
        %712 = vmatprep.subr.mxu0 0.0
        %713 = vmatpush1.msra.mxu0 0.0
        %714 = vmatprep.subr.mxu0 0.0
        %715 = vmatpush1.msra.mxu0 0.0
        %716 = vmatprep.subr.mxu0 0.0
        %717 = vmatpush1.msra.mxu0 0.0
        %718 = vmatprep.subr.mxu0 0.0
        %719 = vmatpush1.msra.mxu0 0.0
        %720 = vmatprep.subr.mxu0 0.0
        %721 = vmatpush1.msra.mxu0 0.0
        %722 = vmatprep.subr.mxu0 0.0
        %723 = vmatpush1.msra.mxu0 0.0
        %724 = vmatprep.mubr.f32.mxu0 0.0
        %725 = vmatmul.mubr.f32.gmra.mrb[0].mxu0 %v600
        %v726 = vpop.f32.mrb[0].mxu0
        %v727 = vadd.f32 %v653, %v726
        %v728 = vpop.f32.mrb[0].mxu0
        %v729 = vadd.f32 %v657, %v728
        %730 = vmatprep.mubr.f32.mxu0 0.0
        %731 = vmatmul.mubr.f32.gmra.mrb[0].mxu0 %v601
        %v732 = vpop.f32.mrb[0].mxu0
        %v733 = vadd.f32 %v653, %v732
        %v734 = vpop.f32.mrb[0].mxu0
        %v735 = vadd.f32 %v657, %v734
        %736 = vmatprep.mubr.f32.mxu0 0.0
        %737 = vmatmul.mubr.f32.gmra.mrb[0].mxu0 %v602
        %v738 = vpop.f32.mrb[0].mxu0
        %v739 = vadd.f32 %v653, %v738
        %v740 = vpop.f32.mrb[0].mxu0
        %v741 = vadd.f32 %v657, %v740
        %742 = vmatprep.mubr.f32.mxu0 0.0
        %743 = vmatmul.mubr.f32.gmra.mrb[0].mxu0 %v603
        %v744 = vpop.f32.mrb[0].mxu0
        %v745 = vadd.f32 %v653, %v744
        %v746 = vpop.f32.mrb[0].mxu0
        %v747 = vadd.f32 %v657, %v746
        %748 = vmatprep.mubr.f32.mxu0 0.0
        %749 = vmatmul.mubr.f32.gmra.mrb[0].mxu0 %v604
        %v750 = vpop.f32.mrb[0].mxu0
        %v751 = vadd.f32 %v653, %v750
        %v752 = vpop.f32.mrb[0].mxu0
        %v753 = vadd.f32 %v657, %v752
        %754 = vmatprep.mubr.f32.mxu0 0.0
        %755 = vmatmul.mubr.f32.gmra.mrb[0].mxu0 %v605
        %v756 = vpop.f32.mrb[0].mxu0
        %v757 = vadd.f32 %v653, %v756
        %v758 = vpop.f32.mrb[0].mxu0
        %v759 = vadd.f32 %v657, %v758
        %760 = vmatprep.mubr.f32.mxu0 0.0
        %761 = vmatmul.mubr.f32.gmra.mrb[0].mxu0 %v606
        %v762 = vpop.f32.mrb[0].mxu0
        %v763 = vadd.f32 %v653, %v762
        %v764 = vpop.f32.mrb[0].mxu0
        %v765 = vadd.f32 %v657, %v764
        %766 = vmatprep.mubr.f32.mxu0 0.0
        %767 = vmatmul.mubr.f32.gmra.mrb[0].mxu0 %v607
        %v768 = vpop.f32.mrb[0].mxu0
        %v769 = vadd.f32 %v653, %v768
        %v770 = vpop.f32.mrb[0].mxu0
        %v771 = vadd.f32 %v657, %v770
        %772 = vmatprep.mubr.f32.mxu0 0.0
        %773 = vmatmul.mubr.f32.gmra.mrb[0].mxu0 %v608
        %v774 = vpop.f32.mrb[0].mxu0
        %v775 = vadd.f32 %v653, %v774
        %v776 = vpop.f32.mrb[0].mxu0
        %v777 = vadd.f32 %v657, %v776
        %778 = vmatprep.mubr.f32.mxu0 0.0
        %779 = vmatmul.mubr.f32.gmra.mrb[0].mxu0 %v609
        %v780 = vpop.f32.mrb[0].mxu0
        %v781 = vadd.f32 %v653, %v780
        %v782 = vpop.f32.mrb[0].mxu0
        %v783 = vadd.f32 %v657, %v782
        %784 = vmatprep.mubr.f32.mxu0 0.0
        %785 = vmatmul.mubr.f32.gmra.mrb[0].mxu0 %v610
        %v786 = vpop.f32.mrb[0].mxu0
        %v787 = vadd.f32 %v653, %v786
        %v788 = vpop.f32.mrb[0].mxu0
        %v789 = vadd.f32 %v657, %v788
        %790 = vmatprep.mubr.f32.mxu0 0.0
        %791 = vmatmul.mubr.f32.gmra.mrb[0].mxu0 %v611
        %v792 = vpop.f32.mrb[0].mxu0
        %v793 = vadd.f32 %v653, %v792
        %v794 = vpop.f32.mrb[0].mxu0
        %v795 = vadd.f32 %v657, %v794
        %796 = vmatprep.mubr.f32.mxu0 0.0
        %797 = vmatmul.mubr.f32.gmra.mrb[0].mxu0 %v612
        %v798 = vpop.f32.mrb[0].mxu0
        %v799 = vadd.f32 %v653, %v798
        %v800 = vpop.f32.mrb[0].mxu0
        %v801 = vadd.f32 %v657, %v800
        %802 = vmatprep.mubr.f32.mxu0 0.0
        %803 = vmatmul.mubr.f32.gmra.mrb[0].mxu0 %v613
        %v804 = vpop.f32.mrb[0].mxu0
        %v805 = vadd.f32 %v653, %v804
        %v806 = vpop.f32.mrb[0].mxu0
        %v807 = vadd.f32 %v657, %v806
        %808 = vmatprep.mubr.f32.mxu0 0.0
        %809 = vmatmul.mubr.f32.gmra.mrb[0].mxu0 %v614
        %v810 = vpop.f32.mrb[0].mxu0
        %v811 = vadd.f32 %v653, %v810
        %v812 = vpop.f32.mrb[0].mxu0
        %v813 = vadd.f32 %v657, %v812
        %814 = vmatprep.mubr.f32.mxu0 0.0
        %815 = vmatmul.mubr.f32.gmra.mrb[0].mxu0 %v615
        %v816 = vpop.f32.mrb[0].mxu0
        %v817 = vadd.f32 %v653, %v816
        %v818 = vpop.f32.mrb[0].mxu0
        %v819 = vadd.f32 %v657, %v818
        %820 = vdwg.mxu0
        %v821 = vmax.f32 %v727, 0.0
        %v822 = vmax.f32 %v729, 0.0
        %v823 = vmax.f32 %v733, 0.0
        %v824 = vmax.f32 %v735, 0.0
        %v825 = vmax.f32 %v739, 0.0
        %v826 = vmax.f32 %v741, 0.0
        %v827 = vmax.f32 %v745, 0.0
        %v828 = vmax.f32 %v747, 0.0
        %v829 = vmax.f32 %v751, 0.0
        %v830 = vmax.f32 %v753, 0.0
        %v831 = vmax.f32 %v757, 0.0
        %v832 = vmax.f32 %v759, 0.0
        %v833 = vmax.f32 %v763, 0.0
        %v834 = vmax.f32 %v765, 0.0
        %v835 = vmax.f32 %v769, 0.0
        %v836 = vmax.f32 %v771, 0.0
        %v837 = vmax.f32 %v775, 0.0
        %v838 = vmax.f32 %v777, 0.0
        %v839 = vmax.f32 %v781, 0.0
        %v840 = vmax.f32 %v783, 0.0
        %v841 = vmax.f32 %v787, 0.0
        %v842 = vmax.f32 %v789, 0.0
        %v843 = vmax.f32 %v793, 0.0
        %v844 = vmax.f32 %v795, 0.0
        %v845 = vmax.f32 %v799, 0.0
        %v846 = vmax.f32 %v801, 0.0
        %v847 = vmax.f32 %v805, 0.0
        %v848 = vmax.f32 %v807, 0.0
        %v849 = vmax.f32 %v811, 0.0
        %v850 = vmax.f32 %v813, 0.0
        %v851 = vmax.f32 %v817, 0.0
        %v852 = vmax.f32 %v819, 0.0
        %v853 = vmax.f32 %v821, %v822
        %854 = vmax.xlane.f32.xlu0 %v853
        %v855 = vpop.xlane.xlu0 %854
        %v856 = vmax.f32 %v823, %v824
        %857 = vmax.xlane.f32.xlu0 %v856
        %v858 = vpop.xlane.xlu0 %857
        %v859 = vmax.f32 %v825, %v826
        %860 = vmax.xlane.f32.xlu0 %v859
        %v861 = vpop.xlane.xlu0 %860
        %v862 = vmax.f32 %v827, %v828
        %863 = vmax.xlane.f32.xlu0 %v862
        %v864 = vpop.xlane.xlu0 %863
        %v865 = vmax.f32 %v829, %v830
        %866 = vmax.xlane.f32.xlu0 %v865
        %v867 = vpop.xlane.xlu0 %866
        %v868 = vmax.f32 %v831, %v832
        %869 = vmax.xlane.f32.xlu0 %v868
        %v870 = vpop.xlane.xlu0 %869
        %v871 = vmax.f32 %v833, %v834
        %872 = vmax.xlane.f32.xlu0 %v871
        %v873 = vpop.xlane.xlu0 %872
        %v874 = vmax.f32 %v835, %v836
        %875 = vmax.xlane.f32.xlu0 %v874
        %v876 = vpop.xlane.xlu0 %875
        %v877 = vmax.f32 %v837, %v838
        %878 = vmax.xlane.f32.xlu0 %v877
        %v879 = vpop.xlane.xlu0 %878
        %v880 = vmax.f32 %v839, %v840
        %881 = vmax.xlane.f32.xlu0 %v880
        %v882 = vpop.xlane.xlu0 %881
        %v883 = vmax.f32 %v841, %v842
        %884 = vmax.xlane.f32.xlu0 %v883
        %v885 = vpop.xlane.xlu0 %884
        %v886 = vmax.f32 %v843, %v844
        %887 = vmax.xlane.f32.xlu0 %v886
        %v888 = vpop.xlane.xlu0 %887
        %v889 = vmax.f32 %v845, %v846
        %890 = vmax.xlane.f32.xlu0 %v889
        %v891 = vpop.xlane.xlu0 %890
        %v892 = vmax.f32 %v847, %v848
        %893 = vmax.xlane.f32.xlu0 %v892
        %v894 = vpop.xlane.xlu0 %893
        %v895 = vmax.f32 %v849, %v850
        %896 = vmax.xlane.f32.xlu0 %v895
        %v897 = vpop.xlane.xlu0 %896
        %v898 = vmax.f32 %v851, %v852
        %899 = vmax.xlane.f32.xlu0 %v898
        %v900 = vpop.xlane.xlu0 %899
        %vm901 = vcmp.eq.f32.partialorder %v821, %v855
        %vm902 = vcmp.eq.f32.partialorder %v822, %v855
        %vm903 = vcmp.eq.f32.partialorder %v823, %v858
        %vm904 = vcmp.eq.f32.partialorder %v824, %v858
        %vm905 = vcmp.eq.f32.partialorder %v825, %v861
        %vm906 = vcmp.eq.f32.partialorder %v826, %v861
        %vm907 = vcmp.eq.f32.partialorder %v827, %v864
        %vm908 = vcmp.eq.f32.partialorder %v828, %v864
        %vm909 = vcmp.eq.f32.partialorder %v829, %v867
        %vm910 = vcmp.eq.f32.partialorder %v830, %v867
        %vm911 = vcmp.eq.f32.partialorder %v831, %v870
        %vm912 = vcmp.eq.f32.partialorder %v832, %v870
        %vm913 = vcmp.eq.f32.partialorder %v833, %v873
        %vm914 = vcmp.eq.f32.partialorder %v834, %v873
        %vm915 = vcmp.eq.f32.partialorder %v835, %v876
        %vm916 = vcmp.eq.f32.partialorder %v836, %v876
        %vm917 = vcmp.eq.f32.partialorder %v837, %v879
        %vm918 = vcmp.eq.f32.partialorder %v838, %v879
        %vm919 = vcmp.eq.f32.partialorder %v839, %v882
        %vm920 = vcmp.eq.f32.partialorder %v840, %v882
        %vm921 = vcmp.eq.f32.partialorder %v841, %v885
        %vm922 = vcmp.eq.f32.partialorder %v842, %v885
        %vm923 = vcmp.eq.f32.partialorder %v843, %v888
        %vm924 = vcmp.eq.f32.partialorder %v844, %v888
        %vm925 = vcmp.eq.f32.partialorder %v845, %v891
        %vm926 = vcmp.eq.f32.partialorder %v846, %v891
        %vm927 = vcmp.eq.f32.partialorder %v847, %v894
        %vm928 = vcmp.eq.f32.partialorder %v848, %v894
        %vm929 = vcmp.eq.f32.partialorder %v849, %v897
        %vm930 = vcmp.eq.f32.partialorder %v850, %v897
        %vm931 = vcmp.eq.f32.partialorder %v851, %v900
        %vm932 = vcmp.eq.f32.partialorder %v852, %v900
        %v933 = vsel %vm901, -1.0, %v821
        %v934 = vsel %vm902, -1.0, %v822
        %v935 = vsel %vm903, -1.0, %v823
        %v936 = vsel %vm904, -1.0, %v824
        %v937 = vsel %vm905, -1.0, %v825
        %v938 = vsel %vm906, -1.0, %v826
        %v939 = vsel %vm907, -1.0, %v827
        %v940 = vsel %vm908, -1.0, %v828
        %v941 = vsel %vm909, -1.0, %v829
        %v942 = vsel %vm910, -1.0, %v830
        %v943 = vsel %vm911, -1.0, %v831
        %v944 = vsel %vm912, -1.0, %v832
        %v945 = vsel %vm913, -1.0, %v833
        %v946 = vsel %vm914, -1.0, %v834
        %v947 = vsel %vm915, -1.0, %v835
        %v948 = vsel %vm916, -1.0, %v836
        %v949 = vsel %vm917, -1.0, %v837
        %v950 = vsel %vm918, -1.0, %v838
        %v951 = vsel %vm919, -1.0, %v839
        %v952 = vsel %vm920, -1.0, %v840
        %v953 = vsel %vm921, -1.0, %v841
        %v954 = vsel %vm922, -1.0, %v842
        %v955 = vsel %vm923, -1.0, %v843
        %v956 = vsel %vm924, -1.0, %v844
        %v957 = vsel %vm925, -1.0, %v845
        %v958 = vsel %vm926, -1.0, %v846
        %v959 = vsel %vm927, -1.0, %v847
        %v960 = vsel %vm928, -1.0, %v848
        %v961 = vsel %vm929, -1.0, %v849
        %v962 = vsel %vm930, -1.0, %v850
        %v963 = vsel %vm931, -1.0, %v851
        %v964 = vsel %vm932, -1.0, %v852
        %v965 = vmax.f32 %v933, %v934
        %966 = vmax.xlane.f32.xlu0 %v965
        %v967 = vpop.xlane.xlu0 %966
        %v968 = vmax.f32 %v935, %v936
        %969 = vmax.xlane.f32.xlu0 %v968
        %v970 = vpop.xlane.xlu0 %969
        %v971 = vmax.f32 %v937, %v938
        %972 = vmax.xlane.f32.xlu0 %v971
        %v973 = vpop.xlane.xlu0 %972
        %v974 = vmax.f32 %v939, %v940
        %975 = vmax.xlane.f32.xlu0 %v974
        %v976 = vpop.xlane.xlu0 %975
        %v977 = vmax.f32 %v941, %v942
        %978 = vmax.xlane.f32.xlu0 %v977
        %v979 = vpop.xlane.xlu0 %978
        %v980 = vmax.f32 %v943, %v944
        %981 = vmax.xlane.f32.xlu0 %v980
        %v982 = vpop.xlane.xlu0 %981
        %v983 = vmax.f32 %v945, %v946
        %984 = vmax.xlane.f32.xlu0 %v983
        %v985 = vpop.xlane.xlu0 %984
        %v986 = vmax.f32 %v947, %v948
        %987 = vmax.xlane.f32.xlu0 %v986
        %v988 = vpop.xlane.xlu0 %987
        %v989 = vmax.f32 %v949, %v950
        %990 = vmax.xlane.f32.xlu0 %v989
        %v991 = vpop.xlane.xlu0 %990
        %v992 = vmax.f32 %v951, %v952
        %993 = vmax.xlane.f32.xlu0 %v992
        %v994 = vpop.xlane.xlu0 %993
        %v995 = vmax.f32 %v953, %v954
        %996 = vmax.xlane.f32.xlu0 %v995
        %v997 = vpop.xlane.xlu0 %996
        %v998 = vmax.f32 %v955, %v956
        %999 = vmax.xlane.f32.xlu0 %v998
        %v1000 = vpop.xlane.xlu0 %999
        %v1001 = vmax.f32 %v957, %v958
        %1002 = vmax.xlane.f32.xlu0 %v1001
        %v1003 = vpop.xlane.xlu0 %1002
        %v1004 = vmax.f32 %v959, %v960
        %1005 = vmax.xlane.f32.xlu0 %v1004
        %v1006 = vpop.xlane.xlu0 %1005
        %v1007 = vmax.f32 %v961, %v962
        %1008 = vmax.xlane.f32.xlu0 %v1007
        %v1009 = vpop.xlane.xlu0 %1008
        %v1010 = vmax.f32 %v963, %v964
        %1011 = vmax.xlane.f32.xlu0 %v1010
        %v1012 = vpop.xlane.xlu0 %1011
        %vm1013 = vcmp.eq.f32.partialorder %v933, %v967
        %vm1014 = vcmp.eq.f32.partialorder %v934, %v967
        %vm1015 = vcmp.eq.f32.partialorder %v935, %v970
        %vm1016 = vcmp.eq.f32.partialorder %v936, %v970
        %vm1017 = vcmp.eq.f32.partialorder %v937, %v973
        %vm1018 = vcmp.eq.f32.partialorder %v938, %v973
        %vm1019 = vcmp.eq.f32.partialorder %v939, %v976
        %vm1020 = vcmp.eq.f32.partialorder %v940, %v976
        %vm1021 = vcmp.eq.f32.partialorder %v941, %v979
        %vm1022 = vcmp.eq.f32.partialorder %v942, %v979
        %vm1023 = vcmp.eq.f32.partialorder %v943, %v982
        %vm1024 = vcmp.eq.f32.partialorder %v944, %v982
        %vm1025 = vcmp.eq.f32.partialorder %v945, %v985
        %vm1026 = vcmp.eq.f32.partialorder %v946, %v985
        %vm1027 = vcmp.eq.f32.partialorder %v947, %v988
        %vm1028 = vcmp.eq.f32.partialorder %v948, %v988
        %vm1029 = vcmp.eq.f32.partialorder %v949, %v991
        %vm1030 = vcmp.eq.f32.partialorder %v950, %v991
        %vm1031 = vcmp.eq.f32.partialorder %v951, %v994
        %vm1032 = vcmp.eq.f32.partialorder %v952, %v994
        %vm1033 = vcmp.eq.f32.partialorder %v953, %v997
        %vm1034 = vcmp.eq.f32.partialorder %v954, %v997
        %vm1035 = vcmp.eq.f32.partialorder %v955, %v1000
        %vm1036 = vcmp.eq.f32.partialorder %v956, %v1000
        %vm1037 = vcmp.eq.f32.partialorder %v957, %v1003
        %vm1038 = vcmp.eq.f32.partialorder %v958, %v1003
        %vm1039 = vcmp.eq.f32.partialorder %v959, %v1006
        %vm1040 = vcmp.eq.f32.partialorder %v960, %v1006
        %vm1041 = vcmp.eq.f32.partialorder %v961, %v1009
        %vm1042 = vcmp.eq.f32.partialorder %v962, %v1009
        %vm1043 = vcmp.eq.f32.partialorder %v963, %v1012
        %vm1044 = vcmp.eq.f32.partialorder %v964, %v1012
        %v1045 = vsel %vm1013, -1.0, %v933
        %v1046 = vsel %vm1014, -1.0, %v934
        %v1047 = vsel %vm1015, -1.0, %v935
        %v1048 = vsel %vm1016, -1.0, %v936
        %v1049 = vsel %vm1017, -1.0, %v937
        %v1050 = vsel %vm1018, -1.0, %v938
        %v1051 = vsel %vm1019, -1.0, %v939
        %v1052 = vsel %vm1020, -1.0, %v940
        %v1053 = vsel %vm1021, -1.0, %v941
        %v1054 = vsel %vm1022, -1.0, %v942
        %v1055 = vsel %vm1023, -1.0, %v943
        %v1056 = vsel %vm1024, -1.0, %v944
        %v1057 = vsel %vm1025, -1.0, %v945
        %v1058 = vsel %vm1026, -1.0, %v946
        %v1059 = vsel %vm1027, -1.0, %v947
        %v1060 = vsel %vm1028, -1.0, %v948
        %v1061 = vsel %vm1029, -1.0, %v949
        %v1062 = vsel %vm1030, -1.0, %v950
        %v1063 = vsel %vm1031, -1.0, %v951
        %v1064 = vsel %vm1032, -1.0, %v952
        %v1065 = vsel %vm1033, -1.0, %v953
        %v1066 = vsel %vm1034, -1.0, %v954
        %v1067 = vsel %vm1035, -1.0, %v955
        %v1068 = vsel %vm1036, -1.0, %v956
        %v1069 = vsel %vm1037, -1.0, %v957
        %v1070 = vsel %vm1038, -1.0, %v958
        %v1071 = vsel %vm1039, -1.0, %v959
        %v1072 = vsel %vm1040, -1.0, %v960
        %v1073 = vsel %vm1041, -1.0, %v961
        %v1074 = vsel %vm1042, -1.0, %v962
        %v1075 = vsel %vm1043, -1.0, %v963
        %v1076 = vsel %vm1044, -1.0, %v964
        %v1077 = vmax.f32 %v1045, %v1046
        %1078 = vmax.xlane.f32.xlu0 %v1077
        %v1079 = vpop.xlane.xlu0 %1078
        %v1080 = vmax.f32 %v1047, %v1048
        %1081 = vmax.xlane.f32.xlu0 %v1080
        %v1082 = vpop.xlane.xlu0 %1081
        %v1083 = vmax.f32 %v1049, %v1050
        %1084 = vmax.xlane.f32.xlu0 %v1083
        %v1085 = vpop.xlane.xlu0 %1084
        %v1086 = vmax.f32 %v1051, %v1052
        %1087 = vmax.xlane.f32.xlu0 %v1086
        %v1088 = vpop.xlane.xlu0 %1087
        %v1089 = vmax.f32 %v1053, %v1054
        %1090 = vmax.xlane.f32.xlu0 %v1089
        %v1091 = vpop.xlane.xlu0 %1090
        %v1092 = vmax.f32 %v1055, %v1056
        %1093 = vmax.xlane.f32.xlu0 %v1092
        %v1094 = vpop.xlane.xlu0 %1093
        %v1095 = vmax.f32 %v1057, %v1058
        %1096 = vmax.xlane.f32.xlu0 %v1095
        %v1097 = vpop.xlane.xlu0 %1096
        %v1098 = vmax.f32 %v1059, %v1060
        %1099 = vmax.xlane.f32.xlu0 %v1098
        %v1100 = vpop.xlane.xlu0 %1099
        %v1101 = vmax.f32 %v1061, %v1062
        %1102 = vmax.xlane.f32.xlu0 %v1101
        %v1103 = vpop.xlane.xlu0 %1102
        %v1104 = vmax.f32 %v1063, %v1064
        %1105 = vmax.xlane.f32.xlu0 %v1104
        %v1106 = vpop.xlane.xlu0 %1105
        %v1107 = vmax.f32 %v1065, %v1066
        %1108 = vmax.xlane.f32.xlu0 %v1107
        %v1109 = vpop.xlane.xlu0 %1108
        %v1110 = vmax.f32 %v1067, %v1068
        %1111 = vmax.xlane.f32.xlu0 %v1110
        %v1112 = vpop.xlane.xlu0 %1111
        %v1113 = vmax.f32 %v1069, %v1070
        %1114 = vmax.xlane.f32.xlu0 %v1113
        %v1115 = vpop.xlane.xlu0 %1114
        %v1116 = vmax.f32 %v1071, %v1072
        %1117 = vmax.xlane.f32.xlu0 %v1116
        %v1118 = vpop.xlane.xlu0 %1117
        %v1119 = vmax.f32 %v1073, %v1074
        %1120 = vmax.xlane.f32.xlu0 %v1119
        %v1121 = vpop.xlane.xlu0 %1120
        %v1122 = vmax.f32 %v1075, %v1076
        %1123 = vmax.xlane.f32.xlu0 %v1122
        %v1124 = vpop.xlane.xlu0 %1123
        %vm1125 = vcmp.eq.f32.partialorder %v1045, %v1079
        %vm1126 = vcmp.eq.f32.partialorder %v1046, %v1079
        %vm1127 = vcmp.eq.f32.partialorder %v1047, %v1082
        %vm1128 = vcmp.eq.f32.partialorder %v1048, %v1082
        %vm1129 = vcmp.eq.f32.partialorder %v1049, %v1085
        %vm1130 = vcmp.eq.f32.partialorder %v1050, %v1085
        %vm1131 = vcmp.eq.f32.partialorder %v1051, %v1088
        %vm1132 = vcmp.eq.f32.partialorder %v1052, %v1088
        %vm1133 = vcmp.eq.f32.partialorder %v1053, %v1091
        %vm1134 = vcmp.eq.f32.partialorder %v1054, %v1091
        %vm1135 = vcmp.eq.f32.partialorder %v1055, %v1094
        %vm1136 = vcmp.eq.f32.partialorder %v1056, %v1094
        %vm1137 = vcmp.eq.f32.partialorder %v1057, %v1097
        %vm1138 = vcmp.eq.f32.partialorder %v1058, %v1097
        %vm1139 = vcmp.eq.f32.partialorder %v1059, %v1100
        %vm1140 = vcmp.eq.f32.partialorder %v1060, %v1100
        %vm1141 = vcmp.eq.f32.partialorder %v1061, %v1103
        %vm1142 = vcmp.eq.f32.partialorder %v1062, %v1103
        %vm1143 = vcmp.eq.f32.partialorder %v1063, %v1106
        %vm1144 = vcmp.eq.f32.partialorder %v1064, %v1106
        %vm1145 = vcmp.eq.f32.partialorder %v1065, %v1109
        %vm1146 = vcmp.eq.f32.partialorder %v1066, %v1109
        %vm1147 = vcmp.eq.f32.partialorder %v1067, %v1112
        %vm1148 = vcmp.eq.f32.partialorder %v1068, %v1112
        %vm1149 = vcmp.eq.f32.partialorder %v1069, %v1115
        %vm1150 = vcmp.eq.f32.partialorder %v1070, %v1115
        %vm1151 = vcmp.eq.f32.partialorder %v1071, %v1118
        %vm1152 = vcmp.eq.f32.partialorder %v1072, %v1118
        %vm1153 = vcmp.eq.f32.partialorder %v1073, %v1121
        %vm1154 = vcmp.eq.f32.partialorder %v1074, %v1121
        %vm1155 = vcmp.eq.f32.partialorder %v1075, %v1124
        %vm1156 = vcmp.eq.f32.partialorder %v1076, %v1124
        %v1157 = vsel %vm1125, -1.0, %v1045
        %v1158 = vsel %vm1126, -1.0, %v1046
        %v1159 = vsel %vm1127, -1.0, %v1047
        %v1160 = vsel %vm1128, -1.0, %v1048
        %v1161 = vsel %vm1129, -1.0, %v1049
        %v1162 = vsel %vm1130, -1.0, %v1050
        %v1163 = vsel %vm1131, -1.0, %v1051
        %v1164 = vsel %vm1132, -1.0, %v1052
        %v1165 = vsel %vm1133, -1.0, %v1053
        %v1166 = vsel %vm1134, -1.0, %v1054
        %v1167 = vsel %vm1135, -1.0, %v1055
        %v1168 = vsel %vm1136, -1.0, %v1056
        %v1169 = vsel %vm1137, -1.0, %v1057
        %v1170 = vsel %vm1138, -1.0, %v1058
        %v1171 = vsel %vm1139, -1.0, %v1059
        %v1172 = vsel %vm1140, -1.0, %v1060
        %v1173 = vsel %vm1141, -1.0, %v1061
        %v1174 = vsel %vm1142, -1.0, %v1062
        %v1175 = vsel %vm1143, -1.0, %v1063
        %v1176 = vsel %vm1144, -1.0, %v1064
        %v1177 = vsel %vm1145, -1.0, %v1065
        %v1178 = vsel %vm1146, -1.0, %v1066
        %v1179 = vsel %vm1147, -1.0, %v1067
        %v1180 = vsel %vm1148, -1.0, %v1068
        %v1181 = vsel %vm1149, -1.0, %v1069
        %v1182 = vsel %vm1150, -1.0, %v1070
        %v1183 = vsel %vm1151, -1.0, %v1071
        %v1184 = vsel %vm1152, -1.0, %v1072
        %v1185 = vsel %vm1153, -1.0, %v1073
        %v1186 = vsel %vm1154, -1.0, %v1074
        %v1187 = vsel %vm1155, -1.0, %v1075
        %v1188 = vsel %vm1156, -1.0, %v1076
        %v1189 = vmax.f32 %v1157, %v1158
        %1190 = vmax.xlane.f32.xlu0 %v1189
        %v1191 = vpop.xlane.xlu0 %1190
        %v1192 = vmax.f32 %v1159, %v1160
        %1193 = vmax.xlane.f32.xlu0 %v1192
        %v1194 = vpop.xlane.xlu0 %1193
        %v1195 = vmax.f32 %v1161, %v1162
        %1196 = vmax.xlane.f32.xlu0 %v1195
        %v1197 = vpop.xlane.xlu0 %1196
        %v1198 = vmax.f32 %v1163, %v1164
        %1199 = vmax.xlane.f32.xlu0 %v1198
        %v1200 = vpop.xlane.xlu0 %1199
        %v1201 = vmax.f32 %v1165, %v1166
        %1202 = vmax.xlane.f32.xlu0 %v1201
        %v1203 = vpop.xlane.xlu0 %1202
        %v1204 = vmax.f32 %v1167, %v1168
        %1205 = vmax.xlane.f32.xlu0 %v1204
        %v1206 = vpop.xlane.xlu0 %1205
        %v1207 = vmax.f32 %v1169, %v1170
        %1208 = vmax.xlane.f32.xlu0 %v1207
        %v1209 = vpop.xlane.xlu0 %1208
        %v1210 = vmax.f32 %v1171, %v1172
        %1211 = vmax.xlane.f32.xlu0 %v1210
        %v1212 = vpop.xlane.xlu0 %1211
        %v1213 = vmax.f32 %v1173, %v1174
        %1214 = vmax.xlane.f32.xlu0 %v1213
        %v1215 = vpop.xlane.xlu0 %1214
        %v1216 = vmax.f32 %v1175, %v1176
        %1217 = vmax.xlane.f32.xlu0 %v1216
        %v1218 = vpop.xlane.xlu0 %1217
        %v1219 = vmax.f32 %v1177, %v1178
        %1220 = vmax.xlane.f32.xlu0 %v1219
        %v1221 = vpop.xlane.xlu0 %1220
        %v1222 = vmax.f32 %v1179, %v1180
        %1223 = vmax.xlane.f32.xlu0 %v1222
        %v1224 = vpop.xlane.xlu0 %1223
        %v1225 = vmax.f32 %v1181, %v1182
        %1226 = vmax.xlane.f32.xlu0 %v1225
        %v1227 = vpop.xlane.xlu0 %1226
        %v1228 = vmax.f32 %v1183, %v1184
        %1229 = vmax.xlane.f32.xlu0 %v1228
        %v1230 = vpop.xlane.xlu0 %1229
        %v1231 = vmax.f32 %v1185, %v1186
        %1232 = vmax.xlane.f32.xlu0 %v1231
        %v1233 = vpop.xlane.xlu0 %1232
        %v1234 = vmax.f32 %v1187, %v1188
        %1235 = vmax.xlane.f32.xlu0 %v1234
        %v1236 = vpop.xlane.xlu0 %1235
        %vm1237 = vcmp.eq.f32.partialorder %v1157, %v1191
        %vm1238 = vcmp.eq.f32.partialorder %v1158, %v1191
        %vm1239 = vcmp.eq.f32.partialorder %v1159, %v1194
        %vm1240 = vcmp.eq.f32.partialorder %v1160, %v1194
        %vm1241 = vcmp.eq.f32.partialorder %v1161, %v1197
        %vm1242 = vcmp.eq.f32.partialorder %v1162, %v1197
        %vm1243 = vcmp.eq.f32.partialorder %v1163, %v1200
        %vm1244 = vcmp.eq.f32.partialorder %v1164, %v1200
        %vm1245 = vcmp.eq.f32.partialorder %v1165, %v1203
        %vm1246 = vcmp.eq.f32.partialorder %v1166, %v1203
        %vm1247 = vcmp.eq.f32.partialorder %v1167, %v1206
        %vm1248 = vcmp.eq.f32.partialorder %v1168, %v1206
        %vm1249 = vcmp.eq.f32.partialorder %v1169, %v1209
        %vm1250 = vcmp.eq.f32.partialorder %v1170, %v1209
        %vm1251 = vcmp.eq.f32.partialorder %v1171, %v1212
        %vm1252 = vcmp.eq.f32.partialorder %v1172, %v1212
        %vm1253 = vcmp.eq.f32.partialorder %v1173, %v1215
        %vm1254 = vcmp.eq.f32.partialorder %v1174, %v1215
        %vm1255 = vcmp.eq.f32.partialorder %v1175, %v1218
        %vm1256 = vcmp.eq.f32.partialorder %v1176, %v1218
        %vm1257 = vcmp.eq.f32.partialorder %v1177, %v1221
        %vm1258 = vcmp.eq.f32.partialorder %v1178, %v1221
        %vm1259 = vcmp.eq.f32.partialorder %v1179, %v1224
        %vm1260 = vcmp.eq.f32.partialorder %v1180, %v1224
        %vm1261 = vcmp.eq.f32.partialorder %v1181, %v1227
        %vm1262 = vcmp.eq.f32.partialorder %v1182, %v1227
        %vm1263 = vcmp.eq.f32.partialorder %v1183, %v1230
        %vm1264 = vcmp.eq.f32.partialorder %v1184, %v1230
        %vm1265 = vcmp.eq.f32.partialorder %v1185, %v1233
        %vm1266 = vcmp.eq.f32.partialorder %v1186, %v1233
        %vm1267 = vcmp.eq.f32.partialorder %v1187, %v1236
        %vm1268 = vcmp.eq.f32.partialorder %v1188, %v1236
        %v1269 = vsel %vm1237, -1.0, %v1157
        %v1270 = vsel %vm1238, -1.0, %v1158
        %v1271 = vsel %vm1239, -1.0, %v1159
        %v1272 = vsel %vm1240, -1.0, %v1160
        %v1273 = vsel %vm1241, -1.0, %v1161
        %v1274 = vsel %vm1242, -1.0, %v1162
        %v1275 = vsel %vm1243, -1.0, %v1163
        %v1276 = vsel %vm1244, -1.0, %v1164
        %v1277 = vsel %vm1245, -1.0, %v1165
        %v1278 = vsel %vm1246, -1.0, %v1166
        %v1279 = vsel %vm1247, -1.0, %v1167
        %v1280 = vsel %vm1248, -1.0, %v1168
        %v1281 = vsel %vm1249, -1.0, %v1169
        %v1282 = vsel %vm1250, -1.0, %v1170
        %v1283 = vsel %vm1251, -1.0, %v1171
        %v1284 = vsel %vm1252, -1.0, %v1172
        %v1285 = vsel %vm1253, -1.0, %v1173
        %v1286 = vsel %vm1254, -1.0, %v1174
        %v1287 = vsel %vm1255, -1.0, %v1175
        %v1288 = vsel %vm1256, -1.0, %v1176
        %v1289 = vsel %vm1257, -1.0, %v1177
        %v1290 = vsel %vm1258, -1.0, %v1178
        %v1291 = vsel %vm1259, -1.0, %v1179
        %v1292 = vsel %vm1260, -1.0, %v1180
        %v1293 = vsel %vm1261, -1.0, %v1181
        %v1294 = vsel %vm1262, -1.0, %v1182
        %v1295 = vsel %vm1263, -1.0, %v1183
        %v1296 = vsel %vm1264, -1.0, %v1184
        %v1297 = vsel %vm1265, -1.0, %v1185
        %v1298 = vsel %vm1266, -1.0, %v1186
        %v1299 = vsel %vm1267, -1.0, %v1187
        %v1300 = vsel %vm1268, -1.0, %v1188
        %v1301 = vmax.f32 %v1269, %v1270
        %1302 = vmax.xlane.f32.xlu0 %v1301
        %v1303 = vpop.xlane.xlu0 %1302
        %v1304 = vmax.f32 %v1271, %v1272
        %1305 = vmax.xlane.f32.xlu0 %v1304
        %v1306 = vpop.xlane.xlu0 %1305
        %v1307 = vmax.f32 %v1273, %v1274
        %1308 = vmax.xlane.f32.xlu0 %v1307
        %v1309 = vpop.xlane.xlu0 %1308
        %v1310 = vmax.f32 %v1275, %v1276
        %1311 = vmax.xlane.f32.xlu0 %v1310
        %v1312 = vpop.xlane.xlu0 %1311
        %v1313 = vmax.f32 %v1277, %v1278
        %1314 = vmax.xlane.f32.xlu0 %v1313
        %v1315 = vpop.xlane.xlu0 %1314
        %v1316 = vmax.f32 %v1279, %v1280
        %1317 = vmax.xlane.f32.xlu0 %v1316
        %v1318 = vpop.xlane.xlu0 %1317
        %v1319 = vmax.f32 %v1281, %v1282
        %1320 = vmax.xlane.f32.xlu0 %v1319
        %v1321 = vpop.xlane.xlu0 %1320
        %v1322 = vmax.f32 %v1283, %v1284
        %1323 = vmax.xlane.f32.xlu0 %v1322
        %v1324 = vpop.xlane.xlu0 %1323
        %v1325 = vmax.f32 %v1285, %v1286
        %1326 = vmax.xlane.f32.xlu0 %v1325
        %v1327 = vpop.xlane.xlu0 %1326
        %v1328 = vmax.f32 %v1287, %v1288
        %1329 = vmax.xlane.f32.xlu0 %v1328
        %v1330 = vpop.xlane.xlu0 %1329
        %v1331 = vmax.f32 %v1289, %v1290
        %1332 = vmax.xlane.f32.xlu0 %v1331
        %v1333 = vpop.xlane.xlu0 %1332
        %v1334 = vmax.f32 %v1291, %v1292
        %1335 = vmax.xlane.f32.xlu0 %v1334
        %v1336 = vpop.xlane.xlu0 %1335
        %v1337 = vmax.f32 %v1293, %v1294
        %1338 = vmax.xlane.f32.xlu0 %v1337
        %v1339 = vpop.xlane.xlu0 %1338
        %v1340 = vmax.f32 %v1295, %v1296
        %1341 = vmax.xlane.f32.xlu0 %v1340
        %v1342 = vpop.xlane.xlu0 %1341
        %v1343 = vmax.f32 %v1297, %v1298
        %1344 = vmax.xlane.f32.xlu0 %v1343
        %v1345 = vpop.xlane.xlu0 %1344
        %v1346 = vmax.f32 %v1299, %v1300
        %1347 = vmax.xlane.f32.xlu0 %v1346
        %v1348 = vpop.xlane.xlu0 %1347
        %vm1349 = vcmp.eq.f32.partialorder %v1269, %v1303
        %vm1350 = vcmp.eq.f32.partialorder %v1270, %v1303
        %vm1351 = vcmp.eq.f32.partialorder %v1271, %v1306
        %vm1352 = vcmp.eq.f32.partialorder %v1272, %v1306
        %vm1353 = vcmp.eq.f32.partialorder %v1273, %v1309
        %vm1354 = vcmp.eq.f32.partialorder %v1274, %v1309
        %vm1355 = vcmp.eq.f32.partialorder %v1275, %v1312
        %vm1356 = vcmp.eq.f32.partialorder %v1276, %v1312
        %vm1357 = vcmp.eq.f32.partialorder %v1277, %v1315
        %vm1358 = vcmp.eq.f32.partialorder %v1278, %v1315
        %vm1359 = vcmp.eq.f32.partialorder %v1279, %v1318
        %vm1360 = vcmp.eq.f32.partialorder %v1280, %v1318
        %vm1361 = vcmp.eq.f32.partialorder %v1281, %v1321
        %vm1362 = vcmp.eq.f32.partialorder %v1282, %v1321
        %vm1363 = vcmp.eq.f32.partialorder %v1283, %v1324
        %vm1364 = vcmp.eq.f32.partialorder %v1284, %v1324
        %vm1365 = vcmp.eq.f32.partialorder %v1285, %v1327
        %vm1366 = vcmp.eq.f32.partialorder %v1286, %v1327
        %vm1367 = vcmp.eq.f32.partialorder %v1287, %v1330
        %vm1368 = vcmp.eq.f32.partialorder %v1288, %v1330
        %vm1369 = vcmp.eq.f32.partialorder %v1289, %v1333
        %vm1370 = vcmp.eq.f32.partialorder %v1290, %v1333
        %vm1371 = vcmp.eq.f32.partialorder %v1291, %v1336
        %vm1372 = vcmp.eq.f32.partialorder %v1292, %v1336
        %vm1373 = vcmp.eq.f32.partialorder %v1293, %v1339
        %vm1374 = vcmp.eq.f32.partialorder %v1294, %v1339
        %vm1375 = vcmp.eq.f32.partialorder %v1295, %v1342
        %vm1376 = vcmp.eq.f32.partialorder %v1296, %v1342
        %vm1377 = vcmp.eq.f32.partialorder %v1297, %v1345
        %vm1378 = vcmp.eq.f32.partialorder %v1298, %v1345
        %vm1379 = vcmp.eq.f32.partialorder %v1299, %v1348
        %vm1380 = vcmp.eq.f32.partialorder %v1300, %v1348
        %v1381 = vsel %vm1349, -1.0, %v1269
        %v1382 = vsel %vm1350, -1.0, %v1270
        %v1383 = vsel %vm1351, -1.0, %v1271
        %v1384 = vsel %vm1352, -1.0, %v1272
        %v1385 = vsel %vm1353, -1.0, %v1273
        %v1386 = vsel %vm1354, -1.0, %v1274
        %v1387 = vsel %vm1355, -1.0, %v1275
        %v1388 = vsel %vm1356, -1.0, %v1276
        %v1389 = vsel %vm1357, -1.0, %v1277
        %v1390 = vsel %vm1358, -1.0, %v1278
        %v1391 = vsel %vm1359, -1.0, %v1279
        %v1392 = vsel %vm1360, -1.0, %v1280
        %v1393 = vsel %vm1361, -1.0, %v1281
        %v1394 = vsel %vm1362, -1.0, %v1282
        %v1395 = vsel %vm1363, -1.0, %v1283
        %v1396 = vsel %vm1364, -1.0, %v1284
        %v1397 = vsel %vm1365, -1.0, %v1285
        %v1398 = vsel %vm1366, -1.0, %v1286
        %v1399 = vsel %vm1367, -1.0, %v1287
        %v1400 = vsel %vm1368, -1.0, %v1288
        %v1401 = vsel %vm1369, -1.0, %v1289
        %v1402 = vsel %vm1370, -1.0, %v1290
        %v1403 = vsel %vm1371, -1.0, %v1291
        %v1404 = vsel %vm1372, -1.0, %v1292
        %v1405 = vsel %vm1373, -1.0, %v1293
        %v1406 = vsel %vm1374, -1.0, %v1294
        %v1407 = vsel %vm1375, -1.0, %v1295
        %v1408 = vsel %vm1376, -1.0, %v1296
        %v1409 = vsel %vm1377, -1.0, %v1297
        %v1410 = vsel %vm1378, -1.0, %v1298
        %v1411 = vsel %vm1379, -1.0, %v1299
        %v1412 = vsel %vm1380, -1.0, %v1300
        %v1413 = vmax.f32 %v1381, %v1382
        %1414 = vmax.xlane.f32.xlu0 %v1413
        %v1415 = vpop.xlane.xlu0 %1414
        %v1416 = vmax.f32 %v1383, %v1384
        %1417 = vmax.xlane.f32.xlu0 %v1416
        %v1418 = vpop.xlane.xlu0 %1417
        %v1419 = vmax.f32 %v1385, %v1386
        %1420 = vmax.xlane.f32.xlu0 %v1419
        %v1421 = vpop.xlane.xlu0 %1420
        %v1422 = vmax.f32 %v1387, %v1388
        %1423 = vmax.xlane.f32.xlu0 %v1422
        %v1424 = vpop.xlane.xlu0 %1423
        %v1425 = vmax.f32 %v1389, %v1390
        %1426 = vmax.xlane.f32.xlu0 %v1425
        %v1427 = vpop.xlane.xlu0 %1426
        %v1428 = vmax.f32 %v1391, %v1392
        %1429 = vmax.xlane.f32.xlu0 %v1428
        %v1430 = vpop.xlane.xlu0 %1429
        %v1431 = vmax.f32 %v1393, %v1394
        %1432 = vmax.xlane.f32.xlu0 %v1431
        %v1433 = vpop.xlane.xlu0 %1432
        %v1434 = vmax.f32 %v1395, %v1396
        %1435 = vmax.xlane.f32.xlu0 %v1434
        %v1436 = vpop.xlane.xlu0 %1435
        %v1437 = vmax.f32 %v1397, %v1398
        %1438 = vmax.xlane.f32.xlu0 %v1437
        %v1439 = vpop.xlane.xlu0 %1438
        %v1440 = vmax.f32 %v1399, %v1400
        %1441 = vmax.xlane.f32.xlu0 %v1440
        %v1442 = vpop.xlane.xlu0 %1441
        %v1443 = vmax.f32 %v1401, %v1402
        %1444 = vmax.xlane.f32.xlu0 %v1443
        %v1445 = vpop.xlane.xlu0 %1444
        %v1446 = vmax.f32 %v1403, %v1404
        %1447 = vmax.xlane.f32.xlu0 %v1446
        %v1448 = vpop.xlane.xlu0 %1447
        %v1449 = vmax.f32 %v1405, %v1406
        %1450 = vmax.xlane.f32.xlu0 %v1449
        %v1451 = vpop.xlane.xlu0 %1450
        %v1452 = vmax.f32 %v1407, %v1408
        %1453 = vmax.xlane.f32.xlu0 %v1452
        %v1454 = vpop.xlane.xlu0 %1453
        %v1455 = vmax.f32 %v1409, %v1410
        %1456 = vmax.xlane.f32.xlu0 %v1455
        %v1457 = vpop.xlane.xlu0 %1456
        %v1458 = vmax.f32 %v1411, %v1412
        %1459 = vmax.xlane.f32.xlu0 %v1458
        %v1460 = vpop.xlane.xlu0 %1459
        %vm1461 = vcmp.eq.f32.partialorder %v1381, %v1415
        %vm1462 = vcmp.eq.f32.partialorder %v1382, %v1415
        %vm1463 = vcmp.eq.f32.partialorder %v1383, %v1418
        %vm1464 = vcmp.eq.f32.partialorder %v1384, %v1418
        %vm1465 = vcmp.eq.f32.partialorder %v1385, %v1421
        %vm1466 = vcmp.eq.f32.partialorder %v1386, %v1421
        %vm1467 = vcmp.eq.f32.partialorder %v1387, %v1424
        %vm1468 = vcmp.eq.f32.partialorder %v1388, %v1424
        %vm1469 = vcmp.eq.f32.partialorder %v1389, %v1427
        %vm1470 = vcmp.eq.f32.partialorder %v1390, %v1427
        %vm1471 = vcmp.eq.f32.partialorder %v1391, %v1430
        %vm1472 = vcmp.eq.f32.partialorder %v1392, %v1430
        %vm1473 = vcmp.eq.f32.partialorder %v1393, %v1433
        %vm1474 = vcmp.eq.f32.partialorder %v1394, %v1433
        %vm1475 = vcmp.eq.f32.partialorder %v1395, %v1436
        %vm1476 = vcmp.eq.f32.partialorder %v1396, %v1436
        %vm1477 = vcmp.eq.f32.partialorder %v1397, %v1439
        %vm1478 = vcmp.eq.f32.partialorder %v1398, %v1439
        %vm1479 = vcmp.eq.f32.partialorder %v1399, %v1442
        %vm1480 = vcmp.eq.f32.partialorder %v1400, %v1442
        %vm1481 = vcmp.eq.f32.partialorder %v1401, %v1445
        %vm1482 = vcmp.eq.f32.partialorder %v1402, %v1445
        %vm1483 = vcmp.eq.f32.partialorder %v1403, %v1448
        %vm1484 = vcmp.eq.f32.partialorder %v1404, %v1448
        %vm1485 = vcmp.eq.f32.partialorder %v1405, %v1451
        %vm1486 = vcmp.eq.f32.partialorder %v1406, %v1451
        %vm1487 = vcmp.eq.f32.partialorder %v1407, %v1454
        %vm1488 = vcmp.eq.f32.partialorder %v1408, %v1454
        %vm1489 = vcmp.eq.f32.partialorder %v1409, %v1457
        %vm1490 = vcmp.eq.f32.partialorder %v1410, %v1457
        %vm1491 = vcmp.eq.f32.partialorder %v1411, %v1460
        %vm1492 = vcmp.eq.f32.partialorder %v1412, %v1460
        %v1493 = vsel %vm1461, -1.0, %v1381
        %v1494 = vsel %vm1462, -1.0, %v1382
        %v1495 = vsel %vm1463, -1.0, %v1383
        %v1496 = vsel %vm1464, -1.0, %v1384
        %v1497 = vsel %vm1465, -1.0, %v1385
        %v1498 = vsel %vm1466, -1.0, %v1386
        %v1499 = vsel %vm1467, -1.0, %v1387
        %v1500 = vsel %vm1468, -1.0, %v1388
        %v1501 = vsel %vm1469, -1.0, %v1389
        %v1502 = vsel %vm1470, -1.0, %v1390
        %v1503 = vsel %vm1471, -1.0, %v1391
        %v1504 = vsel %vm1472, -1.0, %v1392
        %v1505 = vsel %vm1473, -1.0, %v1393
        %v1506 = vsel %vm1474, -1.0, %v1394
        %v1507 = vsel %vm1475, -1.0, %v1395
        %v1508 = vsel %vm1476, -1.0, %v1396
        %v1509 = vsel %vm1477, -1.0, %v1397
        %v1510 = vsel %vm1478, -1.0, %v1398
        %v1511 = vsel %vm1479, -1.0, %v1399
        %v1512 = vsel %vm1480, -1.0, %v1400
        %v1513 = vsel %vm1481, -1.0, %v1401
        %v1514 = vsel %vm1482, -1.0, %v1402
        %v1515 = vsel %vm1483, -1.0, %v1403
        %v1516 = vsel %vm1484, -1.0, %v1404
        %v1517 = vsel %vm1485, -1.0, %v1405
        %v1518 = vsel %vm1486, -1.0, %v1406
        %v1519 = vsel %vm1487, -1.0, %v1407
        %v1520 = vsel %vm1488, -1.0, %v1408
        %v1521 = vsel %vm1489, -1.0, %v1409
        %v1522 = vsel %vm1490, -1.0, %v1410
        %v1523 = vsel %vm1491, -1.0, %v1411
        %v1524 = vsel %vm1492, -1.0, %v1412
        %v1525 = vmax.f32 %v1493, %v1494
        %1526 = vmax.xlane.f32.xlu0 %v1525
        %v1527 = vpop.xlane.xlu0 %1526
        %v1528 = vmax.f32 %v1495, %v1496
        %1529 = vmax.xlane.f32.xlu0 %v1528
        %v1530 = vpop.xlane.xlu0 %1529
        %v1531 = vmax.f32 %v1497, %v1498
        %1532 = vmax.xlane.f32.xlu0 %v1531
        %v1533 = vpop.xlane.xlu0 %1532
        %v1534 = vmax.f32 %v1499, %v1500
        %1535 = vmax.xlane.f32.xlu0 %v1534
        %v1536 = vpop.xlane.xlu0 %1535
        %v1537 = vmax.f32 %v1501, %v1502
        %1538 = vmax.xlane.f32.xlu0 %v1537
        %v1539 = vpop.xlane.xlu0 %1538
        %v1540 = vmax.f32 %v1503, %v1504
        %1541 = vmax.xlane.f32.xlu0 %v1540
        %v1542 = vpop.xlane.xlu0 %1541
        %v1543 = vmax.f32 %v1505, %v1506
        %1544 = vmax.xlane.f32.xlu0 %v1543
        %v1545 = vpop.xlane.xlu0 %1544
        %v1546 = vmax.f32 %v1507, %v1508
        %1547 = vmax.xlane.f32.xlu0 %v1546
        %v1548 = vpop.xlane.xlu0 %1547
        %v1549 = vmax.f32 %v1509, %v1510
        %1550 = vmax.xlane.f32.xlu0 %v1549
        %v1551 = vpop.xlane.xlu0 %1550
        %v1552 = vmax.f32 %v1511, %v1512
        %1553 = vmax.xlane.f32.xlu0 %v1552
        %v1554 = vpop.xlane.xlu0 %1553
        %v1555 = vmax.f32 %v1513, %v1514
        %1556 = vmax.xlane.f32.xlu0 %v1555
        %v1557 = vpop.xlane.xlu0 %1556
        %v1558 = vmax.f32 %v1515, %v1516
        %1559 = vmax.xlane.f32.xlu0 %v1558
        %v1560 = vpop.xlane.xlu0 %1559
        %v1561 = vmax.f32 %v1517, %v1518
        %1562 = vmax.xlane.f32.xlu0 %v1561
        %v1563 = vpop.xlane.xlu0 %1562
        %v1564 = vmax.f32 %v1519, %v1520
        %1565 = vmax.xlane.f32.xlu0 %v1564
        %v1566 = vpop.xlane.xlu0 %1565
        %v1567 = vmax.f32 %v1521, %v1522
        %1568 = vmax.xlane.f32.xlu0 %v1567
        %v1569 = vpop.xlane.xlu0 %1568
        %v1570 = vmax.f32 %v1523, %v1524
        %1571 = vmax.xlane.f32.xlu0 %v1570
        %v1572 = vpop.xlane.xlu0 %1571
        %vm1573 = vcmp.eq.f32.partialorder %v1493, %v1527
        %vm1574 = vcmp.eq.f32.partialorder %v1494, %v1527
        %vm1575 = vcmp.eq.f32.partialorder %v1495, %v1530
        %vm1576 = vcmp.eq.f32.partialorder %v1496, %v1530
        %vm1577 = vcmp.eq.f32.partialorder %v1497, %v1533
        %vm1578 = vcmp.eq.f32.partialorder %v1498, %v1533
        %vm1579 = vcmp.eq.f32.partialorder %v1499, %v1536
        %vm1580 = vcmp.eq.f32.partialorder %v1500, %v1536
        %vm1581 = vcmp.eq.f32.partialorder %v1501, %v1539
        %vm1582 = vcmp.eq.f32.partialorder %v1502, %v1539
        %vm1583 = vcmp.eq.f32.partialorder %v1503, %v1542
        %vm1584 = vcmp.eq.f32.partialorder %v1504, %v1542
        %vm1585 = vcmp.eq.f32.partialorder %v1505, %v1545
        %vm1586 = vcmp.eq.f32.partialorder %v1506, %v1545
        %vm1587 = vcmp.eq.f32.partialorder %v1507, %v1548
        %vm1588 = vcmp.eq.f32.partialorder %v1508, %v1548
        %vm1589 = vcmp.eq.f32.partialorder %v1509, %v1551
        %vm1590 = vcmp.eq.f32.partialorder %v1510, %v1551
        %vm1591 = vcmp.eq.f32.partialorder %v1511, %v1554
        %vm1592 = vcmp.eq.f32.partialorder %v1512, %v1554
        %vm1593 = vcmp.eq.f32.partialorder %v1513, %v1557
        %vm1594 = vcmp.eq.f32.partialorder %v1514, %v1557
        %vm1595 = vcmp.eq.f32.partialorder %v1515, %v1560
        %vm1596 = vcmp.eq.f32.partialorder %v1516, %v1560
        %vm1597 = vcmp.eq.f32.partialorder %v1517, %v1563
        %vm1598 = vcmp.eq.f32.partialorder %v1518, %v1563
        %vm1599 = vcmp.eq.f32.partialorder %v1519, %v1566
        %vm1600 = vcmp.eq.f32.partialorder %v1520, %v1566
        %vm1601 = vcmp.eq.f32.partialorder %v1521, %v1569
        %vm1602 = vcmp.eq.f32.partialorder %v1522, %v1569
        %vm1603 = vcmp.eq.f32.partialorder %v1523, %v1572
        %vm1604 = vcmp.eq.f32.partialorder %v1524, %v1572
        %v1605 = vsel %vm1573, -1.0, %v1493
        %v1606 = vsel %vm1574, -1.0, %v1494
        %v1607 = vsel %vm1575, -1.0, %v1495
        %v1608 = vsel %vm1576, -1.0, %v1496
        %v1609 = vsel %vm1577, -1.0, %v1497
        %v1610 = vsel %vm1578, -1.0, %v1498
        %v1611 = vsel %vm1579, -1.0, %v1499
        %v1612 = vsel %vm1580, -1.0, %v1500
        %v1613 = vsel %vm1581, -1.0, %v1501
        %v1614 = vsel %vm1582, -1.0, %v1502
        %v1615 = vsel %vm1583, -1.0, %v1503
        %v1616 = vsel %vm1584, -1.0, %v1504
        %v1617 = vsel %vm1585, -1.0, %v1505
        %v1618 = vsel %vm1586, -1.0, %v1506
        %v1619 = vsel %vm1587, -1.0, %v1507
        %v1620 = vsel %vm1588, -1.0, %v1508
        %v1621 = vsel %vm1589, -1.0, %v1509
        %v1622 = vsel %vm1590, -1.0, %v1510
        %v1623 = vsel %vm1591, -1.0, %v1511
        %v1624 = vsel %vm1592, -1.0, %v1512
        %v1625 = vsel %vm1593, -1.0, %v1513
        %v1626 = vsel %vm1594, -1.0, %v1514
        %v1627 = vsel %vm1595, -1.0, %v1515
        %v1628 = vsel %vm1596, -1.0, %v1516
        %v1629 = vsel %vm1597, -1.0, %v1517
        %v1630 = vsel %vm1598, -1.0, %v1518
        %v1631 = vsel %vm1599, -1.0, %v1519
        %v1632 = vsel %vm1600, -1.0, %v1520
        %v1633 = vsel %vm1601, -1.0, %v1521
        %v1634 = vsel %vm1602, -1.0, %v1522
        %v1635 = vsel %vm1603, -1.0, %v1523
        %v1636 = vsel %vm1604, -1.0, %v1524
        %v1637 = vmax.f32 %v1605, %v1606
        %1638 = vmax.xlane.f32.xlu0 %v1637
        %v1639 = vpop.xlane.xlu0 %1638
        %v1640 = vmax.f32 %v1607, %v1608
        %1641 = vmax.xlane.f32.xlu0 %v1640
        %v1642 = vpop.xlane.xlu0 %1641
        %v1643 = vmax.f32 %v1609, %v1610
        %1644 = vmax.xlane.f32.xlu0 %v1643
        %v1645 = vpop.xlane.xlu0 %1644
        %v1646 = vmax.f32 %v1611, %v1612
        %1647 = vmax.xlane.f32.xlu0 %v1646
        %v1648 = vpop.xlane.xlu0 %1647
        %v1649 = vmax.f32 %v1613, %v1614
        %1650 = vmax.xlane.f32.xlu0 %v1649
        %v1651 = vpop.xlane.xlu0 %1650
        %v1652 = vmax.f32 %v1615, %v1616
        %1653 = vmax.xlane.f32.xlu0 %v1652
        %v1654 = vpop.xlane.xlu0 %1653
        %v1655 = vmax.f32 %v1617, %v1618
        %1656 = vmax.xlane.f32.xlu0 %v1655
        %v1657 = vpop.xlane.xlu0 %1656
        %v1658 = vmax.f32 %v1619, %v1620
        %1659 = vmax.xlane.f32.xlu0 %v1658
        %v1660 = vpop.xlane.xlu0 %1659
        %v1661 = vmax.f32 %v1621, %v1622
        %1662 = vmax.xlane.f32.xlu0 %v1661
        %v1663 = vpop.xlane.xlu0 %1662
        %v1664 = vmax.f32 %v1623, %v1624
        %1665 = vmax.xlane.f32.xlu0 %v1664
        %v1666 = vpop.xlane.xlu0 %1665
        %v1667 = vmax.f32 %v1625, %v1626
        %1668 = vmax.xlane.f32.xlu0 %v1667
        %v1669 = vpop.xlane.xlu0 %1668
        %v1670 = vmax.f32 %v1627, %v1628
        %1671 = vmax.xlane.f32.xlu0 %v1670
        %v1672 = vpop.xlane.xlu0 %1671
        %v1673 = vmax.f32 %v1629, %v1630
        %1674 = vmax.xlane.f32.xlu0 %v1673
        %v1675 = vpop.xlane.xlu0 %1674
        %v1676 = vmax.f32 %v1631, %v1632
        %1677 = vmax.xlane.f32.xlu0 %v1676
        %v1678 = vpop.xlane.xlu0 %1677
        %v1679 = vmax.f32 %v1633, %v1634
        %1680 = vmax.xlane.f32.xlu0 %v1679
        %v1681 = vpop.xlane.xlu0 %1680
        %v1682 = vmax.f32 %v1635, %v1636
        %1683 = vmax.xlane.f32.xlu0 %v1682
        %v1684 = vpop.xlane.xlu0 %1683
        %vm1685 = vcmp.eq.f32.partialorder %v1605, %v1639
        %vm1686 = vcmp.eq.f32.partialorder %v1606, %v1639
        %vm1687 = vcmp.eq.f32.partialorder %v1607, %v1642
        %vm1688 = vcmp.eq.f32.partialorder %v1608, %v1642
        %vm1689 = vcmp.eq.f32.partialorder %v1609, %v1645
        %vm1690 = vcmp.eq.f32.partialorder %v1610, %v1645
        %vm1691 = vcmp.eq.f32.partialorder %v1611, %v1648
        %vm1692 = vcmp.eq.f32.partialorder %v1612, %v1648
        %vm1693 = vcmp.eq.f32.partialorder %v1613, %v1651
        %vm1694 = vcmp.eq.f32.partialorder %v1614, %v1651
        %vm1695 = vcmp.eq.f32.partialorder %v1615, %v1654
        %vm1696 = vcmp.eq.f32.partialorder %v1616, %v1654
        %vm1697 = vcmp.eq.f32.partialorder %v1617, %v1657
        %vm1698 = vcmp.eq.f32.partialorder %v1618, %v1657
        %vm1699 = vcmp.eq.f32.partialorder %v1619, %v1660
        %vm1700 = vcmp.eq.f32.partialorder %v1620, %v1660
        %vm1701 = vcmp.eq.f32.partialorder %v1621, %v1663
        %vm1702 = vcmp.eq.f32.partialorder %v1622, %v1663
        %vm1703 = vcmp.eq.f32.partialorder %v1623, %v1666
        %vm1704 = vcmp.eq.f32.partialorder %v1624, %v1666
        %vm1705 = vcmp.eq.f32.partialorder %v1625, %v1669
        %vm1706 = vcmp.eq.f32.partialorder %v1626, %v1669
        %vm1707 = vcmp.eq.f32.partialorder %v1627, %v1672
        %vm1708 = vcmp.eq.f32.partialorder %v1628, %v1672
        %vm1709 = vcmp.eq.f32.partialorder %v1629, %v1675
        %vm1710 = vcmp.eq.f32.partialorder %v1630, %v1675
        %vm1711 = vcmp.eq.f32.partialorder %v1631, %v1678
        %vm1712 = vcmp.eq.f32.partialorder %v1632, %v1678
        %vm1713 = vcmp.eq.f32.partialorder %v1633, %v1681
        %vm1714 = vcmp.eq.f32.partialorder %v1634, %v1681
        %vm1715 = vcmp.eq.f32.partialorder %v1635, %v1684
        %vm1716 = vcmp.eq.f32.partialorder %v1636, %v1684
        %v1717 = vsel %vm1685, -1.0, %v1605
        %v1718 = vsel %vm1686, -1.0, %v1606
        %v1719 = vsel %vm1687, -1.0, %v1607
        %v1720 = vsel %vm1688, -1.0, %v1608
        %v1721 = vsel %vm1689, -1.0, %v1609
        %v1722 = vsel %vm1690, -1.0, %v1610
        %v1723 = vsel %vm1691, -1.0, %v1611
        %v1724 = vsel %vm1692, -1.0, %v1612
        %v1725 = vsel %vm1693, -1.0, %v1613
        %v1726 = vsel %vm1694, -1.0, %v1614
        %v1727 = vsel %vm1695, -1.0, %v1615
        %v1728 = vsel %vm1696, -1.0, %v1616
        %v1729 = vsel %vm1697, -1.0, %v1617
        %v1730 = vsel %vm1698, -1.0, %v1618
        %v1731 = vsel %vm1699, -1.0, %v1619
        %v1732 = vsel %vm1700, -1.0, %v1620
        %v1733 = vsel %vm1701, -1.0, %v1621
        %v1734 = vsel %vm1702, -1.0, %v1622
        %v1735 = vsel %vm1703, -1.0, %v1623
        %v1736 = vsel %vm1704, -1.0, %v1624
        %v1737 = vsel %vm1705, -1.0, %v1625
        %v1738 = vsel %vm1706, -1.0, %v1626
        %v1739 = vsel %vm1707, -1.0, %v1627
        %v1740 = vsel %vm1708, -1.0, %v1628
        %v1741 = vsel %vm1709, -1.0, %v1629
        %v1742 = vsel %vm1710, -1.0, %v1630
        %v1743 = vsel %vm1711, -1.0, %v1631
        %v1744 = vsel %vm1712, -1.0, %v1632
        %v1745 = vsel %vm1713, -1.0, %v1633
        %v1746 = vsel %vm1714, -1.0, %v1634
        %v1747 = vsel %vm1715, -1.0, %v1635
        %v1748 = vsel %vm1716, -1.0, %v1636
        %v1749 = vmax.f32 %v1717, %v1718
        %1750 = vmax.xlane.f32.xlu0 %v1749
        %v1751 = vpop.xlane.xlu0 %1750
        %v1752 = vmax.f32 %v1719, %v1720
        %1753 = vmax.xlane.f32.xlu0 %v1752
        %v1754 = vpop.xlane.xlu0 %1753
        %v1755 = vmax.f32 %v1721, %v1722
        %1756 = vmax.xlane.f32.xlu0 %v1755
        %v1757 = vpop.xlane.xlu0 %1756
        %v1758 = vmax.f32 %v1723, %v1724
        %1759 = vmax.xlane.f32.xlu0 %v1758
        %v1760 = vpop.xlane.xlu0 %1759
        %v1761 = vmax.f32 %v1725, %v1726
        %1762 = vmax.xlane.f32.xlu0 %v1761
        %v1763 = vpop.xlane.xlu0 %1762
        %v1764 = vmax.f32 %v1727, %v1728
        %1765 = vmax.xlane.f32.xlu0 %v1764
        %v1766 = vpop.xlane.xlu0 %1765
        %v1767 = vmax.f32 %v1729, %v1730
        %1768 = vmax.xlane.f32.xlu0 %v1767
        %v1769 = vpop.xlane.xlu0 %1768
        %v1770 = vmax.f32 %v1731, %v1732
        %1771 = vmax.xlane.f32.xlu0 %v1770
        %v1772 = vpop.xlane.xlu0 %1771
        %v1773 = vmax.f32 %v1733, %v1734
        %1774 = vmax.xlane.f32.xlu0 %v1773
        %v1775 = vpop.xlane.xlu0 %1774
        %v1776 = vmax.f32 %v1735, %v1736
        %1777 = vmax.xlane.f32.xlu0 %v1776
        %v1778 = vpop.xlane.xlu0 %1777
        %v1779 = vmax.f32 %v1737, %v1738
        %1780 = vmax.xlane.f32.xlu0 %v1779
        %v1781 = vpop.xlane.xlu0 %1780
        %v1782 = vmax.f32 %v1739, %v1740
        %1783 = vmax.xlane.f32.xlu0 %v1782
        %v1784 = vpop.xlane.xlu0 %1783
        %v1785 = vmax.f32 %v1741, %v1742
        %1786 = vmax.xlane.f32.xlu0 %v1785
        %v1787 = vpop.xlane.xlu0 %1786
        %v1788 = vmax.f32 %v1743, %v1744
        %1789 = vmax.xlane.f32.xlu0 %v1788
        %v1790 = vpop.xlane.xlu0 %1789
        %v1791 = vmax.f32 %v1745, %v1746
        %1792 = vmax.xlane.f32.xlu0 %v1791
        %v1793 = vpop.xlane.xlu0 %1792
        %v1794 = vmax.f32 %v1747, %v1748
        %1795 = vmax.xlane.f32.xlu0 %v1794
        %v1796 = vpop.xlane.xlu0 %1795
        %vm1797 = vcmp.eq.f32.partialorder %v1717, %v1751
        %vm1798 = vcmp.eq.f32.partialorder %v1718, %v1751
        %vm1799 = vcmp.eq.f32.partialorder %v1719, %v1754
        %vm1800 = vcmp.eq.f32.partialorder %v1720, %v1754
        %vm1801 = vcmp.eq.f32.partialorder %v1721, %v1757
        %vm1802 = vcmp.eq.f32.partialorder %v1722, %v1757
        %vm1803 = vcmp.eq.f32.partialorder %v1723, %v1760
        %vm1804 = vcmp.eq.f32.partialorder %v1724, %v1760
        %vm1805 = vcmp.eq.f32.partialorder %v1725, %v1763
        %vm1806 = vcmp.eq.f32.partialorder %v1726, %v1763
        %vm1807 = vcmp.eq.f32.partialorder %v1727, %v1766
        %vm1808 = vcmp.eq.f32.partialorder %v1728, %v1766
        %vm1809 = vcmp.eq.f32.partialorder %v1729, %v1769
        %vm1810 = vcmp.eq.f32.partialorder %v1730, %v1769
        %vm1811 = vcmp.eq.f32.partialorder %v1731, %v1772
        %vm1812 = vcmp.eq.f32.partialorder %v1732, %v1772
        %vm1813 = vcmp.eq.f32.partialorder %v1733, %v1775
        %vm1814 = vcmp.eq.f32.partialorder %v1734, %v1775
        %vm1815 = vcmp.eq.f32.partialorder %v1735, %v1778
        %vm1816 = vcmp.eq.f32.partialorder %v1736, %v1778
        %vm1817 = vcmp.eq.f32.partialorder %v1737, %v1781
        %vm1818 = vcmp.eq.f32.partialorder %v1738, %v1781
        %vm1819 = vcmp.eq.f32.partialorder %v1739, %v1784
        %vm1820 = vcmp.eq.f32.partialorder %v1740, %v1784
        %vm1821 = vcmp.eq.f32.partialorder %v1741, %v1787
        %vm1822 = vcmp.eq.f32.partialorder %v1742, %v1787
        %vm1823 = vcmp.eq.f32.partialorder %v1743, %v1790
        %vm1824 = vcmp.eq.f32.partialorder %v1744, %v1790
        %vm1825 = vcmp.eq.f32.partialorder %v1745, %v1793
        %vm1826 = vcmp.eq.f32.partialorder %v1746, %v1793
        %vm1827 = vcmp.eq.f32.partialorder %v1747, %v1796
        %vm1828 = vcmp.eq.f32.partialorder %v1748, %v1796
        %v1829 = vsel %vm1797, -1.0, %v1717
        %v1830 = vsel %vm1798, -1.0, %v1718
        %v1831 = vsel %vm1799, -1.0, %v1719
        %v1832 = vsel %vm1800, -1.0, %v1720
        %v1833 = vsel %vm1801, -1.0, %v1721
        %v1834 = vsel %vm1802, -1.0, %v1722
        %v1835 = vsel %vm1803, -1.0, %v1723
        %v1836 = vsel %vm1804, -1.0, %v1724
        %v1837 = vsel %vm1805, -1.0, %v1725
        %v1838 = vsel %vm1806, -1.0, %v1726
        %v1839 = vsel %vm1807, -1.0, %v1727
        %v1840 = vsel %vm1808, -1.0, %v1728
        %v1841 = vsel %vm1809, -1.0, %v1729
        %v1842 = vsel %vm1810, -1.0, %v1730
        %v1843 = vsel %vm1811, -1.0, %v1731
        %v1844 = vsel %vm1812, -1.0, %v1732
        %v1845 = vsel %vm1813, -1.0, %v1733
        %v1846 = vsel %vm1814, -1.0, %v1734
        %v1847 = vsel %vm1815, -1.0, %v1735
        %v1848 = vsel %vm1816, -1.0, %v1736
        %v1849 = vsel %vm1817, -1.0, %v1737
        %v1850 = vsel %vm1818, -1.0, %v1738
        %v1851 = vsel %vm1819, -1.0, %v1739
        %v1852 = vsel %vm1820, -1.0, %v1740
        %v1853 = vsel %vm1821, -1.0, %v1741
        %v1854 = vsel %vm1822, -1.0, %v1742
        %v1855 = vsel %vm1823, -1.0, %v1743
        %v1856 = vsel %vm1824, -1.0, %v1744
        %v1857 = vsel %vm1825, -1.0, %v1745
        %v1858 = vsel %vm1826, -1.0, %v1746
        %v1859 = vsel %vm1827, -1.0, %v1747
        %v1860 = vsel %vm1828, -1.0, %v1748
        %v1861 = vmax.f32 %v1829, %v1830
        %1862 = vmax.xlane.f32.xlu0 %v1861
        %v1863 = vpop.xlane.xlu0 %1862
        %v1864 = vmax.f32 %v1831, %v1832
        %1865 = vmax.xlane.f32.xlu0 %v1864
        %v1866 = vpop.xlane.xlu0 %1865
        %v1867 = vmax.f32 %v1833, %v1834
        %1868 = vmax.xlane.f32.xlu0 %v1867
        %v1869 = vpop.xlane.xlu0 %1868
        %v1870 = vmax.f32 %v1835, %v1836
        %1871 = vmax.xlane.f32.xlu0 %v1870
        %v1872 = vpop.xlane.xlu0 %1871
        %v1873 = vmax.f32 %v1837, %v1838
        %1874 = vmax.xlane.f32.xlu0 %v1873
        %v1875 = vpop.xlane.xlu0 %1874
        %v1876 = vmax.f32 %v1839, %v1840
        %1877 = vmax.xlane.f32.xlu0 %v1876
        %v1878 = vpop.xlane.xlu0 %1877
        %v1879 = vmax.f32 %v1841, %v1842
        %1880 = vmax.xlane.f32.xlu0 %v1879
        %v1881 = vpop.xlane.xlu0 %1880
        %v1882 = vmax.f32 %v1843, %v1844
        %1883 = vmax.xlane.f32.xlu0 %v1882
        %v1884 = vpop.xlane.xlu0 %1883
        %v1885 = vmax.f32 %v1845, %v1846
        %1886 = vmax.xlane.f32.xlu0 %v1885
        %v1887 = vpop.xlane.xlu0 %1886
        %v1888 = vmax.f32 %v1847, %v1848
        %1889 = vmax.xlane.f32.xlu0 %v1888
        %v1890 = vpop.xlane.xlu0 %1889
        %v1891 = vmax.f32 %v1849, %v1850
        %1892 = vmax.xlane.f32.xlu0 %v1891
        %v1893 = vpop.xlane.xlu0 %1892
        %v1894 = vmax.f32 %v1851, %v1852
        %1895 = vmax.xlane.f32.xlu0 %v1894
        %v1896 = vpop.xlane.xlu0 %1895
        %v1897 = vmax.f32 %v1853, %v1854
        %1898 = vmax.xlane.f32.xlu0 %v1897
        %v1899 = vpop.xlane.xlu0 %1898
        %v1900 = vmax.f32 %v1855, %v1856
        %1901 = vmax.xlane.f32.xlu0 %v1900
        %v1902 = vpop.xlane.xlu0 %1901
        %v1903 = vmax.f32 %v1857, %v1858
        %1904 = vmax.xlane.f32.xlu0 %v1903
        %v1905 = vpop.xlane.xlu0 %1904
        %v1906 = vmax.f32 %v1859, %v1860
        %1907 = vmax.xlane.f32.xlu0 %v1906
        %v1908 = vpop.xlane.xlu0 %1907
        %vm1909 = vcmp.eq.f32.partialorder %v1829, %v1863
        %vm1910 = vcmp.eq.f32.partialorder %v1830, %v1863
        %vm1911 = vcmp.eq.f32.partialorder %v1831, %v1866
        %vm1912 = vcmp.eq.f32.partialorder %v1832, %v1866
        %vm1913 = vcmp.eq.f32.partialorder %v1833, %v1869
        %vm1914 = vcmp.eq.f32.partialorder %v1834, %v1869
        %vm1915 = vcmp.eq.f32.partialorder %v1835, %v1872
        %vm1916 = vcmp.eq.f32.partialorder %v1836, %v1872
        %vm1917 = vcmp.eq.f32.partialorder %v1837, %v1875
        %vm1918 = vcmp.eq.f32.partialorder %v1838, %v1875
        %vm1919 = vcmp.eq.f32.partialorder %v1839, %v1878
        %vm1920 = vcmp.eq.f32.partialorder %v1840, %v1878
        %vm1921 = vcmp.eq.f32.partialorder %v1841, %v1881
        %vm1922 = vcmp.eq.f32.partialorder %v1842, %v1881
        %vm1923 = vcmp.eq.f32.partialorder %v1843, %v1884
        %vm1924 = vcmp.eq.f32.partialorder %v1844, %v1884
        %vm1925 = vcmp.eq.f32.partialorder %v1845, %v1887
        %vm1926 = vcmp.eq.f32.partialorder %v1846, %v1887
        %vm1927 = vcmp.eq.f32.partialorder %v1847, %v1890
        %vm1928 = vcmp.eq.f32.partialorder %v1848, %v1890
        %vm1929 = vcmp.eq.f32.partialorder %v1849, %v1893
        %vm1930 = vcmp.eq.f32.partialorder %v1850, %v1893
        %vm1931 = vcmp.eq.f32.partialorder %v1851, %v1896
        %vm1932 = vcmp.eq.f32.partialorder %v1852, %v1896
        %vm1933 = vcmp.eq.f32.partialorder %v1853, %v1899
        %vm1934 = vcmp.eq.f32.partialorder %v1854, %v1899
        %vm1935 = vcmp.eq.f32.partialorder %v1855, %v1902
        %vm1936 = vcmp.eq.f32.partialorder %v1856, %v1902
        %vm1937 = vcmp.eq.f32.partialorder %v1857, %v1905
        %vm1938 = vcmp.eq.f32.partialorder %v1858, %v1905
        %vm1939 = vcmp.eq.f32.partialorder %v1859, %v1908
        %vm1940 = vcmp.eq.f32.partialorder %v1860, %v1908
        %v1941 = vsel %vm1909, -1.0, %v1829
        %v1942 = vsel %vm1910, -1.0, %v1830
        %v1943 = vsel %vm1911, -1.0, %v1831
        %v1944 = vsel %vm1912, -1.0, %v1832
        %v1945 = vsel %vm1913, -1.0, %v1833
        %v1946 = vsel %vm1914, -1.0, %v1834
        %v1947 = vsel %vm1915, -1.0, %v1835
        %v1948 = vsel %vm1916, -1.0, %v1836
        %v1949 = vsel %vm1917, -1.0, %v1837
        %v1950 = vsel %vm1918, -1.0, %v1838
        %v1951 = vsel %vm1919, -1.0, %v1839
        %v1952 = vsel %vm1920, -1.0, %v1840
        %v1953 = vsel %vm1921, -1.0, %v1841
        %v1954 = vsel %vm1922, -1.0, %v1842
        %v1955 = vsel %vm1923, -1.0, %v1843
        %v1956 = vsel %vm1924, -1.0, %v1844
        %v1957 = vsel %vm1925, -1.0, %v1845
        %v1958 = vsel %vm1926, -1.0, %v1846
        %v1959 = vsel %vm1927, -1.0, %v1847
        %v1960 = vsel %vm1928, -1.0, %v1848
        %v1961 = vsel %vm1929, -1.0, %v1849
        %v1962 = vsel %vm1930, -1.0, %v1850
        %v1963 = vsel %vm1931, -1.0, %v1851
        %v1964 = vsel %vm1932, -1.0, %v1852
        %v1965 = vsel %vm1933, -1.0, %v1853
        %v1966 = vsel %vm1934, -1.0, %v1854
        %v1967 = vsel %vm1935, -1.0, %v1855
        %v1968 = vsel %vm1936, -1.0, %v1856
        %v1969 = vsel %vm1937, -1.0, %v1857
        %v1970 = vsel %vm1938, -1.0, %v1858
        %v1971 = vsel %vm1939, -1.0, %v1859
        %v1972 = vsel %vm1940, -1.0, %v1860
        %v1973 = vmax.f32 %v1941, %v1942
        %1974 = vmax.xlane.f32.xlu0 %v1973
        %v1975 = vpop.xlane.xlu0 %1974
        %v1976 = vmax.f32 %v1943, %v1944
        %1977 = vmax.xlane.f32.xlu0 %v1976
        %v1978 = vpop.xlane.xlu0 %1977
        %v1979 = vmax.f32 %v1945, %v1946
        %1980 = vmax.xlane.f32.xlu0 %v1979
        %v1981 = vpop.xlane.xlu0 %1980
        %v1982 = vmax.f32 %v1947, %v1948
        %1983 = vmax.xlane.f32.xlu0 %v1982
        %v1984 = vpop.xlane.xlu0 %1983
        %v1985 = vmax.f32 %v1949, %v1950
        %1986 = vmax.xlane.f32.xlu0 %v1985
        %v1987 = vpop.xlane.xlu0 %1986
        %v1988 = vmax.f32 %v1951, %v1952
        %1989 = vmax.xlane.f32.xlu0 %v1988
        %v1990 = vpop.xlane.xlu0 %1989
        %v1991 = vmax.f32 %v1953, %v1954
        %1992 = vmax.xlane.f32.xlu0 %v1991
        %v1993 = vpop.xlane.xlu0 %1992
        %v1994 = vmax.f32 %v1955, %v1956
        %1995 = vmax.xlane.f32.xlu0 %v1994
        %v1996 = vpop.xlane.xlu0 %1995
        %v1997 = vmax.f32 %v1957, %v1958
        %1998 = vmax.xlane.f32.xlu0 %v1997
        %v1999 = vpop.xlane.xlu0 %1998
        %v2000 = vmax.f32 %v1959, %v1960
        %2001 = vmax.xlane.f32.xlu0 %v2000
        %v2002 = vpop.xlane.xlu0 %2001
        %v2003 = vmax.f32 %v1961, %v1962
        %2004 = vmax.xlane.f32.xlu0 %v2003
        %v2005 = vpop.xlane.xlu0 %2004
        %v2006 = vmax.f32 %v1963, %v1964
        %2007 = vmax.xlane.f32.xlu0 %v2006
        %v2008 = vpop.xlane.xlu0 %2007
        %v2009 = vmax.f32 %v1965, %v1966
        %2010 = vmax.xlane.f32.xlu0 %v2009
        %v2011 = vpop.xlane.xlu0 %2010
        %v2012 = vmax.f32 %v1967, %v1968
        %2013 = vmax.xlane.f32.xlu0 %v2012
        %v2014 = vpop.xlane.xlu0 %2013
        %v2015 = vmax.f32 %v1969, %v1970
        %2016 = vmax.xlane.f32.xlu0 %v2015
        %v2017 = vpop.xlane.xlu0 %2016
        %v2018 = vmax.f32 %v1971, %v1972
        %2019 = vmax.xlane.f32.xlu0 %v2018
        %v2020 = vpop.xlane.xlu0 %2019
        %vm2021 = vcmp.eq.f32.partialorder %v1941, %v1975
        %vm2022 = vcmp.eq.f32.partialorder %v1942, %v1975
        %vm2023 = vcmp.eq.f32.partialorder %v1943, %v1978
        %vm2024 = vcmp.eq.f32.partialorder %v1944, %v1978
        %vm2025 = vcmp.eq.f32.partialorder %v1945, %v1981
        %vm2026 = vcmp.eq.f32.partialorder %v1946, %v1981
        %vm2027 = vcmp.eq.f32.partialorder %v1947, %v1984
        %vm2028 = vcmp.eq.f32.partialorder %v1948, %v1984
        %vm2029 = vcmp.eq.f32.partialorder %v1949, %v1987
        %vm2030 = vcmp.eq.f32.partialorder %v1950, %v1987
        %vm2031 = vcmp.eq.f32.partialorder %v1951, %v1990
        %vm2032 = vcmp.eq.f32.partialorder %v1952, %v1990
        %vm2033 = vcmp.eq.f32.partialorder %v1953, %v1993
        %vm2034 = vcmp.eq.f32.partialorder %v1954, %v1993
        %vm2035 = vcmp.eq.f32.partialorder %v1955, %v1996
        %vm2036 = vcmp.eq.f32.partialorder %v1956, %v1996
        %vm2037 = vcmp.eq.f32.partialorder %v1957, %v1999
        %vm2038 = vcmp.eq.f32.partialorder %v1958, %v1999
        %vm2039 = vcmp.eq.f32.partialorder %v1959, %v2002
        %vm2040 = vcmp.eq.f32.partialorder %v1960, %v2002
        %vm2041 = vcmp.eq.f32.partialorder %v1961, %v2005
        %vm2042 = vcmp.eq.f32.partialorder %v1962, %v2005
        %vm2043 = vcmp.eq.f32.partialorder %v1963, %v2008
        %vm2044 = vcmp.eq.f32.partialorder %v1964, %v2008
        %vm2045 = vcmp.eq.f32.partialorder %v1965, %v2011
        %vm2046 = vcmp.eq.f32.partialorder %v1966, %v2011
        %vm2047 = vcmp.eq.f32.partialorder %v1967, %v2014
        %vm2048 = vcmp.eq.f32.partialorder %v1968, %v2014
        %vm2049 = vcmp.eq.f32.partialorder %v1969, %v2017
        %vm2050 = vcmp.eq.f32.partialorder %v1970, %v2017
        %vm2051 = vcmp.eq.f32.partialorder %v1971, %v2020
        %vm2052 = vcmp.eq.f32.partialorder %v1972, %v2020
        %v2053 = vsel %vm2021, -1.0, %v1941
        %v2054 = vsel %vm2022, -1.0, %v1942
        %v2055 = vsel %vm2023, -1.0, %v1943
        %v2056 = vsel %vm2024, -1.0, %v1944
        %v2057 = vsel %vm2025, -1.0, %v1945
        %v2058 = vsel %vm2026, -1.0, %v1946
        %v2059 = vsel %vm2027, -1.0, %v1947
        %v2060 = vsel %vm2028, -1.0, %v1948
        %v2061 = vsel %vm2029, -1.0, %v1949
        %v2062 = vsel %vm2030, -1.0, %v1950
        %v2063 = vsel %vm2031, -1.0, %v1951
        %v2064 = vsel %vm2032, -1.0, %v1952
        %v2065 = vsel %vm2033, -1.0, %v1953
        %v2066 = vsel %vm2034, -1.0, %v1954
        %v2067 = vsel %vm2035, -1.0, %v1955
        %v2068 = vsel %vm2036, -1.0, %v1956
        %v2069 = vsel %vm2037, -1.0, %v1957
        %v2070 = vsel %vm2038, -1.0, %v1958
        %v2071 = vsel %vm2039, -1.0, %v1959
        %v2072 = vsel %vm2040, -1.0, %v1960
        %v2073 = vsel %vm2041, -1.0, %v1961
        %v2074 = vsel %vm2042, -1.0, %v1962
        %v2075 = vsel %vm2043, -1.0, %v1963
        %v2076 = vsel %vm2044, -1.0, %v1964
        %v2077 = vsel %vm2045, -1.0, %v1965
        %v2078 = vsel %vm2046, -1.0, %v1966
        %v2079 = vsel %vm2047, -1.0, %v1967
        %v2080 = vsel %vm2048, -1.0, %v1968
        %v2081 = vsel %vm2049, -1.0, %v1969
        %v2082 = vsel %vm2050, -1.0, %v1970
        %v2083 = vsel %vm2051, -1.0, %v1971
        %v2084 = vsel %vm2052, -1.0, %v1972
        %v2085 = vmax.f32 %v2053, %v2054
        %2086 = vmax.xlane.f32.xlu0 %v2085
        %v2087 = vpop.xlane.xlu0 %2086
        %v2088 = vmax.f32 %v2055, %v2056
        %2089 = vmax.xlane.f32.xlu0 %v2088
        %v2090 = vpop.xlane.xlu0 %2089
        %v2091 = vmax.f32 %v2057, %v2058
        %2092 = vmax.xlane.f32.xlu0 %v2091
        %v2093 = vpop.xlane.xlu0 %2092
        %v2094 = vmax.f32 %v2059, %v2060
        %2095 = vmax.xlane.f32.xlu0 %v2094
        %v2096 = vpop.xlane.xlu0 %2095
        %v2097 = vmax.f32 %v2061, %v2062
        %2098 = vmax.xlane.f32.xlu0 %v2097
        %v2099 = vpop.xlane.xlu0 %2098
        %v2100 = vmax.f32 %v2063, %v2064
        %2101 = vmax.xlane.f32.xlu0 %v2100
        %v2102 = vpop.xlane.xlu0 %2101
        %v2103 = vmax.f32 %v2065, %v2066
        %2104 = vmax.xlane.f32.xlu0 %v2103
        %v2105 = vpop.xlane.xlu0 %2104
        %v2106 = vmax.f32 %v2067, %v2068
        %2107 = vmax.xlane.f32.xlu0 %v2106
        %v2108 = vpop.xlane.xlu0 %2107
        %v2109 = vmax.f32 %v2069, %v2070
        %2110 = vmax.xlane.f32.xlu0 %v2109
        %v2111 = vpop.xlane.xlu0 %2110
        %v2112 = vmax.f32 %v2071, %v2072
        %2113 = vmax.xlane.f32.xlu0 %v2112
        %v2114 = vpop.xlane.xlu0 %2113
        %v2115 = vmax.f32 %v2073, %v2074
        %2116 = vmax.xlane.f32.xlu0 %v2115
        %v2117 = vpop.xlane.xlu0 %2116
        %v2118 = vmax.f32 %v2075, %v2076
        %2119 = vmax.xlane.f32.xlu0 %v2118
        %v2120 = vpop.xlane.xlu0 %2119
        %v2121 = vmax.f32 %v2077, %v2078
        %2122 = vmax.xlane.f32.xlu0 %v2121
        %v2123 = vpop.xlane.xlu0 %2122
        %v2124 = vmax.f32 %v2079, %v2080
        %2125 = vmax.xlane.f32.xlu0 %v2124
        %v2126 = vpop.xlane.xlu0 %2125
        %v2127 = vmax.f32 %v2081, %v2082
        %2128 = vmax.xlane.f32.xlu0 %v2127
        %v2129 = vpop.xlane.xlu0 %2128
        %v2130 = vmax.f32 %v2083, %v2084
        %2131 = vmax.xlane.f32.xlu0 %v2130
        %v2132 = vpop.xlane.xlu0 %2131
        %vm2133 = vcmp.eq.f32.partialorder %v2053, %v2087
        %vm2134 = vcmp.eq.f32.partialorder %v2054, %v2087
        %vm2135 = vcmp.eq.f32.partialorder %v2055, %v2090
        %vm2136 = vcmp.eq.f32.partialorder %v2056, %v2090
        %vm2137 = vcmp.eq.f32.partialorder %v2057, %v2093
        %vm2138 = vcmp.eq.f32.partialorder %v2058, %v2093
        %vm2139 = vcmp.eq.f32.partialorder %v2059, %v2096
        %vm2140 = vcmp.eq.f32.partialorder %v2060, %v2096
        %vm2141 = vcmp.eq.f32.partialorder %v2061, %v2099
        %vm2142 = vcmp.eq.f32.partialorder %v2062, %v2099
        %vm2143 = vcmp.eq.f32.partialorder %v2063, %v2102
        %vm2144 = vcmp.eq.f32.partialorder %v2064, %v2102
        %vm2145 = vcmp.eq.f32.partialorder %v2065, %v2105
        %vm2146 = vcmp.eq.f32.partialorder %v2066, %v2105
        %vm2147 = vcmp.eq.f32.partialorder %v2067, %v2108
        %vm2148 = vcmp.eq.f32.partialorder %v2068, %v2108
        %vm2149 = vcmp.eq.f32.partialorder %v2069, %v2111
        %vm2150 = vcmp.eq.f32.partialorder %v2070, %v2111
        %vm2151 = vcmp.eq.f32.partialorder %v2071, %v2114
        %vm2152 = vcmp.eq.f32.partialorder %v2072, %v2114
        %vm2153 = vcmp.eq.f32.partialorder %v2073, %v2117
        %vm2154 = vcmp.eq.f32.partialorder %v2074, %v2117
        %vm2155 = vcmp.eq.f32.partialorder %v2075, %v2120
        %vm2156 = vcmp.eq.f32.partialorder %v2076, %v2120
        %vm2157 = vcmp.eq.f32.partialorder %v2077, %v2123
        %vm2158 = vcmp.eq.f32.partialorder %v2078, %v2123
        %vm2159 = vcmp.eq.f32.partialorder %v2079, %v2126
        %vm2160 = vcmp.eq.f32.partialorder %v2080, %v2126
        %vm2161 = vcmp.eq.f32.partialorder %v2081, %v2129
        %vm2162 = vcmp.eq.f32.partialorder %v2082, %v2129
        %vm2163 = vcmp.eq.f32.partialorder %v2083, %v2132
        %vm2164 = vcmp.eq.f32.partialorder %v2084, %v2132
        %v2165 = vsel %vm2133, -1.0, %v2053
        %v2166 = vsel %vm2134, -1.0, %v2054
        %v2167 = vsel %vm2135, -1.0, %v2055
        %v2168 = vsel %vm2136, -1.0, %v2056
        %v2169 = vsel %vm2137, -1.0, %v2057
        %v2170 = vsel %vm2138, -1.0, %v2058
        %v2171 = vsel %vm2139, -1.0, %v2059
        %v2172 = vsel %vm2140, -1.0, %v2060
        %v2173 = vsel %vm2141, -1.0, %v2061
        %v2174 = vsel %vm2142, -1.0, %v2062
        %v2175 = vsel %vm2143, -1.0, %v2063
        %v2176 = vsel %vm2144, -1.0, %v2064
        %v2177 = vsel %vm2145, -1.0, %v2065
        %v2178 = vsel %vm2146, -1.0, %v2066
        %v2179 = vsel %vm2147, -1.0, %v2067
        %v2180 = vsel %vm2148, -1.0, %v2068
        %v2181 = vsel %vm2149, -1.0, %v2069
        %v2182 = vsel %vm2150, -1.0, %v2070
        %v2183 = vsel %vm2151, -1.0, %v2071
        %v2184 = vsel %vm2152, -1.0, %v2072
        %v2185 = vsel %vm2153, -1.0, %v2073
        %v2186 = vsel %vm2154, -1.0, %v2074
        %v2187 = vsel %vm2155, -1.0, %v2075
        %v2188 = vsel %vm2156, -1.0, %v2076
        %v2189 = vsel %vm2157, -1.0, %v2077
        %v2190 = vsel %vm2158, -1.0, %v2078
        %v2191 = vsel %vm2159, -1.0, %v2079
        %v2192 = vsel %vm2160, -1.0, %v2080
        %v2193 = vsel %vm2161, -1.0, %v2081
        %v2194 = vsel %vm2162, -1.0, %v2082
        %v2195 = vsel %vm2163, -1.0, %v2083
        %v2196 = vsel %vm2164, -1.0, %v2084
        %v2197 = vmax.f32 %v2165, %v2166
        %2198 = vmax.xlane.f32.xlu0 %v2197
        %v2199 = vpop.xlane.xlu0 %2198
        %v2200 = vmax.f32 %v2167, %v2168
        %2201 = vmax.xlane.f32.xlu0 %v2200
        %v2202 = vpop.xlane.xlu0 %2201
        %v2203 = vmax.f32 %v2169, %v2170
        %2204 = vmax.xlane.f32.xlu0 %v2203
        %v2205 = vpop.xlane.xlu0 %2204
        %v2206 = vmax.f32 %v2171, %v2172
        %2207 = vmax.xlane.f32.xlu0 %v2206
        %v2208 = vpop.xlane.xlu0 %2207
        %v2209 = vmax.f32 %v2173, %v2174
        %2210 = vmax.xlane.f32.xlu0 %v2209
        %v2211 = vpop.xlane.xlu0 %2210
        %v2212 = vmax.f32 %v2175, %v2176
        %2213 = vmax.xlane.f32.xlu0 %v2212
        %v2214 = vpop.xlane.xlu0 %2213
        %v2215 = vmax.f32 %v2177, %v2178
        %2216 = vmax.xlane.f32.xlu0 %v2215
        %v2217 = vpop.xlane.xlu0 %2216
        %v2218 = vmax.f32 %v2179, %v2180
        %2219 = vmax.xlane.f32.xlu0 %v2218
        %v2220 = vpop.xlane.xlu0 %2219
        %v2221 = vmax.f32 %v2181, %v2182
        %2222 = vmax.xlane.f32.xlu0 %v2221
        %v2223 = vpop.xlane.xlu0 %2222
        %v2224 = vmax.f32 %v2183, %v2184
        %2225 = vmax.xlane.f32.xlu0 %v2224
        %v2226 = vpop.xlane.xlu0 %2225
        %v2227 = vmax.f32 %v2185, %v2186
        %2228 = vmax.xlane.f32.xlu0 %v2227
        %v2229 = vpop.xlane.xlu0 %2228
        %v2230 = vmax.f32 %v2187, %v2188
        %2231 = vmax.xlane.f32.xlu0 %v2230
        %v2232 = vpop.xlane.xlu0 %2231
        %v2233 = vmax.f32 %v2189, %v2190
        %2234 = vmax.xlane.f32.xlu0 %v2233
        %v2235 = vpop.xlane.xlu0 %2234
        %v2236 = vmax.f32 %v2191, %v2192
        %2237 = vmax.xlane.f32.xlu0 %v2236
        %v2238 = vpop.xlane.xlu0 %2237
        %v2239 = vmax.f32 %v2193, %v2194
        %2240 = vmax.xlane.f32.xlu0 %v2239
        %v2241 = vpop.xlane.xlu0 %2240
        %v2242 = vmax.f32 %v2195, %v2196
        %2243 = vmax.xlane.f32.xlu0 %v2242
        %v2244 = vpop.xlane.xlu0 %2243
        %vm2245 = vcmp.eq.f32.partialorder %v2165, %v2199
        %vm2246 = vcmp.eq.f32.partialorder %v2166, %v2199
        %vm2247 = vcmp.eq.f32.partialorder %v2167, %v2202
        %vm2248 = vcmp.eq.f32.partialorder %v2168, %v2202
        %vm2249 = vcmp.eq.f32.partialorder %v2169, %v2205
        %vm2250 = vcmp.eq.f32.partialorder %v2170, %v2205
        %vm2251 = vcmp.eq.f32.partialorder %v2171, %v2208
        %vm2252 = vcmp.eq.f32.partialorder %v2172, %v2208
        %vm2253 = vcmp.eq.f32.partialorder %v2173, %v2211
        %vm2254 = vcmp.eq.f32.partialorder %v2174, %v2211
        %vm2255 = vcmp.eq.f32.partialorder %v2175, %v2214
        %vm2256 = vcmp.eq.f32.partialorder %v2176, %v2214
        %vm2257 = vcmp.eq.f32.partialorder %v2177, %v2217
        %vm2258 = vcmp.eq.f32.partialorder %v2178, %v2217
        %vm2259 = vcmp.eq.f32.partialorder %v2179, %v2220
        %vm2260 = vcmp.eq.f32.partialorder %v2180, %v2220
        %vm2261 = vcmp.eq.f32.partialorder %v2181, %v2223
        %vm2262 = vcmp.eq.f32.partialorder %v2182, %v2223
        %vm2263 = vcmp.eq.f32.partialorder %v2183, %v2226
        %vm2264 = vcmp.eq.f32.partialorder %v2184, %v2226
        %vm2265 = vcmp.eq.f32.partialorder %v2185, %v2229
        %vm2266 = vcmp.eq.f32.partialorder %v2186, %v2229
        %vm2267 = vcmp.eq.f32.partialorder %v2187, %v2232
        %vm2268 = vcmp.eq.f32.partialorder %v2188, %v2232
        %vm2269 = vcmp.eq.f32.partialorder %v2189, %v2235
        %vm2270 = vcmp.eq.f32.partialorder %v2190, %v2235
        %vm2271 = vcmp.eq.f32.partialorder %v2191, %v2238
        %vm2272 = vcmp.eq.f32.partialorder %v2192, %v2238
        %vm2273 = vcmp.eq.f32.partialorder %v2193, %v2241
        %vm2274 = vcmp.eq.f32.partialorder %v2194, %v2241
        %vm2275 = vcmp.eq.f32.partialorder %v2195, %v2244
        %vm2276 = vcmp.eq.f32.partialorder %v2196, %v2244
        %v2277 = vsel %vm2245, -1.0, %v2165
        %v2278 = vsel %vm2246, -1.0, %v2166
        %v2279 = vsel %vm2247, -1.0, %v2167
        %v2280 = vsel %vm2248, -1.0, %v2168
        %v2281 = vsel %vm2249, -1.0, %v2169
        %v2282 = vsel %vm2250, -1.0, %v2170
        %v2283 = vsel %vm2251, -1.0, %v2171
        %v2284 = vsel %vm2252, -1.0, %v2172
        %v2285 = vsel %vm2253, -1.0, %v2173
        %v2286 = vsel %vm2254, -1.0, %v2174
        %v2287 = vsel %vm2255, -1.0, %v2175
        %v2288 = vsel %vm2256, -1.0, %v2176
        %v2289 = vsel %vm2257, -1.0, %v2177
        %v2290 = vsel %vm2258, -1.0, %v2178
        %v2291 = vsel %vm2259, -1.0, %v2179
        %v2292 = vsel %vm2260, -1.0, %v2180
        %v2293 = vsel %vm2261, -1.0, %v2181
        %v2294 = vsel %vm2262, -1.0, %v2182
        %v2295 = vsel %vm2263, -1.0, %v2183
        %v2296 = vsel %vm2264, -1.0, %v2184
        %v2297 = vsel %vm2265, -1.0, %v2185
        %v2298 = vsel %vm2266, -1.0, %v2186
        %v2299 = vsel %vm2267, -1.0, %v2187
        %v2300 = vsel %vm2268, -1.0, %v2188
        %v2301 = vsel %vm2269, -1.0, %v2189
        %v2302 = vsel %vm2270, -1.0, %v2190
        %v2303 = vsel %vm2271, -1.0, %v2191
        %v2304 = vsel %vm2272, -1.0, %v2192
        %v2305 = vsel %vm2273, -1.0, %v2193
        %v2306 = vsel %vm2274, -1.0, %v2194
        %v2307 = vsel %vm2275, -1.0, %v2195
        %v2308 = vsel %vm2276, -1.0, %v2196
        %v2309 = vmax.f32 %v2277, %v2278
        %2310 = vmax.xlane.f32.xlu0 %v2309
        %v2311 = vpop.xlane.xlu0 %2310
        %v2312 = vmax.f32 %v2279, %v2280
        %2313 = vmax.xlane.f32.xlu0 %v2312
        %v2314 = vpop.xlane.xlu0 %2313
        %v2315 = vmax.f32 %v2281, %v2282
        %2316 = vmax.xlane.f32.xlu0 %v2315
        %v2317 = vpop.xlane.xlu0 %2316
        %v2318 = vmax.f32 %v2283, %v2284
        %2319 = vmax.xlane.f32.xlu0 %v2318
        %v2320 = vpop.xlane.xlu0 %2319
        %v2321 = vmax.f32 %v2285, %v2286
        %2322 = vmax.xlane.f32.xlu0 %v2321
        %v2323 = vpop.xlane.xlu0 %2322
        %v2324 = vmax.f32 %v2287, %v2288
        %2325 = vmax.xlane.f32.xlu0 %v2324
        %v2326 = vpop.xlane.xlu0 %2325
        %v2327 = vmax.f32 %v2289, %v2290
        %2328 = vmax.xlane.f32.xlu0 %v2327
        %v2329 = vpop.xlane.xlu0 %2328
        %v2330 = vmax.f32 %v2291, %v2292
        %2331 = vmax.xlane.f32.xlu0 %v2330
        %v2332 = vpop.xlane.xlu0 %2331
        %v2333 = vmax.f32 %v2293, %v2294
        %2334 = vmax.xlane.f32.xlu0 %v2333
        %v2335 = vpop.xlane.xlu0 %2334
        %v2336 = vmax.f32 %v2295, %v2296
        %2337 = vmax.xlane.f32.xlu0 %v2336
        %v2338 = vpop.xlane.xlu0 %2337
        %v2339 = vmax.f32 %v2297, %v2298
        %2340 = vmax.xlane.f32.xlu0 %v2339
        %v2341 = vpop.xlane.xlu0 %2340
        %v2342 = vmax.f32 %v2299, %v2300
        %2343 = vmax.xlane.f32.xlu0 %v2342
        %v2344 = vpop.xlane.xlu0 %2343
        %v2345 = vmax.f32 %v2301, %v2302
        %2346 = vmax.xlane.f32.xlu0 %v2345
        %v2347 = vpop.xlane.xlu0 %2346
        %v2348 = vmax.f32 %v2303, %v2304
        %2349 = vmax.xlane.f32.xlu0 %v2348
        %v2350 = vpop.xlane.xlu0 %2349
        %v2351 = vmax.f32 %v2305, %v2306
        %2352 = vmax.xlane.f32.xlu0 %v2351
        %v2353 = vpop.xlane.xlu0 %2352
        %v2354 = vmax.f32 %v2307, %v2308
        %2355 = vmax.xlane.f32.xlu0 %v2354
        %v2356 = vpop.xlane.xlu0 %2355
        %vm2357 = vcmp.eq.f32.partialorder %v2277, %v2311
        %vm2358 = vcmp.eq.f32.partialorder %v2278, %v2311
        %vm2359 = vcmp.eq.f32.partialorder %v2279, %v2314
        %vm2360 = vcmp.eq.f32.partialorder %v2280, %v2314
        %vm2361 = vcmp.eq.f32.partialorder %v2281, %v2317
        %vm2362 = vcmp.eq.f32.partialorder %v2282, %v2317
        %vm2363 = vcmp.eq.f32.partialorder %v2283, %v2320
        %vm2364 = vcmp.eq.f32.partialorder %v2284, %v2320
        %vm2365 = vcmp.eq.f32.partialorder %v2285, %v2323
        %vm2366 = vcmp.eq.f32.partialorder %v2286, %v2323
        %vm2367 = vcmp.eq.f32.partialorder %v2287, %v2326
        %vm2368 = vcmp.eq.f32.partialorder %v2288, %v2326
        %vm2369 = vcmp.eq.f32.partialorder %v2289, %v2329
        %vm2370 = vcmp.eq.f32.partialorder %v2290, %v2329
        %vm2371 = vcmp.eq.f32.partialorder %v2291, %v2332
        %vm2372 = vcmp.eq.f32.partialorder %v2292, %v2332
        %vm2373 = vcmp.eq.f32.partialorder %v2293, %v2335
        %vm2374 = vcmp.eq.f32.partialorder %v2294, %v2335
        %vm2375 = vcmp.eq.f32.partialorder %v2295, %v2338
        %vm2376 = vcmp.eq.f32.partialorder %v2296, %v2338
        %vm2377 = vcmp.eq.f32.partialorder %v2297, %v2341
        %vm2378 = vcmp.eq.f32.partialorder %v2298, %v2341
        %vm2379 = vcmp.eq.f32.partialorder %v2299, %v2344
        %vm2380 = vcmp.eq.f32.partialorder %v2300, %v2344
        %vm2381 = vcmp.eq.f32.partialorder %v2301, %v2347
        %vm2382 = vcmp.eq.f32.partialorder %v2302, %v2347
        %vm2383 = vcmp.eq.f32.partialorder %v2303, %v2350
        %vm2384 = vcmp.eq.f32.partialorder %v2304, %v2350
        %vm2385 = vcmp.eq.f32.partialorder %v2305, %v2353
        %vm2386 = vcmp.eq.f32.partialorder %v2306, %v2353
        %vm2387 = vcmp.eq.f32.partialorder %v2307, %v2356
        %vm2388 = vcmp.eq.f32.partialorder %v2308, %v2356
        %v2389 = vsel %vm2357, -1.0, %v2277
        %v2390 = vsel %vm2358, -1.0, %v2278
        %v2391 = vsel %vm2359, -1.0, %v2279
        %v2392 = vsel %vm2360, -1.0, %v2280
        %v2393 = vsel %vm2361, -1.0, %v2281
        %v2394 = vsel %vm2362, -1.0, %v2282
        %v2395 = vsel %vm2363, -1.0, %v2283
        %v2396 = vsel %vm2364, -1.0, %v2284
        %v2397 = vsel %vm2365, -1.0, %v2285
        %v2398 = vsel %vm2366, -1.0, %v2286
        %v2399 = vsel %vm2367, -1.0, %v2287
        %v2400 = vsel %vm2368, -1.0, %v2288
        %v2401 = vsel %vm2369, -1.0, %v2289
        %v2402 = vsel %vm2370, -1.0, %v2290
        %v2403 = vsel %vm2371, -1.0, %v2291
        %v2404 = vsel %vm2372, -1.0, %v2292
        %v2405 = vsel %vm2373, -1.0, %v2293
        %v2406 = vsel %vm2374, -1.0, %v2294
        %v2407 = vsel %vm2375, -1.0, %v2295
        %v2408 = vsel %vm2376, -1.0, %v2296
        %v2409 = vsel %vm2377, -1.0, %v2297
        %v2410 = vsel %vm2378, -1.0, %v2298
        %v2411 = vsel %vm2379, -1.0, %v2299
        %v2412 = vsel %vm2380, -1.0, %v2300
        %v2413 = vsel %vm2381, -1.0, %v2301
        %v2414 = vsel %vm2382, -1.0, %v2302
        %v2415 = vsel %vm2383, -1.0, %v2303
        %v2416 = vsel %vm2384, -1.0, %v2304
        %v2417 = vsel %vm2385, -1.0, %v2305
        %v2418 = vsel %vm2386, -1.0, %v2306
        %v2419 = vsel %vm2387, -1.0, %v2307
        %v2420 = vsel %vm2388, -1.0, %v2308
        %v2421 = vmax.f32 %v2389, %v2390
        %2422 = vmax.xlane.f32.xlu0 %v2421
        %v2423 = vpop.xlane.xlu0 %2422
        %v2424 = vmax.f32 %v2391, %v2392
        %2425 = vmax.xlane.f32.xlu0 %v2424
        %v2426 = vpop.xlane.xlu0 %2425
        %v2427 = vmax.f32 %v2393, %v2394
        %2428 = vmax.xlane.f32.xlu0 %v2427
        %v2429 = vpop.xlane.xlu0 %2428
        %v2430 = vmax.f32 %v2395, %v2396
        %2431 = vmax.xlane.f32.xlu0 %v2430
        %v2432 = vpop.xlane.xlu0 %2431
        %v2433 = vmax.f32 %v2397, %v2398
        %2434 = vmax.xlane.f32.xlu0 %v2433
        %v2435 = vpop.xlane.xlu0 %2434
        %v2436 = vmax.f32 %v2399, %v2400
        %2437 = vmax.xlane.f32.xlu0 %v2436
        %v2438 = vpop.xlane.xlu0 %2437
        %v2439 = vmax.f32 %v2401, %v2402
        %2440 = vmax.xlane.f32.xlu0 %v2439
        %v2441 = vpop.xlane.xlu0 %2440
        %v2442 = vmax.f32 %v2403, %v2404
        %2443 = vmax.xlane.f32.xlu0 %v2442
        %v2444 = vpop.xlane.xlu0 %2443
        %v2445 = vmax.f32 %v2405, %v2406
        %2446 = vmax.xlane.f32.xlu0 %v2445
        %v2447 = vpop.xlane.xlu0 %2446
        %v2448 = vmax.f32 %v2407, %v2408
        %2449 = vmax.xlane.f32.xlu0 %v2448
        %v2450 = vpop.xlane.xlu0 %2449
        %v2451 = vmax.f32 %v2409, %v2410
        %2452 = vmax.xlane.f32.xlu0 %v2451
        %v2453 = vpop.xlane.xlu0 %2452
        %v2454 = vmax.f32 %v2411, %v2412
        %2455 = vmax.xlane.f32.xlu0 %v2454
        %v2456 = vpop.xlane.xlu0 %2455
        %v2457 = vmax.f32 %v2413, %v2414
        %2458 = vmax.xlane.f32.xlu0 %v2457
        %v2459 = vpop.xlane.xlu0 %2458
        %v2460 = vmax.f32 %v2415, %v2416
        %2461 = vmax.xlane.f32.xlu0 %v2460
        %v2462 = vpop.xlane.xlu0 %2461
        %v2463 = vmax.f32 %v2417, %v2418
        %2464 = vmax.xlane.f32.xlu0 %v2463
        %v2465 = vpop.xlane.xlu0 %2464
        %v2466 = vmax.f32 %v2419, %v2420
        %2467 = vmax.xlane.f32.xlu0 %v2466
        %v2468 = vpop.xlane.xlu0 %2467
        %vm2469 = vcmp.eq.f32.partialorder %v2389, %v2423
        %vm2470 = vcmp.eq.f32.partialorder %v2390, %v2423
        %vm2471 = vcmp.eq.f32.partialorder %v2391, %v2426
        %vm2472 = vcmp.eq.f32.partialorder %v2392, %v2426
        %vm2473 = vcmp.eq.f32.partialorder %v2393, %v2429
        %vm2474 = vcmp.eq.f32.partialorder %v2394, %v2429
        %vm2475 = vcmp.eq.f32.partialorder %v2395, %v2432
        %vm2476 = vcmp.eq.f32.partialorder %v2396, %v2432
        %vm2477 = vcmp.eq.f32.partialorder %v2397, %v2435
        %vm2478 = vcmp.eq.f32.partialorder %v2398, %v2435
        %vm2479 = vcmp.eq.f32.partialorder %v2399, %v2438
        %vm2480 = vcmp.eq.f32.partialorder %v2400, %v2438
        %vm2481 = vcmp.eq.f32.partialorder %v2401, %v2441
        %vm2482 = vcmp.eq.f32.partialorder %v2402, %v2441
        %vm2483 = vcmp.eq.f32.partialorder %v2403, %v2444
        %vm2484 = vcmp.eq.f32.partialorder %v2404, %v2444
        %vm2485 = vcmp.eq.f32.partialorder %v2405, %v2447
        %vm2486 = vcmp.eq.f32.partialorder %v2406, %v2447
        %vm2487 = vcmp.eq.f32.partialorder %v2407, %v2450
        %vm2488 = vcmp.eq.f32.partialorder %v2408, %v2450
        %vm2489 = vcmp.eq.f32.partialorder %v2409, %v2453
        %vm2490 = vcmp.eq.f32.partialorder %v2410, %v2453
        %vm2491 = vcmp.eq.f32.partialorder %v2411, %v2456
        %vm2492 = vcmp.eq.f32.partialorder %v2412, %v2456
        %vm2493 = vcmp.eq.f32.partialorder %v2413, %v2459
        %vm2494 = vcmp.eq.f32.partialorder %v2414, %v2459
        %vm2495 = vcmp.eq.f32.partialorder %v2415, %v2462
        %vm2496 = vcmp.eq.f32.partialorder %v2416, %v2462
        %vm2497 = vcmp.eq.f32.partialorder %v2417, %v2465
        %vm2498 = vcmp.eq.f32.partialorder %v2418, %v2465
        %vm2499 = vcmp.eq.f32.partialorder %v2419, %v2468
        %vm2500 = vcmp.eq.f32.partialorder %v2420, %v2468
        %v2501 = vsel %vm2469, -1.0, %v2389
        %v2502 = vsel %vm2470, -1.0, %v2390
        %v2503 = vsel %vm2471, -1.0, %v2391
        %v2504 = vsel %vm2472, -1.0, %v2392
        %v2505 = vsel %vm2473, -1.0, %v2393
        %v2506 = vsel %vm2474, -1.0, %v2394
        %v2507 = vsel %vm2475, -1.0, %v2395
        %v2508 = vsel %vm2476, -1.0, %v2396
        %v2509 = vsel %vm2477, -1.0, %v2397
        %v2510 = vsel %vm2478, -1.0, %v2398
        %v2511 = vsel %vm2479, -1.0, %v2399
        %v2512 = vsel %vm2480, -1.0, %v2400
        %v2513 = vsel %vm2481, -1.0, %v2401
        %v2514 = vsel %vm2482, -1.0, %v2402
        %v2515 = vsel %vm2483, -1.0, %v2403
        %v2516 = vsel %vm2484, -1.0, %v2404
        %v2517 = vsel %vm2485, -1.0, %v2405
        %v2518 = vsel %vm2486, -1.0, %v2406
        %v2519 = vsel %vm2487, -1.0, %v2407
        %v2520 = vsel %vm2488, -1.0, %v2408
        %v2521 = vsel %vm2489, -1.0, %v2409
        %v2522 = vsel %vm2490, -1.0, %v2410
        %v2523 = vsel %vm2491, -1.0, %v2411
        %v2524 = vsel %vm2492, -1.0, %v2412
        %v2525 = vsel %vm2493, -1.0, %v2413
        %v2526 = vsel %vm2494, -1.0, %v2414
        %v2527 = vsel %vm2495, -1.0, %v2415
        %v2528 = vsel %vm2496, -1.0, %v2416
        %v2529 = vsel %vm2497, -1.0, %v2417
        %v2530 = vsel %vm2498, -1.0, %v2418
        %v2531 = vsel %vm2499, -1.0, %v2419
        %v2532 = vsel %vm2500, -1.0, %v2420
        %v2533 = vmax.f32 %v2501, %v2502
        %2534 = vmax.xlane.f32.xlu0 %v2533
        %v2535 = vpop.xlane.xlu0 %2534
        %v2536 = vmax.f32 %v2503, %v2504
        %2537 = vmax.xlane.f32.xlu0 %v2536
        %v2538 = vpop.xlane.xlu0 %2537
        %v2539 = vmax.f32 %v2505, %v2506
        %2540 = vmax.xlane.f32.xlu0 %v2539
        %v2541 = vpop.xlane.xlu0 %2540
        %v2542 = vmax.f32 %v2507, %v2508
        %2543 = vmax.xlane.f32.xlu0 %v2542
        %v2544 = vpop.xlane.xlu0 %2543
        %v2545 = vmax.f32 %v2509, %v2510
        %2546 = vmax.xlane.f32.xlu0 %v2545
        %v2547 = vpop.xlane.xlu0 %2546
        %v2548 = vmax.f32 %v2511, %v2512
        %2549 = vmax.xlane.f32.xlu0 %v2548
        %v2550 = vpop.xlane.xlu0 %2549
        %v2551 = vmax.f32 %v2513, %v2514
        %2552 = vmax.xlane.f32.xlu0 %v2551
        %v2553 = vpop.xlane.xlu0 %2552
        %v2554 = vmax.f32 %v2515, %v2516
        %2555 = vmax.xlane.f32.xlu0 %v2554
        %v2556 = vpop.xlane.xlu0 %2555
        %v2557 = vmax.f32 %v2517, %v2518
        %2558 = vmax.xlane.f32.xlu0 %v2557
        %v2559 = vpop.xlane.xlu0 %2558
        %v2560 = vmax.f32 %v2519, %v2520
        %2561 = vmax.xlane.f32.xlu0 %v2560
        %v2562 = vpop.xlane.xlu0 %2561
        %v2563 = vmax.f32 %v2521, %v2522
        %2564 = vmax.xlane.f32.xlu0 %v2563
        %v2565 = vpop.xlane.xlu0 %2564
        %v2566 = vmax.f32 %v2523, %v2524
        %2567 = vmax.xlane.f32.xlu0 %v2566
        %v2568 = vpop.xlane.xlu0 %2567
        %v2569 = vmax.f32 %v2525, %v2526
        %2570 = vmax.xlane.f32.xlu0 %v2569
        %v2571 = vpop.xlane.xlu0 %2570
        %v2572 = vmax.f32 %v2527, %v2528
        %2573 = vmax.xlane.f32.xlu0 %v2572
        %v2574 = vpop.xlane.xlu0 %2573
        %v2575 = vmax.f32 %v2529, %v2530
        %2576 = vmax.xlane.f32.xlu0 %v2575
        %v2577 = vpop.xlane.xlu0 %2576
        %v2578 = vmax.f32 %v2531, %v2532
        %2579 = vmax.xlane.f32.xlu0 %v2578
        %v2580 = vpop.xlane.xlu0 %2579
        %vm2581 = vcmp.eq.f32.partialorder %v2501, %v2535
        %vm2582 = vcmp.eq.f32.partialorder %v2502, %v2535
        %vm2583 = vcmp.eq.f32.partialorder %v2503, %v2538
        %vm2584 = vcmp.eq.f32.partialorder %v2504, %v2538
        %vm2585 = vcmp.eq.f32.partialorder %v2505, %v2541
        %vm2586 = vcmp.eq.f32.partialorder %v2506, %v2541
        %vm2587 = vcmp.eq.f32.partialorder %v2507, %v2544
        %vm2588 = vcmp.eq.f32.partialorder %v2508, %v2544
        %vm2589 = vcmp.eq.f32.partialorder %v2509, %v2547
        %vm2590 = vcmp.eq.f32.partialorder %v2510, %v2547
        %vm2591 = vcmp.eq.f32.partialorder %v2511, %v2550
        %vm2592 = vcmp.eq.f32.partialorder %v2512, %v2550
        %vm2593 = vcmp.eq.f32.partialorder %v2513, %v2553
        %vm2594 = vcmp.eq.f32.partialorder %v2514, %v2553
        %vm2595 = vcmp.eq.f32.partialorder %v2515, %v2556
        %vm2596 = vcmp.eq.f32.partialorder %v2516, %v2556
        %vm2597 = vcmp.eq.f32.partialorder %v2517, %v2559
        %vm2598 = vcmp.eq.f32.partialorder %v2518, %v2559
        %vm2599 = vcmp.eq.f32.partialorder %v2519, %v2562
        %vm2600 = vcmp.eq.f32.partialorder %v2520, %v2562
        %vm2601 = vcmp.eq.f32.partialorder %v2521, %v2565
        %vm2602 = vcmp.eq.f32.partialorder %v2522, %v2565
        %vm2603 = vcmp.eq.f32.partialorder %v2523, %v2568
        %vm2604 = vcmp.eq.f32.partialorder %v2524, %v2568
        %vm2605 = vcmp.eq.f32.partialorder %v2525, %v2571
        %vm2606 = vcmp.eq.f32.partialorder %v2526, %v2571
        %vm2607 = vcmp.eq.f32.partialorder %v2527, %v2574
        %vm2608 = vcmp.eq.f32.partialorder %v2528, %v2574
        %vm2609 = vcmp.eq.f32.partialorder %v2529, %v2577
        %vm2610 = vcmp.eq.f32.partialorder %v2530, %v2577
        %vm2611 = vcmp.eq.f32.partialorder %v2531, %v2580
        %vm2612 = vcmp.eq.f32.partialorder %v2532, %v2580
        %v2613 = vsel %vm2581, -1.0, %v2501
        %v2614 = vsel %vm2582, -1.0, %v2502
        %v2615 = vsel %vm2583, -1.0, %v2503
        %v2616 = vsel %vm2584, -1.0, %v2504
        %v2617 = vsel %vm2585, -1.0, %v2505
        %v2618 = vsel %vm2586, -1.0, %v2506
        %v2619 = vsel %vm2587, -1.0, %v2507
        %v2620 = vsel %vm2588, -1.0, %v2508
        %v2621 = vsel %vm2589, -1.0, %v2509
        %v2622 = vsel %vm2590, -1.0, %v2510
        %v2623 = vsel %vm2591, -1.0, %v2511
        %v2624 = vsel %vm2592, -1.0, %v2512
        %v2625 = vsel %vm2593, -1.0, %v2513
        %v2626 = vsel %vm2594, -1.0, %v2514
        %v2627 = vsel %vm2595, -1.0, %v2515
        %v2628 = vsel %vm2596, -1.0, %v2516
        %v2629 = vsel %vm2597, -1.0, %v2517
        %v2630 = vsel %vm2598, -1.0, %v2518
        %v2631 = vsel %vm2599, -1.0, %v2519
        %v2632 = vsel %vm2600, -1.0, %v2520
        %v2633 = vsel %vm2601, -1.0, %v2521
        %v2634 = vsel %vm2602, -1.0, %v2522
        %v2635 = vsel %vm2603, -1.0, %v2523
        %v2636 = vsel %vm2604, -1.0, %v2524
        %v2637 = vsel %vm2605, -1.0, %v2525
        %v2638 = vsel %vm2606, -1.0, %v2526
        %v2639 = vsel %vm2607, -1.0, %v2527
        %v2640 = vsel %vm2608, -1.0, %v2528
        %v2641 = vsel %vm2609, -1.0, %v2529
        %v2642 = vsel %vm2610, -1.0, %v2530
        %v2643 = vsel %vm2611, -1.0, %v2531
        %v2644 = vsel %vm2612, -1.0, %v2532
        %vm2645 = vcmp.lt.f32.partialorder %v2613, 0.0
        %vm2646 = vcmp.lt.f32.partialorder %v2614, 0.0
        %vm2647 = vcmp.lt.f32.partialorder %v2615, 0.0
        %vm2648 = vcmp.lt.f32.partialorder %v2616, 0.0
        %vm2649 = vcmp.lt.f32.partialorder %v2617, 0.0
        %vm2650 = vcmp.lt.f32.partialorder %v2618, 0.0
        %vm2651 = vcmp.lt.f32.partialorder %v2619, 0.0
        %vm2652 = vcmp.lt.f32.partialorder %v2620, 0.0
        %vm2653 = vcmp.lt.f32.partialorder %v2621, 0.0
        %vm2654 = vcmp.lt.f32.partialorder %v2622, 0.0
        %vm2655 = vcmp.lt.f32.partialorder %v2623, 0.0
        %vm2656 = vcmp.lt.f32.partialorder %v2624, 0.0
        %vm2657 = vcmp.lt.f32.partialorder %v2625, 0.0
        %vm2658 = vcmp.lt.f32.partialorder %v2626, 0.0
        %vm2659 = vcmp.lt.f32.partialorder %v2627, 0.0
        %vm2660 = vcmp.lt.f32.partialorder %v2628, 0.0
        %vm2661 = vcmp.lt.f32.partialorder %v2629, 0.0
        %vm2662 = vcmp.lt.f32.partialorder %v2630, 0.0
        %vm2663 = vcmp.lt.f32.partialorder %v2631, 0.0
        %vm2664 = vcmp.lt.f32.partialorder %v2632, 0.0
        %vm2665 = vcmp.lt.f32.partialorder %v2633, 0.0
        %vm2666 = vcmp.lt.f32.partialorder %v2634, 0.0
        %vm2667 = vcmp.lt.f32.partialorder %v2635, 0.0
        %vm2668 = vcmp.lt.f32.partialorder %v2636, 0.0
        %vm2669 = vcmp.lt.f32.partialorder %v2637, 0.0
        %vm2670 = vcmp.lt.f32.partialorder %v2638, 0.0
        %vm2671 = vcmp.lt.f32.partialorder %v2639, 0.0
        %vm2672 = vcmp.lt.f32.partialorder %v2640, 0.0
        %vm2673 = vcmp.lt.f32.partialorder %v2641, 0.0
        %vm2674 = vcmp.lt.f32.partialorder %v2642, 0.0
        %vm2675 = vcmp.lt.f32.partialorder %v2643, 0.0
        %vm2676 = vcmp.lt.f32.partialorder %v2644, 0.0
        %v2677 = vsel %vm2645, %v821, 0.0
        %v2678 = vsel %vm2646, %v822, 0.0
        %v2679 = vsel %vm2647, %v823, 0.0
        %v2680 = vsel %vm2648, %v824, 0.0
        %v2681 = vsel %vm2649, %v825, 0.0
        %v2682 = vsel %vm2650, %v826, 0.0
        %v2683 = vsel %vm2651, %v827, 0.0
        %v2684 = vsel %vm2652, %v828, 0.0
        %v2685 = vsel %vm2653, %v829, 0.0
        %v2686 = vsel %vm2654, %v830, 0.0
        %v2687 = vsel %vm2655, %v831, 0.0
        %v2688 = vsel %vm2656, %v832, 0.0
        %v2689 = vsel %vm2657, %v833, 0.0
        %v2690 = vsel %vm2658, %v834, 0.0
        %v2691 = vsel %vm2659, %v835, 0.0
        %v2692 = vsel %vm2660, %v836, 0.0
        %v2693 = vsel %vm2661, %v837, 0.0
        %v2694 = vsel %vm2662, %v838, 0.0
        %v2695 = vsel %vm2663, %v839, 0.0
        %v2696 = vsel %vm2664, %v840, 0.0
        %v2697 = vsel %vm2665, %v841, 0.0
        %v2698 = vsel %vm2666, %v842, 0.0
        %v2699 = vsel %vm2667, %v843, 0.0
        %v2700 = vsel %vm2668, %v844, 0.0
        %v2701 = vsel %vm2669, %v845, 0.0
        %v2702 = vsel %vm2670, %v846, 0.0
        %v2703 = vsel %vm2671, %v847, 0.0
        %v2704 = vsel %vm2672, %v848, 0.0
        %v2705 = vsel %vm2673, %v849, 0.0
        %v2706 = vsel %vm2674, %v850, 0.0
        %v2707 = vsel %vm2675, %v851, 0.0
        %v2708 = vsel %vm2676, %v852, 0.0
        %2709 = vst [vmem:[%s572] sm:$0xff] %v2677
        %2710 = vst [vmem:[%s572 + $0x8] sm:$0xff] %v2678
        %2711 = vst [vmem:[%s572 + $0x10] sm:$0xff] %v2679
        %2712 = vst [vmem:[%s572 + $0x18] sm:$0xff] %v2680
        %2713 = vst [vmem:[%s572 + $0x20] sm:$0xff] %v2681
        %2714 = vst [vmem:[%s572 + $0x28] sm:$0xff] %v2682
        %2715 = vst [vmem:[%s572 + $0x30] sm:$0xff] %v2683
        %2716 = vst [vmem:[%s572 + $0x38] sm:$0xff] %v2684
        %2717 = vst [vmem:[%s572 + $0x40] sm:$0xff] %v2685
        %2718 = vst [vmem:[%s572 + $0x48] sm:$0xff] %v2686
        %2719 = vst [vmem:[%s572 + $0x50] sm:$0xff] %v2687
        %2720 = vst [vmem:[%s572 + $0x58] sm:$0xff] %v2688
        %2721 = vst [vmem:[%s572 + $0x60] sm:$0xff] %v2689
        %2722 = vst [vmem:[%s572 + $0x68] sm:$0xff] %v2690
        %2723 = vst [vmem:[%s572 + $0x70] sm:$0xff] %v2691
        %2724 = vst [vmem:[%s572 + $0x78] sm:$0xff] %v2692
        %2725 = vst [vmem:[%s572 + $0x80] sm:$0xff] %v2693
        %2726 = vst [vmem:[%s572 + $0x88] sm:$0xff] %v2694
        %2727 = vst [vmem:[%s572 + $0x90] sm:$0xff] %v2695
        %2728 = vst [vmem:[%s572 + $0x98] sm:$0xff] %v2696
        %2729 = vst [vmem:[%s572 + $0xa0] sm:$0xff] %v2697
        %2730 = vst [vmem:[%s572 + $0xa8] sm:$0xff] %v2698
        %2731 = vst [vmem:[%s572 + $0xb0] sm:$0xff] %v2699
        %2732 = vst [vmem:[%s572 + $0xb8] sm:$0xff] %v2700
        %2733 = vst [vmem:[%s572 + $0xc0] sm:$0xff] %v2701
        %2734 = vst [vmem:[%s572 + $0xc8] sm:$0xff] %v2702
        %2735 = vst [vmem:[%s572 + $0xd0] sm:$0xff] %v2703
        %2736 = vst [vmem:[%s572 + $0xd8] sm:$0xff] %v2704
        %2737 = vst [vmem:[%s572 + $0xe0] sm:$0xff] %v2705
        %2738 = vst [vmem:[%s572 + $0xe8] sm:$0xff] %v2706
        %2739 = vst [vmem:[%s572 + $0xf0] sm:$0xff] %v2707
        %2740 = vst [vmem:[%s572 + $0xf8] sm:$0xff] %v2708
        %v2741 = vld [vmem:[#allocation7] sm:$0xff]
        %v2742 = vld [vmem:[#allocation7 + $0x8] sm:$0xff]
        %v2743 = vld [vmem:[#allocation7 + $0x10] sm:$0xff]
        %v2744 = vld [vmem:[#allocation7 + $0x18] sm:$0xff]
        %v2745 = vld [vmem:[#allocation7 + $0x20] sm:$0xff]
        %v2746 = vld [vmem:[#allocation7 + $0x28] sm:$0xff]
        %v2747 = vld [vmem:[#allocation7 + $0x30] sm:$0xff]
        %v2748 = vld [vmem:[#allocation7 + $0x38] sm:$0xff]
        %v2749 = vld [vmem:[#allocation7 + $0x40] sm:$0xff]
        %v2750 = vld [vmem:[#allocation7 + $0x48] sm:$0xff]
        %v2751 = vld [vmem:[#allocation7 + $0x50] sm:$0xff]
        %v2752 = vld [vmem:[#allocation7 + $0x58] sm:$0xff]
        %v2753 = vld [vmem:[#allocation7 + $0x60] sm:$0xff]
        %v2754 = vld [vmem:[#allocation7 + $0x68] sm:$0xff]
        %v2755 = vld [vmem:[#allocation7 + $0x70] sm:$0xff]
        %v2756 = vld [vmem:[#allocation7 + $0x78] sm:$0xff]
        %v2757 = vld [vmem:[#allocation7 + $0x80] sm:$0xff]
        %v2758 = vld [vmem:[#allocation7 + $0x88] sm:$0xff]
        %v2759 = vld [vmem:[#allocation7 + $0x90] sm:$0xff]
        %v2760 = vld [vmem:[#allocation7 + $0x98] sm:$0xff]
        %v2761 = vld [vmem:[#allocation7 + $0xa0] sm:$0xff]
        %v2762 = vld [vmem:[#allocation7 + $0xa8] sm:$0xff]
        %v2763 = vld [vmem:[#allocation7 + $0xb0] sm:$0xff]
        %v2764 = vld [vmem:[#allocation7 + $0xb8] sm:$0xff]
        %v2765 = vld [vmem:[#allocation7 + $0xc0] sm:$0xff]
        %v2766 = vld [vmem:[#allocation7 + $0xc8] sm:$0xff]
        %v2767 = vld [vmem:[#allocation7 + $0xd0] sm:$0xff]
        %v2768 = vld [vmem:[#allocation7 + $0xd8] sm:$0xff]
        %v2769 = vld [vmem:[#allocation7 + $0xe0] sm:$0xff]
        %v2770 = vld [vmem:[#allocation7 + $0xe8] sm:$0xff]
        %v2771 = vld [vmem:[#allocation7 + $0xf0] sm:$0xff]
        %v2772 = vld [vmem:[#allocation7 + $0xf8] sm:$0xff]
        %v2773 = vld [vmem:[#allocation7 + $0x100] sm:$0xff]
        %v2774 = vld [vmem:[#allocation7 + $0x108] sm:$0xff]
        %v2775 = vld [vmem:[#allocation7 + $0x110] sm:$0xff]
        %v2776 = vld [vmem:[#allocation7 + $0x118] sm:$0xff]
        %v2777 = vld [vmem:[#allocation7 + $0x120] sm:$0xff]
        %v2778 = vld [vmem:[#allocation7 + $0x128] sm:$0xff]
        %v2779 = vld [vmem:[#allocation7 + $0x130] sm:$0xff]
        %v2780 = vld [vmem:[#allocation7 + $0x138] sm:$0xff]
        %v2781 = vld [vmem:[#allocation7 + $0x140] sm:$0xff]
        %v2782 = vld [vmem:[#allocation7 + $0x148] sm:$0xff]
        %v2783 = vld [vmem:[#allocation7 + $0x150] sm:$0xff]
        %v2784 = vld [vmem:[#allocation7 + $0x158] sm:$0xff]
        %v2785 = vld [vmem:[#allocation7 + $0x160] sm:$0xff]
        %v2786 = vld [vmem:[#allocation7 + $0x168] sm:$0xff]
        %v2787 = vld [vmem:[#allocation7 + $0x170] sm:$0xff]
        %v2788 = vld [vmem:[#allocation7 + $0x178] sm:$0xff]
        %v2789 = vld [vmem:[#allocation7 + $0x180] sm:$0xff]
        %v2790 = vld [vmem:[#allocation7 + $0x188] sm:$0xff]
        %v2791 = vld [vmem:[#allocation7 + $0x190] sm:$0xff]
        %v2792 = vld [vmem:[#allocation7 + $0x198] sm:$0xff]
        %v2793 = vld [vmem:[#allocation7 + $0x1a0] sm:$0xff]
        %v2794 = vld [vmem:[#allocation7 + $0x1a8] sm:$0xff]
        %v2795 = vld [vmem:[#allocation7 + $0x1b0] sm:$0xff]
        %v2796 = vld [vmem:[#allocation7 + $0x1b8] sm:$0xff]
        %v2797 = vld [vmem:[#allocation7 + $0x1c0] sm:$0xff]
        %v2798 = vld [vmem:[#allocation7 + $0x1c8] sm:$0xff]
        %v2799 = vld [vmem:[#allocation7 + $0x1d0] sm:$0xff]
        %v2800 = vld [vmem:[#allocation7 + $0x1d8] sm:$0xff]
        %v2801 = vld [vmem:[#allocation7 + $0x1e0] sm:$0xff]
        %v2802 = vld [vmem:[#allocation7 + $0x1e8] sm:$0xff]
        %v2803 = vld [vmem:[#allocation7 + $0x1f0] sm:$0xff]
        %v2804 = vld [vmem:[#allocation7 + $0x1f8] sm:$0xff]
        %v2805 = vld [vmem:[#allocation7 + $0x200] sm:$0xff]
        %v2806 = vld [vmem:[#allocation7 + $0x208] sm:$0xff]
        %v2807 = vld [vmem:[#allocation7 + $0x210] sm:$0xff]
        %v2808 = vld [vmem:[#allocation7 + $0x218] sm:$0xff]
        %v2809 = vld [vmem:[#allocation7 + $0x220] sm:$0xff]
        %v2810 = vld [vmem:[#allocation7 + $0x228] sm:$0xff]
        %v2811 = vld [vmem:[#allocation7 + $0x230] sm:$0xff]
        %v2812 = vld [vmem:[#allocation7 + $0x238] sm:$0xff]
        %v2813 = vld [vmem:[#allocation7 + $0x240] sm:$0xff]
        %v2814 = vld [vmem:[#allocation7 + $0x248] sm:$0xff]
        %v2815 = vld [vmem:[#allocation7 + $0x250] sm:$0xff]
        %v2816 = vld [vmem:[#allocation7 + $0x258] sm:$0xff]
        %v2817 = vld [vmem:[#allocation7 + $0x260] sm:$0xff]
        %v2818 = vld [vmem:[#allocation7 + $0x268] sm:$0xff]
        %v2819 = vld [vmem:[#allocation7 + $0x270] sm:$0xff]
        %v2820 = vld [vmem:[#allocation7 + $0x278] sm:$0xff]
        %v2821 = vld [vmem:[#allocation7 + $0x280] sm:$0xff]
        %v2822 = vld [vmem:[#allocation7 + $0x288] sm:$0xff]
        %v2823 = vld [vmem:[#allocation7 + $0x290] sm:$0xff]
        %v2824 = vld [vmem:[#allocation7 + $0x298] sm:$0xff]
        %v2825 = vld [vmem:[#allocation7 + $0x2a0] sm:$0xff]
        %v2826 = vld [vmem:[#allocation7 + $0x2a8] sm:$0xff]
        %v2827 = vld [vmem:[#allocation7 + $0x2b0] sm:$0xff]
        %v2828 = vld [vmem:[#allocation7 + $0x2b8] sm:$0xff]
        %v2829 = vld [vmem:[#allocation7 + $0x2c0] sm:$0xff]
        %v2830 = vld [vmem:[#allocation7 + $0x2c8] sm:$0xff]
        %v2831 = vld [vmem:[#allocation7 + $0x2d0] sm:$0xff]
        %v2832 = vld [vmem:[#allocation7 + $0x2d8] sm:$0xff]
        %v2833 = vld [vmem:[#allocation7 + $0x2e0] sm:$0xff]
        %v2834 = vld [vmem:[#allocation7 + $0x2e8] sm:$0xff]
        %v2835 = vld [vmem:[#allocation7 + $0x2f0] sm:$0xff]
        %v2836 = vld [vmem:[#allocation7 + $0x2f8] sm:$0xff]
        %2837 = vmatprep.subr.mxu0 %v2742
        %2838 = vmatpush1.msra.mxu0 %v2741
        %2839 = vmatprep.subr.mxu0 %v2745
        %2840 = vmatpush1.msra.mxu0 %v2744
        %2841 = vmatprep.subr.mxu0 %v2748
        %2842 = vmatpush1.msra.mxu0 %v2747
        %2843 = vmatprep.subr.mxu0 %v2751
        %2844 = vmatpush1.msra.mxu0 %v2750
        %2845 = vmatprep.subr.mxu0 %v2754
        %2846 = vmatpush1.msra.mxu0 %v2753
        %2847 = vmatprep.subr.mxu0 %v2757
        %2848 = vmatpush1.msra.mxu0 %v2756
        %2849 = vmatprep.subr.mxu0 %v2760
        %2850 = vmatpush1.msra.mxu0 %v2759
        %2851 = vmatprep.subr.mxu0 %v2763
        %2852 = vmatpush1.msra.mxu0 %v2762
        %2853 = vmatprep.subr.mxu0 %v2766
        %2854 = vmatpush1.msra.mxu0 %v2765
        %2855 = vmatprep.subr.mxu0 %v2769
        %2856 = vmatpush1.msra.mxu0 %v2768
        %2857 = vmatprep.subr.mxu0 %v2772
        %2858 = vmatpush1.msra.mxu0 %v2771
        %2859 = vmatprep.subr.mxu0 %v2775
        %2860 = vmatpush1.msra.mxu0 %v2774
        %2861 = vmatprep.subr.mxu0 %v2778
        %2862 = vmatpush1.msra.mxu0 %v2777
        %2863 = vmatprep.subr.mxu0 %v2781
        %2864 = vmatpush1.msra.mxu0 %v2780
        %2865 = vmatprep.subr.mxu0 %v2784
        %2866 = vmatpush1.msra.mxu0 %v2783
        %2867 = vmatprep.subr.mxu0 %v2787
        %2868 = vmatpush1.msra.mxu0 %v2786
        %2869 = vmatprep.subr.mxu0 %v2790
        %2870 = vmatpush1.msra.mxu0 %v2789
        %2871 = vmatprep.subr.mxu0 %v2793
        %2872 = vmatpush1.msra.mxu0 %v2792
        %2873 = vmatprep.subr.mxu0 %v2796
        %2874 = vmatpush1.msra.mxu0 %v2795
        %2875 = vmatprep.subr.mxu0 %v2799
        %2876 = vmatpush1.msra.mxu0 %v2798
        %2877 = vmatprep.subr.mxu0 %v2802
        %2878 = vmatpush1.msra.mxu0 %v2801
        %2879 = vmatprep.subr.mxu0 %v2805
        %2880 = vmatpush1.msra.mxu0 %v2804
        %2881 = vmatprep.subr.mxu0 %v2808
        %2882 = vmatpush1.msra.mxu0 %v2807
        %2883 = vmatprep.subr.mxu0 %v2811
        %2884 = vmatpush1.msra.mxu0 %v2810
        %2885 = vmatprep.subr.mxu0 %v2814
        %2886 = vmatpush1.msra.mxu0 %v2813
        %2887 = vmatprep.subr.mxu0 %v2817
        %2888 = vmatpush1.msra.mxu0 %v2816
        %2889 = vmatprep.subr.mxu0 %v2820
        %2890 = vmatpush1.msra.mxu0 %v2819
        %2891 = vmatprep.subr.mxu0 %v2823
        %2892 = vmatpush1.msra.mxu0 %v2822
        %2893 = vmatprep.subr.mxu0 %v2826
        %2894 = vmatpush1.msra.mxu0 %v2825
        %2895 = vmatprep.subr.mxu0 %v2829
        %2896 = vmatpush1.msra.mxu0 %v2828
        %2897 = vmatprep.subr.mxu0 %v2832
        %2898 = vmatpush1.msra.mxu0 %v2831
        %2899 = vmatprep.subr.mxu0 %v2835
        %2900 = vmatpush1.msra.mxu0 %v2834
        %2901 = vmatprep.mubr.f32.mxu0 %v2678
        %2902 = vmatmul.mubr.f32.gmra.mrb[0].mxu0 %v2677
        %v2903 = vpop.f32.mrb[0].mxu0
        %v2904 = vadd.f32 0.0, %v2903
        %v2905 = vpop.f32.mrb[0].mxu0
        %v2906 = vadd.f32 0.0, %v2905
        %2907 = vmatprep.mubr.f32.mxu0 %v2680
        %2908 = vmatmul.mubr.f32.gmra.mrb[0].mxu0 %v2679
        %v2909 = vpop.f32.mrb[0].mxu0
        %v2910 = vadd.f32 0.0, %v2909
        %v2911 = vpop.f32.mrb[0].mxu0
        %v2912 = vadd.f32 0.0, %v2911
        %2913 = vmatprep.mubr.f32.mxu0 %v2682
        %2914 = vmatmul.mubr.f32.gmra.mrb[0].mxu0 %v2681
        %v2915 = vpop.f32.mrb[0].mxu0
        %v2916 = vadd.f32 0.0, %v2915
        %v2917 = vpop.f32.mrb[0].mxu0
        %v2918 = vadd.f32 0.0, %v2917
        %2919 = vmatprep.mubr.f32.mxu0 %v2684
        %2920 = vmatmul.mubr.f32.gmra.mrb[0].mxu0 %v2683
        %v2921 = vpop.f32.mrb[0].mxu0
        %v2922 = vadd.f32 0.0, %v2921
        %v2923 = vpop.f32.mrb[0].mxu0
        %v2924 = vadd.f32 0.0, %v2923
        %2925 = vmatprep.mubr.f32.mxu0 %v2686
        %2926 = vmatmul.mubr.f32.gmra.mrb[0].mxu0 %v2685
        %v2927 = vpop.f32.mrb[0].mxu0
        %v2928 = vadd.f32 0.0, %v2927
        %v2929 = vpop.f32.mrb[0].mxu0
        %v2930 = vadd.f32 0.0, %v2929
        %2931 = vmatprep.mubr.f32.mxu0 %v2688
        %2932 = vmatmul.mubr.f32.gmra.mrb[0].mxu0 %v2687
        %v2933 = vpop.f32.mrb[0].mxu0
        %v2934 = vadd.f32 0.0, %v2933
        %v2935 = vpop.f32.mrb[0].mxu0
        %v2936 = vadd.f32 0.0, %v2935
        %2937 = vmatprep.mubr.f32.mxu0 %v2690
        %2938 = vmatmul.mubr.f32.gmra.mrb[0].mxu0 %v2689
        %v2939 = vpop.f32.mrb[0].mxu0
        %v2940 = vadd.f32 0.0, %v2939
        %v2941 = vpop.f32.mrb[0].mxu0
        %v2942 = vadd.f32 0.0, %v2941
        %2943 = vmatprep.mubr.f32.mxu0 %v2692
        %2944 = vmatmul.mubr.f32.gmra.mrb[0].mxu0 %v2691
        %v2945 = vpop.f32.mrb[0].mxu0
        %v2946 = vadd.f32 0.0, %v2945
        %v2947 = vpop.f32.mrb[0].mxu0
        %v2948 = vadd.f32 0.0, %v2947
        %2949 = vmatprep.mubr.f32.mxu0 %v2694
        %2950 = vmatmul.mubr.f32.gmra.mrb[0].mxu0 %v2693
        %v2951 = vpop.f32.mrb[0].mxu0
        %v2952 = vadd.f32 0.0, %v2951
        %v2953 = vpop.f32.mrb[0].mxu0
        %v2954 = vadd.f32 0.0, %v2953
        %2955 = vmatprep.mubr.f32.mxu0 %v2696
        %2956 = vmatmul.mubr.f32.gmra.mrb[0].mxu0 %v2695
        %v2957 = vpop.f32.mrb[0].mxu0
        %v2958 = vadd.f32 0.0, %v2957
        %v2959 = vpop.f32.mrb[0].mxu0
        %v2960 = vadd.f32 0.0, %v2959
        %2961 = vmatprep.mubr.f32.mxu0 %v2698
        %2962 = vmatmul.mubr.f32.gmra.mrb[0].mxu0 %v2697
        %v2963 = vpop.f32.mrb[0].mxu0
        %v2964 = vadd.f32 0.0, %v2963
        %v2965 = vpop.f32.mrb[0].mxu0
        %v2966 = vadd.f32 0.0, %v2965
        %2967 = vmatprep.mubr.f32.mxu0 %v2700
        %2968 = vmatmul.mubr.f32.gmra.mrb[0].mxu0 %v2699
        %v2969 = vpop.f32.mrb[0].mxu0
        %v2970 = vadd.f32 0.0, %v2969
        %v2971 = vpop.f32.mrb[0].mxu0
        %v2972 = vadd.f32 0.0, %v2971
        %2973 = vmatprep.mubr.f32.mxu0 %v2702
        %2974 = vmatmul.mubr.f32.gmra.mrb[0].mxu0 %v2701
        %v2975 = vpop.f32.mrb[0].mxu0
        %v2976 = vadd.f32 0.0, %v2975
        %v2977 = vpop.f32.mrb[0].mxu0
        %v2978 = vadd.f32 0.0, %v2977
        %2979 = vmatprep.mubr.f32.mxu0 %v2704
        %2980 = vmatmul.mubr.f32.gmra.mrb[0].mxu0 %v2703
        %v2981 = vpop.f32.mrb[0].mxu0
        %v2982 = vadd.f32 0.0, %v2981
        %v2983 = vpop.f32.mrb[0].mxu0
        %v2984 = vadd.f32 0.0, %v2983
        %2985 = vmatprep.mubr.f32.mxu0 %v2706
        %2986 = vmatmul.mubr.f32.gmra.mrb[0].mxu0 %v2705
        %v2987 = vpop.f32.mrb[0].mxu0
        %v2988 = vadd.f32 0.0, %v2987
        %v2989 = vpop.f32.mrb[0].mxu0
        %v2990 = vadd.f32 0.0, %v2989
        %2991 = vmatprep.mubr.f32.mxu0 %v2708
        %2992 = vmatmul.mubr.f32.gmra.mrb[0].mxu0 %v2707
        %v2993 = vpop.f32.mrb[0].mxu0
        %v2994 = vadd.f32 0.0, %v2993
        %v2995 = vpop.f32.mrb[0].mxu0
        %v2996 = vadd.f32 0.0, %v2995
        %2997 = vdwg.mxu0
        %2998 = vmatprep.subr.mxu0 0.0
        %2999 = vmatpush1.msra.mxu0 %v2743
        %3000 = vmatprep.subr.mxu0 0.0
        %3001 = vmatpush1.msra.mxu0 %v2746
        %3002 = vmatprep.subr.mxu0 0.0
        %3003 = vmatpush1.msra.mxu0 %v2749
        %3004 = vmatprep.subr.mxu0 0.0
        %3005 = vmatpush1.msra.mxu0 %v2752
        %3006 = vmatprep.subr.mxu0 0.0
        %3007 = vmatpush1.msra.mxu0 %v2755
        %3008 = vmatprep.subr.mxu0 0.0
        %3009 = vmatpush1.msra.mxu0 %v2758
        %3010 = vmatprep.subr.mxu0 0.0
        %3011 = vmatpush1.msra.mxu0 %v2761
        %3012 = vmatprep.subr.mxu0 0.0
        %3013 = vmatpush1.msra.mxu0 %v2764
        %3014 = vmatprep.subr.mxu0 0.0
        %3015 = vmatpush1.msra.mxu0 %v2767
        %3016 = vmatprep.subr.mxu0 0.0
        %3017 = vmatpush1.msra.mxu0 %v2770
        %3018 = vmatprep.subr.mxu0 0.0
        %3019 = vmatpush1.msra.mxu0 %v2773
        %3020 = vmatprep.subr.mxu0 0.0
        %3021 = vmatpush1.msra.mxu0 %v2776
        %3022 = vmatprep.subr.mxu0 0.0
        %3023 = vmatpush1.msra.mxu0 %v2779
        %3024 = vmatprep.subr.mxu0 0.0
        %3025 = vmatpush1.msra.mxu0 %v2782
        %3026 = vmatprep.subr.mxu0 0.0
        %3027 = vmatpush1.msra.mxu0 %v2785
        %3028 = vmatprep.subr.mxu0 0.0
        %3029 = vmatpush1.msra.mxu0 %v2788
        %3030 = vmatprep.subr.mxu0 0.0
        %3031 = vmatpush1.msra.mxu0 %v2791
        %3032 = vmatprep.subr.mxu0 0.0
        %3033 = vmatpush1.msra.mxu0 %v2794
        %3034 = vmatprep.subr.mxu0 0.0
        %3035 = vmatpush1.msra.mxu0 %v2797
        %3036 = vmatprep.subr.mxu0 0.0
        %3037 = vmatpush1.msra.mxu0 %v2800
        %3038 = vmatprep.subr.mxu0 0.0
        %3039 = vmatpush1.msra.mxu0 %v2803
        %3040 = vmatprep.subr.mxu0 0.0
        %3041 = vmatpush1.msra.mxu0 %v2806
        %3042 = vmatprep.subr.mxu0 0.0
        %3043 = vmatpush1.msra.mxu0 %v2809
        %3044 = vmatprep.subr.mxu0 0.0
        %3045 = vmatpush1.msra.mxu0 %v2812
        %3046 = vmatprep.subr.mxu0 0.0
        %3047 = vmatpush1.msra.mxu0 %v2815
        %3048 = vmatprep.subr.mxu0 0.0
        %3049 = vmatpush1.msra.mxu0 %v2818
        %3050 = vmatprep.subr.mxu0 0.0
        %3051 = vmatpush1.msra.mxu0 %v2821
        %3052 = vmatprep.subr.mxu0 0.0
        %3053 = vmatpush1.msra.mxu0 %v2824
        %3054 = vmatprep.subr.mxu0 0.0
        %3055 = vmatpush1.msra.mxu0 %v2827
        %3056 = vmatprep.subr.mxu0 0.0
        %3057 = vmatpush1.msra.mxu0 %v2830
        %3058 = vmatprep.subr.mxu0 0.0
        %3059 = vmatpush1.msra.mxu0 %v2833
        %3060 = vmatprep.subr.mxu0 0.0
        %3061 = vmatpush1.msra.mxu0 %v2836
        %3062 = vmatprep.mubr.f32.mxu0 %v2678
        %3063 = vmatmul.mubr.f32.gmra.mrb[0].mxu0 %v2677
        %v3064 = vpop.f32.mrb[0].mxu0
        %v3065 = vadd.f32 0.0, %v3064
        %v3066 = vpop.f32.mrb[0].mxu0
        %3067 = vmatprep.mubr.f32.mxu0 %v2680
        %3068 = vmatmul.mubr.f32.gmra.mrb[0].mxu0 %v2679
        %v3069 = vpop.f32.mrb[0].mxu0
        %v3070 = vadd.f32 0.0, %v3069
        %v3071 = vpop.f32.mrb[0].mxu0
        %3072 = vmatprep.mubr.f32.mxu0 %v2682
        %3073 = vmatmul.mubr.f32.gmra.mrb[0].mxu0 %v2681
        %v3074 = vpop.f32.mrb[0].mxu0
        %v3075 = vadd.f32 0.0, %v3074
        %v3076 = vpop.f32.mrb[0].mxu0
        %3077 = vmatprep.mubr.f32.mxu0 %v2684
        %3078 = vmatmul.mubr.f32.gmra.mrb[0].mxu0 %v2683
        %v3079 = vpop.f32.mrb[0].mxu0
        %v3080 = vadd.f32 0.0, %v3079
        %v3081 = vpop.f32.mrb[0].mxu0
        %3082 = vmatprep.mubr.f32.mxu0 %v2686
        %3083 = vmatmul.mubr.f32.gmra.mrb[0].mxu0 %v2685
        %v3084 = vpop.f32.mrb[0].mxu0
        %v3085 = vadd.f32 0.0, %v3084
        %v3086 = vpop.f32.mrb[0].mxu0
        %3087 = vmatprep.mubr.f32.mxu0 %v2688
        %3088 = vmatmul.mubr.f32.gmra.mrb[0].mxu0 %v2687
        %v3089 = vpop.f32.mrb[0].mxu0
        %v3090 = vadd.f32 0.0, %v3089
        %v3091 = vpop.f32.mrb[0].mxu0
        %3092 = vmatprep.mubr.f32.mxu0 %v2690
        %3093 = vmatmul.mubr.f32.gmra.mrb[0].mxu0 %v2689
        %v3094 = vpop.f32.mrb[0].mxu0
        %v3095 = vadd.f32 0.0, %v3094
        %v3096 = vpop.f32.mrb[0].mxu0
        %3097 = vmatprep.mubr.f32.mxu0 %v2692
        %3098 = vmatmul.mubr.f32.gmra.mrb[0].mxu0 %v2691
        %v3099 = vpop.f32.mrb[0].mxu0
        %v3100 = vadd.f32 0.0, %v3099
        %v3101 = vpop.f32.mrb[0].mxu0
        %3102 = vmatprep.mubr.f32.mxu0 %v2694
        %3103 = vmatmul.mubr.f32.gmra.mrb[0].mxu0 %v2693
        %v3104 = vpop.f32.mrb[0].mxu0
        %v3105 = vadd.f32 0.0, %v3104
        %v3106 = vpop.f32.mrb[0].mxu0
        %3107 = vmatprep.mubr.f32.mxu0 %v2696
        %3108 = vmatmul.mubr.f32.gmra.mrb[0].mxu0 %v2695
        %v3109 = vpop.f32.mrb[0].mxu0
        %v3110 = vadd.f32 0.0, %v3109
        %v3111 = vpop.f32.mrb[0].mxu0
        %3112 = vmatprep.mubr.f32.mxu0 %v2698
        %3113 = vmatmul.mubr.f32.gmra.mrb[0].mxu0 %v2697
        %v3114 = vpop.f32.mrb[0].mxu0
        %v3115 = vadd.f32 0.0, %v3114
        %v3116 = vpop.f32.mrb[0].mxu0
        %3117 = vmatprep.mubr.f32.mxu0 %v2700
        %3118 = vmatmul.mubr.f32.gmra.mrb[0].mxu0 %v2699
        %v3119 = vpop.f32.mrb[0].mxu0
        %v3120 = vadd.f32 0.0, %v3119
        %v3121 = vpop.f32.mrb[0].mxu0
        %3122 = vmatprep.mubr.f32.mxu0 %v2702
        %3123 = vmatmul.mubr.f32.gmra.mrb[0].mxu0 %v2701
        %v3124 = vpop.f32.mrb[0].mxu0
        %v3125 = vadd.f32 0.0, %v3124
        %v3126 = vpop.f32.mrb[0].mxu0
        %3127 = vmatprep.mubr.f32.mxu0 %v2704
        %3128 = vmatmul.mubr.f32.gmra.mrb[0].mxu0 %v2703
        %v3129 = vpop.f32.mrb[0].mxu0
        %v3130 = vadd.f32 0.0, %v3129
        %v3131 = vpop.f32.mrb[0].mxu0
        %3132 = vmatprep.mubr.f32.mxu0 %v2706
        %3133 = vmatmul.mubr.f32.gmra.mrb[0].mxu0 %v2705
        %v3134 = vpop.f32.mrb[0].mxu0
        %v3135 = vadd.f32 0.0, %v3134
        %v3136 = vpop.f32.mrb[0].mxu0
        %3137 = vmatprep.mubr.f32.mxu0 %v2708
        %3138 = vmatmul.mubr.f32.gmra.mrb[0].mxu0 %v2707
        %v3139 = vpop.f32.mrb[0].mxu0
        %v3140 = vadd.f32 0.0, %v3139
        %v3141 = vpop.f32.mrb[0].mxu0
        %3142 = vdwg.mxu0
        %v3143 = vld [vmem:[%s5] sm:$0x1]
        %v3145 = vlaneseq
        %v3146 = vshrl.u32 %v3145, 7
        %v3147 = vsub.s32 0, %v3146
        %v3148 = vrot.slane %v3143, %v3147
        %v3150 = vadd.f32 %v2906, %v3148
        %v3151 = vadd.f32 %v2912, %v3148
        %v3152 = vadd.f32 %v2918, %v3148
        %v3153 = vadd.f32 %v2924, %v3148
        %v3154 = vadd.f32 %v2930, %v3148
        %v3155 = vadd.f32 %v2936, %v3148
        %v3156 = vadd.f32 %v2942, %v3148
        %v3157 = vadd.f32 %v2948, %v3148
        %v3158 = vadd.f32 %v2954, %v3148
        %v3159 = vadd.f32 %v2960, %v3148
        %v3160 = vadd.f32 %v2966, %v3148
        %v3161 = vadd.f32 %v2972, %v3148
        %v3162 = vadd.f32 %v2978, %v3148
        %v3163 = vadd.f32 %v2984, %v3148
        %v3164 = vadd.f32 %v2990, %v3148
        %v3165 = vadd.f32 %v2996, %v3148
        %3166 = vst [vmem:[%s579] sm:$0xff] %v2904
        %3167 = vst [vmem:[%s579 + $0x8] sm:$0xff] %v2910
        %3168 = vst [vmem:[%s579 + $0x10] sm:$0xff] %v2916
        %3169 = vst [vmem:[%s579 + $0x18] sm:$0xff] %v2922
        %3170 = vst [vmem:[%s579 + $0x20] sm:$0xff] %v2928
        %3171 = vst [vmem:[%s579 + $0x28] sm:$0xff] %v2934
        %3172 = vst [vmem:[%s579 + $0x30] sm:$0xff] %v2940
        %3173 = vst [vmem:[%s579 + $0x38] sm:$0xff] %v2946
        %3174 = vst [vmem:[%s579 + $0x40] sm:$0xff] %v2952
        %3175 = vst [vmem:[%s579 + $0x48] sm:$0xff] %v2958
        %3176 = vst [vmem:[%s579 + $0x50] sm:$0xff] %v2964
        %3177 = vst [vmem:[%s579 + $0x58] sm:$0xff] %v2970
        %3178 = vst [vmem:[%s579 + $0x60] sm:$0xff] %v2976
        %3179 = vst [vmem:[%s579 + $0x68] sm:$0xff] %v2982
        %3180 = vst [vmem:[%s579 + $0x70] sm:$0xff] %v2988
        %3181 = vst [vmem:[%s579 + $0x78] sm:$0xff] %v2994
        %3182 = vst [vmem:[%s586] sm:$0xff] %v3150
        %3183 = vst [vmem:[%s586 + $0x8] sm:$0xff] %v3151
        %3184 = vst [vmem:[%s586 + $0x10] sm:$0xff] %v3152
        %3185 = vst [vmem:[%s586 + $0x18] sm:$0xff] %v3153
        %3186 = vst [vmem:[%s586 + $0x20] sm:$0xff] %v3154
        %3187 = vst [vmem:[%s586 + $0x28] sm:$0xff] %v3155
        %3188 = vst [vmem:[%s586 + $0x30] sm:$0xff] %v3156
        %3189 = vst [vmem:[%s586 + $0x38] sm:$0xff] %v3157
        %3190 = vst [vmem:[%s586 + $0x40] sm:$0xff] %v3158
        %3191 = vst [vmem:[%s586 + $0x48] sm:$0xff] %v3159
        %3192 = vst [vmem:[%s586 + $0x50] sm:$0xff] %v3160
        %3193 = vst [vmem:[%s586 + $0x58] sm:$0xff] %v3161
        %3194 = vst [vmem:[%s586 + $0x60] sm:$0xff] %v3162
        %3195 = vst [vmem:[%s586 + $0x68] sm:$0xff] %v3163
        %3196 = vst [vmem:[%s586 + $0x70] sm:$0xff] %v3164
        %3197 = vst [vmem:[%s586 + $0x78] sm:$0xff] %v3165
        %v3198 = vmul.f32 %v2677, %v2677
        %v3199 = vmul.f32 %v2678, %v2678
        %v3200 = vmul.f32 %v2679, %v2679
        %v3201 = vmul.f32 %v2680, %v2680
        %v3202 = vmul.f32 %v2681, %v2681
        %v3203 = vmul.f32 %v2682, %v2682
        %v3204 = vmul.f32 %v2683, %v2683
        %v3205 = vmul.f32 %v2684, %v2684
        %v3206 = vmul.f32 %v2685, %v2685
        %v3207 = vmul.f32 %v2686, %v2686
        %v3208 = vmul.f32 %v2687, %v2687
        %v3209 = vmul.f32 %v2688, %v2688
        %v3210 = vmul.f32 %v2689, %v2689
        %v3211 = vmul.f32 %v2690, %v2690
        %v3212 = vmul.f32 %v2691, %v2691
        %v3213 = vmul.f32 %v2692, %v2692
        %v3214 = vmul.f32 %v2693, %v2693
        %v3215 = vmul.f32 %v2694, %v2694
        %v3216 = vmul.f32 %v2695, %v2695
        %v3217 = vmul.f32 %v2696, %v2696
        %v3218 = vmul.f32 %v2697, %v2697
        %v3219 = vmul.f32 %v2698, %v2698
        %v3220 = vmul.f32 %v2699, %v2699
        %v3221 = vmul.f32 %v2700, %v2700
        %v3222 = vmul.f32 %v2701, %v2701
        %v3223 = vmul.f32 %v2702, %v2702
        %v3224 = vmul.f32 %v2703, %v2703
        %v3225 = vmul.f32 %v2704, %v2704
        %v3226 = vmul.f32 %v2705, %v2705
        %v3227 = vmul.f32 %v2706, %v2706
        %v3228 = vmul.f32 %v2707, %v2707
        %v3229 = vmul.f32 %v2708, %v2708
        %v3230 = vld [vmem:[#allocation8] sm:$0xff]
        %v3231 = vld [vmem:[#allocation8 + $0x8] sm:$0xff]
        %v3232 = vld [vmem:[#allocation8 + $0x10] sm:$0xff]
        %v3233 = vld [vmem:[#allocation8 + $0x18] sm:$0xff]
        %v3234 = vld [vmem:[#allocation8 + $0x20] sm:$0xff]
        %v3235 = vld [vmem:[#allocation8 + $0x28] sm:$0xff]
        %v3236 = vld [vmem:[#allocation8 + $0x30] sm:$0xff]
        %v3237 = vld [vmem:[#allocation8 + $0x38] sm:$0xff]
        %v3238 = vld [vmem:[#allocation8 + $0x40] sm:$0xff]
        %v3239 = vld [vmem:[#allocation8 + $0x48] sm:$0xff]
        %v3240 = vld [vmem:[#allocation8 + $0x50] sm:$0xff]
        %v3241 = vld [vmem:[#allocation8 + $0x58] sm:$0xff]
        %v3242 = vld [vmem:[#allocation8 + $0x60] sm:$0xff]
        %v3243 = vld [vmem:[#allocation8 + $0x68] sm:$0xff]
        %v3244 = vld [vmem:[#allocation8 + $0x70] sm:$0xff]
        %v3245 = vld [vmem:[#allocation8 + $0x78] sm:$0xff]
        %v3246 = vld [vmem:[#allocation8 + $0x80] sm:$0xff]
        %v3247 = vld [vmem:[#allocation8 + $0x88] sm:$0xff]
        %v3248 = vld [vmem:[#allocation8 + $0x90] sm:$0xff]
        %v3249 = vld [vmem:[#allocation8 + $0x98] sm:$0xff]
        %v3250 = vld [vmem:[#allocation8 + $0xa0] sm:$0xff]
        %v3251 = vld [vmem:[#allocation8 + $0xa8] sm:$0xff]
        %v3252 = vld [vmem:[#allocation8 + $0xb0] sm:$0xff]
        %v3253 = vld [vmem:[#allocation8 + $0xb8] sm:$0xff]
        %v3254 = vld [vmem:[#allocation8 + $0xc0] sm:$0xff]
        %v3255 = vld [vmem:[#allocation8 + $0xc8] sm:$0xff]
        %v3256 = vld [vmem:[#allocation8 + $0xd0] sm:$0xff]
        %v3257 = vld [vmem:[#allocation8 + $0xd8] sm:$0xff]
        %v3258 = vld [vmem:[#allocation8 + $0xe0] sm:$0xff]
        %v3259 = vld [vmem:[#allocation8 + $0xe8] sm:$0xff]
        %v3260 = vld [vmem:[#allocation8 + $0xf0] sm:$0xff]
        %v3261 = vld [vmem:[#allocation8 + $0xf8] sm:$0xff]
        %3262 = vmatprep.subr.mxu0 0.0
        %3263 = vmatpush1.msra.mxu0 %v3230
        %3264 = vmatprep.subr.mxu0 0.0
        %3265 = vmatpush1.msra.mxu0 %v3231
        %3266 = vmatprep.subr.mxu0 0.0
        %3267 = vmatpush1.msra.mxu0 %v3232
        %3268 = vmatprep.subr.mxu0 0.0
        %3269 = vmatpush1.msra.mxu0 %v3233
        %3270 = vmatprep.subr.mxu0 0.0
        %3271 = vmatpush1.msra.mxu0 %v3234
        %3272 = vmatprep.subr.mxu0 0.0
        %3273 = vmatpush1.msra.mxu0 %v3235
        %3274 = vmatprep.subr.mxu0 0.0
        %3275 = vmatpush1.msra.mxu0 %v3236
        %3276 = vmatprep.subr.mxu0 0.0
        %3277 = vmatpush1.msra.mxu0 %v3237
        %3278 = vmatprep.subr.mxu0 0.0
        %3279 = vmatpush1.msra.mxu0 %v3238
        %3280 = vmatprep.subr.mxu0 0.0
        %3281 = vmatpush1.msra.mxu0 %v3239
        %3282 = vmatprep.subr.mxu0 0.0
        %3283 = vmatpush1.msra.mxu0 %v3240
        %3284 = vmatprep.subr.mxu0 0.0
        %3285 = vmatpush1.msra.mxu0 %v3241
        %3286 = vmatprep.subr.mxu0 0.0
        %3287 = vmatpush1.msra.mxu0 %v3242
        %3288 = vmatprep.subr.mxu0 0.0
        %3289 = vmatpush1.msra.mxu0 %v3243
        %3290 = vmatprep.subr.mxu0 0.0
        %3291 = vmatpush1.msra.mxu0 %v3244
        %3292 = vmatprep.subr.mxu0 0.0
        %3293 = vmatpush1.msra.mxu0 %v3245
        %3294 = vmatprep.subr.mxu0 0.0
        %3295 = vmatpush1.msra.mxu0 %v3246
        %3296 = vmatprep.subr.mxu0 0.0
        %3297 = vmatpush1.msra.mxu0 %v3247
        %3298 = vmatprep.subr.mxu0 0.0
        %3299 = vmatpush1.msra.mxu0 %v3248
        %3300 = vmatprep.subr.mxu0 0.0
        %3301 = vmatpush1.msra.mxu0 %v3249
        %3302 = vmatprep.subr.mxu0 0.0
        %3303 = vmatpush1.msra.mxu0 %v3250
        %3304 = vmatprep.subr.mxu0 0.0
        %3305 = vmatpush1.msra.mxu0 %v3251
        %3306 = vmatprep.subr.mxu0 0.0
        %3307 = vmatpush1.msra.mxu0 %v3252
        %3308 = vmatprep.subr.mxu0 0.0
        %3309 = vmatpush1.msra.mxu0 %v3253
        %3310 = vmatprep.subr.mxu0 0.0
        %3311 = vmatpush1.msra.mxu0 %v3254
        %3312 = vmatprep.subr.mxu0 0.0
        %3313 = vmatpush1.msra.mxu0 %v3255
        %3314 = vmatprep.subr.mxu0 0.0
        %3315 = vmatpush1.msra.mxu0 %v3256
        %3316 = vmatprep.subr.mxu0 0.0
        %3317 = vmatpush1.msra.mxu0 %v3257
        %3318 = vmatprep.subr.mxu0 0.0
        %3319 = vmatpush1.msra.mxu0 %v3258
        %3320 = vmatprep.subr.mxu0 0.0
        %3321 = vmatpush1.msra.mxu0 %v3259
        %3322 = vmatprep.subr.mxu0 0.0
        %3323 = vmatpush1.msra.mxu0 %v3260
        %3324 = vmatprep.subr.mxu0 0.0
        %3325 = vmatpush1.msra.mxu0 %v3261
        %3326 = vmatprep.mubr.f32.mxu0 %v3199
        %3327 = vmatmul.mubr.f32.gmra.mrb[0].mxu0 %v3198
        %v3328 = vpop.f32.mrb[0].mxu0
        %v3329 = vadd.f32 0.0, %v3328
        %v3330 = vpop.f32.mrb[0].mxu0
        %3331 = vmatprep.mubr.f32.mxu0 %v3201
        %3332 = vmatmul.mubr.f32.gmra.mrb[0].mxu0 %v3200
        %v3333 = vpop.f32.mrb[0].mxu0
        %v3334 = vadd.f32 0.0, %v3333
        %v3335 = vpop.f32.mrb[0].mxu0
        %3336 = vmatprep.mubr.f32.mxu0 %v3203
        %3337 = vmatmul.mubr.f32.gmra.mrb[0].mxu0 %v3202
        %v3338 = vpop.f32.mrb[0].mxu0
        %v3339 = vadd.f32 0.0, %v3338
        %v3340 = vpop.f32.mrb[0].mxu0
        %3341 = vmatprep.mubr.f32.mxu0 %v3205
        %3342 = vmatmul.mubr.f32.gmra.mrb[0].mxu0 %v3204
        %v3343 = vpop.f32.mrb[0].mxu0
        %v3344 = vadd.f32 0.0, %v3343
        %v3345 = vpop.f32.mrb[0].mxu0
        %3346 = vmatprep.mubr.f32.mxu0 %v3207
        %3347 = vmatmul.mubr.f32.gmra.mrb[0].mxu0 %v3206
        %v3348 = vpop.f32.mrb[0].mxu0
        %v3349 = vadd.f32 0.0, %v3348
        %v3350 = vpop.f32.mrb[0].mxu0
        %3351 = vmatprep.mubr.f32.mxu0 %v3209
        %3352 = vmatmul.mubr.f32.gmra.mrb[0].mxu0 %v3208
        %v3353 = vpop.f32.mrb[0].mxu0
        %v3354 = vadd.f32 0.0, %v3353
        %v3355 = vpop.f32.mrb[0].mxu0
        %3356 = vmatprep.mubr.f32.mxu0 %v3211
        %3357 = vmatmul.mubr.f32.gmra.mrb[0].mxu0 %v3210
        %v3358 = vpop.f32.mrb[0].mxu0
        %v3359 = vadd.f32 0.0, %v3358
        %v3360 = vpop.f32.mrb[0].mxu0
        %3361 = vmatprep.mubr.f32.mxu0 %v3213
        %3362 = vmatmul.mubr.f32.gmra.mrb[0].mxu0 %v3212
        %v3363 = vpop.f32.mrb[0].mxu0
        %v3364 = vadd.f32 0.0, %v3363
        %v3365 = vpop.f32.mrb[0].mxu0
        %3366 = vmatprep.mubr.f32.mxu0 %v3215
        %3367 = vmatmul.mubr.f32.gmra.mrb[0].mxu0 %v3214
        %v3368 = vpop.f32.mrb[0].mxu0
        %v3369 = vadd.f32 0.0, %v3368
        %v3370 = vpop.f32.mrb[0].mxu0
        %3371 = vmatprep.mubr.f32.mxu0 %v3217
        %3372 = vmatmul.mubr.f32.gmra.mrb[0].mxu0 %v3216
        %v3373 = vpop.f32.mrb[0].mxu0
        %v3374 = vadd.f32 0.0, %v3373
        %v3375 = vpop.f32.mrb[0].mxu0
        %3376 = vmatprep.mubr.f32.mxu0 %v3219
        %3377 = vmatmul.mubr.f32.gmra.mrb[0].mxu0 %v3218
        %v3378 = vpop.f32.mrb[0].mxu0
        %v3379 = vadd.f32 0.0, %v3378
        %v3380 = vpop.f32.mrb[0].mxu0
        %3381 = vmatprep.mubr.f32.mxu0 %v3221
        %3382 = vmatmul.mubr.f32.gmra.mrb[0].mxu0 %v3220
        %v3383 = vpop.f32.mrb[0].mxu0
        %v3384 = vadd.f32 0.0, %v3383
        %v3385 = vpop.f32.mrb[0].mxu0
        %3386 = vmatprep.mubr.f32.mxu0 %v3223
        %3387 = vmatmul.mubr.f32.gmra.mrb[0].mxu0 %v3222
        %v3388 = vpop.f32.mrb[0].mxu0
        %v3389 = vadd.f32 0.0, %v3388
        %v3390 = vpop.f32.mrb[0].mxu0
        %3391 = vmatprep.mubr.f32.mxu0 %v3225
        %3392 = vmatmul.mubr.f32.gmra.mrb[0].mxu0 %v3224
        %v3393 = vpop.f32.mrb[0].mxu0
        %v3394 = vadd.f32 0.0, %v3393
        %v3395 = vpop.f32.mrb[0].mxu0
        %3396 = vmatprep.mubr.f32.mxu0 %v3227
        %3397 = vmatmul.mubr.f32.gmra.mrb[0].mxu0 %v3226
        %v3398 = vpop.f32.mrb[0].mxu0
        %v3399 = vadd.f32 0.0, %v3398
        %v3400 = vpop.f32.mrb[0].mxu0
        %3401 = vmatprep.mubr.f32.mxu0 %v3229
        %3402 = vmatmul.mubr.f32.gmra.mrb[0].mxu0 %v3228
        %v3403 = vpop.f32.mrb[0].mxu0
        %v3404 = vadd.f32 0.0, %v3403
        %v3405 = vpop.f32.mrb[0].mxu0
        %3406 = vdwg.mxu0
        %v3407 = vmul.f32 %v3065, %v3065
        %v3408 = vmul.f32 %v3070, %v3070
        %v3409 = vmul.f32 %v3075, %v3075
        %v3410 = vmul.f32 %v3080, %v3080
        %v3411 = vmul.f32 %v3085, %v3085
        %v3412 = vmul.f32 %v3090, %v3090
        %v3413 = vmul.f32 %v3095, %v3095
        %v3414 = vmul.f32 %v3100, %v3100
        %v3415 = vmul.f32 %v3105, %v3105
        %v3416 = vmul.f32 %v3110, %v3110
        %v3417 = vmul.f32 %v3115, %v3115
        %v3418 = vmul.f32 %v3120, %v3120
        %v3419 = vmul.f32 %v3125, %v3125
        %v3420 = vmul.f32 %v3130, %v3130
        %v3421 = vmul.f32 %v3135, %v3135
        %v3422 = vmul.f32 %v3140, %v3140
        %v3423 = vsub.f32 %v3407, %v3329
        %v3424 = vsub.f32 %v3408, %v3334
        %v3425 = vsub.f32 %v3409, %v3339
        %v3426 = vsub.f32 %v3410, %v3344
        %v3427 = vsub.f32 %v3411, %v3349
        %v3428 = vsub.f32 %v3412, %v3354
        %v3429 = vsub.f32 %v3413, %v3359
        %v3430 = vsub.f32 %v3414, %v3364
        %v3431 = vsub.f32 %v3415, %v3369
        %v3432 = vsub.f32 %v3416, %v3374
        %v3433 = vsub.f32 %v3417, %v3379
        %v3434 = vsub.f32 %v3418, %v3384
        %v3435 = vsub.f32 %v3419, %v3389
        %v3436 = vsub.f32 %v3420, %v3394
        %v3437 = vsub.f32 %v3421, %v3399
        %v3438 = vsub.f32 %v3422, %v3404
        %v3439 = vmul.f32 %v3423, 0.5
        %v3440 = vmul.f32 %v3424, 0.5
        %v3441 = vmul.f32 %v3425, 0.5
        %v3442 = vmul.f32 %v3426, 0.5
        %v3443 = vmul.f32 %v3427, 0.5
        %v3444 = vmul.f32 %v3428, 0.5
        %v3445 = vmul.f32 %v3429, 0.5
        %v3446 = vmul.f32 %v3430, 0.5
        %v3447 = vmul.f32 %v3431, 0.5
        %v3448 = vmul.f32 %v3432, 0.5
        %v3449 = vmul.f32 %v3433, 0.5
        %v3450 = vmul.f32 %v3434, 0.5
        %v3451 = vmul.f32 %v3435, 0.5
        %v3452 = vmul.f32 %v3436, 0.5
        %v3453 = vmul.f32 %v3437, 0.5
        %v3454 = vmul.f32 %v3438, 0.5
        %v3455 = vld [vmem:[#allocation10] sm:$0xff]
        %v3456 = vld [vmem:[#allocation10 + $0x8] sm:$0xff]
        %v3457 = vld [vmem:[#allocation10 + $0x10] sm:$0xff]
        %v3458 = vld [vmem:[#allocation10 + $0x18] sm:$0xff]
        %v3459 = vld [vmem:[#allocation10 + $0x20] sm:$0xff]
        %v3460 = vld [vmem:[#allocation10 + $0x28] sm:$0xff]
        %v3461 = vld [vmem:[#allocation10 + $0x30] sm:$0xff]
        %v3462 = vld [vmem:[#allocation10 + $0x38] sm:$0xff]
        %v3463 = vld [vmem:[#allocation10 + $0x40] sm:$0xff]
        %v3464 = vld [vmem:[#allocation10 + $0x48] sm:$0xff]
        %v3465 = vld [vmem:[#allocation10 + $0x50] sm:$0xff]
        %v3466 = vld [vmem:[#allocation10 + $0x58] sm:$0xff]
        %v3467 = vld [vmem:[#allocation10 + $0x60] sm:$0xff]
        %v3468 = vld [vmem:[#allocation10 + $0x68] sm:$0xff]
        %v3469 = vld [vmem:[#allocation10 + $0x70] sm:$0xff]
        %v3470 = vld [vmem:[#allocation10 + $0x78] sm:$0xff]
        %v3471 = vld [vmem:[%s7] sm:$0x1]
        %v3473 = vlaneseq
        %v3474 = vshrl.u32 %v3473, 7
        %v3475 = vsub.s32 0, %v3474
        %v3476 = vrot.slane %v3471, %v3475
        %3478 = vmatprep.subr.mxu0 0.0
        %3479 = vmatpush1.msra.mxu0 %v3455
        %3480 = vmatprep.subr.mxu0 0.0
        %3481 = vmatpush1.msra.mxu0 %v3456
        %3482 = vmatprep.subr.mxu0 0.0
        %3483 = vmatpush1.msra.mxu0 %v3457
        %3484 = vmatprep.subr.mxu0 0.0
        %3485 = vmatpush1.msra.mxu0 %v3458
        %3486 = vmatprep.subr.mxu0 0.0
        %3487 = vmatpush1.msra.mxu0 %v3459
        %3488 = vmatprep.subr.mxu0 0.0
        %3489 = vmatpush1.msra.mxu0 %v3460
        %3490 = vmatprep.subr.mxu0 0.0
        %3491 = vmatpush1.msra.mxu0 %v3461
        %3492 = vmatprep.subr.mxu0 0.0
        %3493 = vmatpush1.msra.mxu0 %v3462
        %3494 = vmatprep.subr.mxu0 0.0
        %3495 = vmatpush1.msra.mxu0 %v3463
        %3496 = vmatprep.subr.mxu0 0.0
        %3497 = vmatpush1.msra.mxu0 %v3464
        %3498 = vmatprep.subr.mxu0 0.0
        %3499 = vmatpush1.msra.mxu0 %v3465
        %3500 = vmatprep.subr.mxu0 0.0
        %3501 = vmatpush1.msra.mxu0 %v3466
        %3502 = vmatprep.subr.mxu0 0.0
        %3503 = vmatpush1.msra.mxu0 %v3467
        %3504 = vmatprep.subr.mxu0 0.0
        %3505 = vmatpush1.msra.mxu0 %v3468
        %3506 = vmatprep.subr.mxu0 0.0
        %3507 = vmatpush1.msra.mxu0 %v3469
        %3508 = vmatprep.subr.mxu0 0.0
        %3509 = vmatpush1.msra.mxu0 %v3470
        %3510 = vmatprep.subr.mxu0 0.0
        %3511 = vmatpush1.msra.mxu0 0.0
        %3512 = vmatprep.subr.mxu0 0.0
        %3513 = vmatpush1.msra.mxu0 0.0
        %3514 = vmatprep.subr.mxu0 0.0
        %3515 = vmatpush1.msra.mxu0 0.0
        %3516 = vmatprep.subr.mxu0 0.0
        %3517 = vmatpush1.msra.mxu0 0.0
        %3518 = vmatprep.subr.mxu0 0.0
        %3519 = vmatpush1.msra.mxu0 0.0
        %3520 = vmatprep.subr.mxu0 0.0
        %3521 = vmatpush1.msra.mxu0 0.0
        %3522 = vmatprep.subr.mxu0 0.0
        %3523 = vmatpush1.msra.mxu0 0.0
        %3524 = vmatprep.subr.mxu0 0.0
        %3525 = vmatpush1.msra.mxu0 0.0
        %3526 = vmatprep.subr.mxu0 0.0
        %3527 = vmatpush1.msra.mxu0 0.0
        %3528 = vmatprep.subr.mxu0 0.0
        %3529 = vmatpush1.msra.mxu0 0.0
        %3530 = vmatprep.subr.mxu0 0.0
        %3531 = vmatpush1.msra.mxu0 0.0
        %3532 = vmatprep.subr.mxu0 0.0
        %3533 = vmatpush1.msra.mxu0 0.0
        %3534 = vmatprep.subr.mxu0 0.0
        %3535 = vmatpush1.msra.mxu0 0.0
        %3536 = vmatprep.subr.mxu0 0.0
        %3537 = vmatpush1.msra.mxu0 0.0
        %3538 = vmatprep.subr.mxu0 0.0
        %3539 = vmatpush1.msra.mxu0 0.0
        %3540 = vmatprep.subr.mxu0 0.0
        %3541 = vmatpush1.msra.mxu0 0.0
        %3542 = vmatprep.mubr.f32.mxu0 0.0
        %3543 = vmatmul.mubr.f32.gmra.mrb[0].mxu0 %v3439
        %v3544 = vpop.f32.mrb[0].mxu0
        %v3545 = vadd.f32 %v3476, %v3544
        %v3546 = vpop.f32.mrb[0].mxu0
        %3547 = vmatprep.mubr.f32.mxu0 0.0
        %3548 = vmatmul.mubr.f32.gmra.mrb[0].mxu0 %v3440
        %v3549 = vpop.f32.mrb[0].mxu0
        %v3550 = vadd.f32 %v3476, %v3549
        %v3551 = vpop.f32.mrb[0].mxu0
        %3552 = vmatprep.mubr.f32.mxu0 0.0
        %3553 = vmatmul.mubr.f32.gmra.mrb[0].mxu0 %v3441
        %v3554 = vpop.f32.mrb[0].mxu0
        %v3555 = vadd.f32 %v3476, %v3554
        %v3556 = vpop.f32.mrb[0].mxu0
        %3557 = vmatprep.mubr.f32.mxu0 0.0
        %3558 = vmatmul.mubr.f32.gmra.mrb[0].mxu0 %v3442
        %v3559 = vpop.f32.mrb[0].mxu0
        %v3560 = vadd.f32 %v3476, %v3559
        %v3561 = vpop.f32.mrb[0].mxu0
        %3562 = vmatprep.mubr.f32.mxu0 0.0
        %3563 = vmatmul.mubr.f32.gmra.mrb[0].mxu0 %v3443
        %v3564 = vpop.f32.mrb[0].mxu0
        %v3565 = vadd.f32 %v3476, %v3564
        %v3566 = vpop.f32.mrb[0].mxu0
        %3567 = vmatprep.mubr.f32.mxu0 0.0
        %3568 = vmatmul.mubr.f32.gmra.mrb[0].mxu0 %v3444
        %v3569 = vpop.f32.mrb[0].mxu0
        %v3570 = vadd.f32 %v3476, %v3569
        %v3571 = vpop.f32.mrb[0].mxu0
        %3572 = vmatprep.mubr.f32.mxu0 0.0
        %3573 = vmatmul.mubr.f32.gmra.mrb[0].mxu0 %v3445
        %v3574 = vpop.f32.mrb[0].mxu0
        %v3575 = vadd.f32 %v3476, %v3574
        %v3576 = vpop.f32.mrb[0].mxu0
        %3577 = vmatprep.mubr.f32.mxu0 0.0
        %3578 = vmatmul.mubr.f32.gmra.mrb[0].mxu0 %v3446
        %v3579 = vpop.f32.mrb[0].mxu0
        %v3580 = vadd.f32 %v3476, %v3579
        %v3581 = vpop.f32.mrb[0].mxu0
        %3582 = vmatprep.mubr.f32.mxu0 0.0
        %3583 = vmatmul.mubr.f32.gmra.mrb[0].mxu0 %v3447
        %v3584 = vpop.f32.mrb[0].mxu0
        %v3585 = vadd.f32 %v3476, %v3584
        %v3586 = vpop.f32.mrb[0].mxu0
        %3587 = vmatprep.mubr.f32.mxu0 0.0
        %3588 = vmatmul.mubr.f32.gmra.mrb[0].mxu0 %v3448
        %v3589 = vpop.f32.mrb[0].mxu0
        %v3590 = vadd.f32 %v3476, %v3589
        %v3591 = vpop.f32.mrb[0].mxu0
        %3592 = vmatprep.mubr.f32.mxu0 0.0
        %3593 = vmatmul.mubr.f32.gmra.mrb[0].mxu0 %v3449
        %v3594 = vpop.f32.mrb[0].mxu0
        %v3595 = vadd.f32 %v3476, %v3594
        %v3596 = vpop.f32.mrb[0].mxu0
        %3597 = vmatprep.mubr.f32.mxu0 0.0
        %3598 = vmatmul.mubr.f32.gmra.mrb[0].mxu0 %v3450
        %v3599 = vpop.f32.mrb[0].mxu0
        %v3600 = vadd.f32 %v3476, %v3599
        %v3601 = vpop.f32.mrb[0].mxu0
        %3602 = vmatprep.mubr.f32.mxu0 0.0
        %3603 = vmatmul.mubr.f32.gmra.mrb[0].mxu0 %v3451
        %v3604 = vpop.f32.mrb[0].mxu0
        %v3605 = vadd.f32 %v3476, %v3604
        %v3606 = vpop.f32.mrb[0].mxu0
        %3607 = vmatprep.mubr.f32.mxu0 0.0
        %3608 = vmatmul.mubr.f32.gmra.mrb[0].mxu0 %v3452
        %v3609 = vpop.f32.mrb[0].mxu0
        %v3610 = vadd.f32 %v3476, %v3609
        %v3611 = vpop.f32.mrb[0].mxu0
        %3612 = vmatprep.mubr.f32.mxu0 0.0
        %3613 = vmatmul.mubr.f32.gmra.mrb[0].mxu0 %v3453
        %v3614 = vpop.f32.mrb[0].mxu0
        %v3615 = vadd.f32 %v3476, %v3614
        %v3616 = vpop.f32.mrb[0].mxu0
        %3617 = vmatprep.mubr.f32.mxu0 0.0
        %3618 = vmatmul.mubr.f32.gmra.mrb[0].mxu0 %v3454
        %v3619 = vpop.f32.mrb[0].mxu0
        %v3620 = vadd.f32 %v3476, %v3619
        %v3621 = vpop.f32.mrb[0].mxu0
        %3622 = vdwg.mxu0
        %v3623 = vmax.f32 %v3545, 0.0
        %v3624 = vmax.f32 %v3550, 0.0
        %v3625 = vmax.f32 %v3555, 0.0
        %v3626 = vmax.f32 %v3560, 0.0
        %v3627 = vmax.f32 %v3565, 0.0
        %v3628 = vmax.f32 %v3570, 0.0
        %v3629 = vmax.f32 %v3575, 0.0
        %v3630 = vmax.f32 %v3580, 0.0
        %v3631 = vmax.f32 %v3585, 0.0
        %v3632 = vmax.f32 %v3590, 0.0
        %v3633 = vmax.f32 %v3595, 0.0
        %v3634 = vmax.f32 %v3600, 0.0
        %v3635 = vmax.f32 %v3605, 0.0
        %v3636 = vmax.f32 %v3610, 0.0
        %v3637 = vmax.f32 %v3615, 0.0
        %v3638 = vmax.f32 %v3620, 0.0
        %v3639 = vld [vmem:[#allocation11] sm:$0xff]
        %v3640 = vld [vmem:[#allocation11 + $0x8] sm:$0xff]
        %v3641 = vld [vmem:[#allocation11 + $0x10] sm:$0xff]
        %v3642 = vld [vmem:[#allocation11 + $0x18] sm:$0xff]
        %v3643 = vld [vmem:[#allocation11 + $0x20] sm:$0xff]
        %v3644 = vld [vmem:[#allocation11 + $0x28] sm:$0xff]
        %v3645 = vld [vmem:[#allocation11 + $0x30] sm:$0xff]
        %v3646 = vld [vmem:[#allocation11 + $0x38] sm:$0xff]
        %v3647 = vld [vmem:[#allocation11 + $0x40] sm:$0xff]
        %v3648 = vld [vmem:[#allocation11 + $0x48] sm:$0xff]
        %v3649 = vld [vmem:[#allocation11 + $0x50] sm:$0xff]
        %v3650 = vld [vmem:[#allocation11 + $0x58] sm:$0xff]
        %v3651 = vld [vmem:[#allocation11 + $0x60] sm:$0xff]
        %v3652 = vld [vmem:[#allocation11 + $0x68] sm:$0xff]
        %v3653 = vld [vmem:[#allocation11 + $0x70] sm:$0xff]
        %v3654 = vld [vmem:[#allocation11 + $0x78] sm:$0xff]
        %v3655 = vld [vmem:[%s9] sm:$0x1]
        %v3657 = vlaneseq
        %v3658 = vshrl.u32 %v3657, 7
        %v3659 = vsub.s32 0, %v3658
        %v3660 = vrot.slane %v3655, %v3659
        %3662 = vmatprep.subr.mxu0 0.0
        %3663 = vmatpush1.msra.mxu0 %v3639
        %3664 = vmatprep.subr.mxu0 0.0
        %3665 = vmatpush1.msra.mxu0 %v3640
        %3666 = vmatprep.subr.mxu0 0.0
        %3667 = vmatpush1.msra.mxu0 %v3641
        %3668 = vmatprep.subr.mxu0 0.0
        %3669 = vmatpush1.msra.mxu0 %v3642
        %3670 = vmatprep.subr.mxu0 0.0
        %3671 = vmatpush1.msra.mxu0 %v3643
        %3672 = vmatprep.subr.mxu0 0.0
        %3673 = vmatpush1.msra.mxu0 %v3644
        %3674 = vmatprep.subr.mxu0 0.0
        %3675 = vmatpush1.msra.mxu0 %v3645
        %3676 = vmatprep.subr.mxu0 0.0
        %3677 = vmatpush1.msra.mxu0 %v3646
        %3678 = vmatprep.subr.mxu0 0.0
        %3679 = vmatpush1.msra.mxu0 %v3647
        %3680 = vmatprep.subr.mxu0 0.0
        %3681 = vmatpush1.msra.mxu0 %v3648
        %3682 = vmatprep.subr.mxu0 0.0
        %3683 = vmatpush1.msra.mxu0 %v3649
        %3684 = vmatprep.subr.mxu0 0.0
        %3685 = vmatpush1.msra.mxu0 %v3650
        %3686 = vmatprep.subr.mxu0 0.0
        %3687 = vmatpush1.msra.mxu0 %v3651
        %3688 = vmatprep.subr.mxu0 0.0
        %3689 = vmatpush1.msra.mxu0 %v3652
        %3690 = vmatprep.subr.mxu0 0.0
        %3691 = vmatpush1.msra.mxu0 %v3653
        %3692 = vmatprep.subr.mxu0 0.0
        %3693 = vmatpush1.msra.mxu0 %v3654
        %3694 = vmatprep.subr.mxu0 0.0
        %3695 = vmatpush1.msra.mxu0 0.0
        %3696 = vmatprep.subr.mxu0 0.0
        %3697 = vmatpush1.msra.mxu0 0.0
        %3698 = vmatprep.subr.mxu0 0.0
        %3699 = vmatpush1.msra.mxu0 0.0
        %3700 = vmatprep.subr.mxu0 0.0
        %3701 = vmatpush1.msra.mxu0 0.0
        %3702 = vmatprep.subr.mxu0 0.0
        %3703 = vmatpush1.msra.mxu0 0.0
        %3704 = vmatprep.subr.mxu0 0.0
        %3705 = vmatpush1.msra.mxu0 0.0
        %3706 = vmatprep.subr.mxu0 0.0
        %3707 = vmatpush1.msra.mxu0 0.0
        %3708 = vmatprep.subr.mxu0 0.0
        %3709 = vmatpush1.msra.mxu0 0.0
        %3710 = vmatprep.subr.mxu0 0.0
        %3711 = vmatpush1.msra.mxu0 0.0
        %3712 = vmatprep.subr.mxu0 0.0
        %3713 = vmatpush1.msra.mxu0 0.0
        %3714 = vmatprep.subr.mxu0 0.0
        %3715 = vmatpush1.msra.mxu0 0.0
        %3716 = vmatprep.subr.mxu0 0.0
        %3717 = vmatpush1.msra.mxu0 0.0
        %3718 = vmatprep.subr.mxu0 0.0
        %3719 = vmatpush1.msra.mxu0 0.0
        %3720 = vmatprep.subr.mxu0 0.0
        %3721 = vmatpush1.msra.mxu0 0.0
        %3722 = vmatprep.subr.mxu0 0.0
        %3723 = vmatpush1.msra.mxu0 0.0
        %3724 = vmatprep.subr.mxu0 0.0
        %3725 = vmatpush1.msra.mxu0 0.0
        %3726 = vmatprep.mubr.f32.mxu0 0.0
        %3727 = vmatmul.mubr.f32.gmra.mrb[0].mxu0 %v3623
        %v3728 = vpop.f32.mrb[0].mxu0
        %v3729 = vadd.f32 %v3660, %v3728
        %v3730 = vpop.f32.mrb[0].mxu0
        %3731 = vmatprep.mubr.f32.mxu0 0.0
        %3732 = vmatmul.mubr.f32.gmra.mrb[0].mxu0 %v3624
        %v3733 = vpop.f32.mrb[0].mxu0
        %v3734 = vadd.f32 %v3660, %v3733
        %v3735 = vpop.f32.mrb[0].mxu0
        %3736 = vmatprep.mubr.f32.mxu0 0.0
        %3737 = vmatmul.mubr.f32.gmra.mrb[0].mxu0 %v3625
        %v3738 = vpop.f32.mrb[0].mxu0
        %v3739 = vadd.f32 %v3660, %v3738
        %v3740 = vpop.f32.mrb[0].mxu0
        %3741 = vmatprep.mubr.f32.mxu0 0.0
        %3742 = vmatmul.mubr.f32.gmra.mrb[0].mxu0 %v3626
        %v3743 = vpop.f32.mrb[0].mxu0
        %v3744 = vadd.f32 %v3660, %v3743
        %v3745 = vpop.f32.mrb[0].mxu0
        %3746 = vmatprep.mubr.f32.mxu0 0.0
        %3747 = vmatmul.mubr.f32.gmra.mrb[0].mxu0 %v3627
        %v3748 = vpop.f32.mrb[0].mxu0
        %v3749 = vadd.f32 %v3660, %v3748
        %v3750 = vpop.f32.mrb[0].mxu0
        %3751 = vmatprep.mubr.f32.mxu0 0.0
        %3752 = vmatmul.mubr.f32.gmra.mrb[0].mxu0 %v3628
        %v3753 = vpop.f32.mrb[0].mxu0
        %v3754 = vadd.f32 %v3660, %v3753
        %v3755 = vpop.f32.mrb[0].mxu0
        %3756 = vmatprep.mubr.f32.mxu0 0.0
        %3757 = vmatmul.mubr.f32.gmra.mrb[0].mxu0 %v3629
        %v3758 = vpop.f32.mrb[0].mxu0
        %v3759 = vadd.f32 %v3660, %v3758
        %v3760 = vpop.f32.mrb[0].mxu0
        %3761 = vmatprep.mubr.f32.mxu0 0.0
        %3762 = vmatmul.mubr.f32.gmra.mrb[0].mxu0 %v3630
        %v3763 = vpop.f32.mrb[0].mxu0
        %v3764 = vadd.f32 %v3660, %v3763
        %v3765 = vpop.f32.mrb[0].mxu0
        %3766 = vmatprep.mubr.f32.mxu0 0.0
        %3767 = vmatmul.mubr.f32.gmra.mrb[0].mxu0 %v3631
        %v3768 = vpop.f32.mrb[0].mxu0
        %v3769 = vadd.f32 %v3660, %v3768
        %v3770 = vpop.f32.mrb[0].mxu0
        %3771 = vmatprep.mubr.f32.mxu0 0.0
        %3772 = vmatmul.mubr.f32.gmra.mrb[0].mxu0 %v3632
        %v3773 = vpop.f32.mrb[0].mxu0
        %v3774 = vadd.f32 %v3660, %v3773
        %v3775 = vpop.f32.mrb[0].mxu0
        %3776 = vmatprep.mubr.f32.mxu0 0.0
        %3777 = vmatmul.mubr.f32.gmra.mrb[0].mxu0 %v3633
        %v3778 = vpop.f32.mrb[0].mxu0
        %v3779 = vadd.f32 %v3660, %v3778
        %v3780 = vpop.f32.mrb[0].mxu0
        %3781 = vmatprep.mubr.f32.mxu0 0.0
        %3782 = vmatmul.mubr.f32.gmra.mrb[0].mxu0 %v3634
        %v3783 = vpop.f32.mrb[0].mxu0
        %v3784 = vadd.f32 %v3660, %v3783
        %v3785 = vpop.f32.mrb[0].mxu0
        %3786 = vmatprep.mubr.f32.mxu0 0.0
        %3787 = vmatmul.mubr.f32.gmra.mrb[0].mxu0 %v3635
        %v3788 = vpop.f32.mrb[0].mxu0
        %v3789 = vadd.f32 %v3660, %v3788
        %v3790 = vpop.f32.mrb[0].mxu0
        %3791 = vmatprep.mubr.f32.mxu0 0.0
        %3792 = vmatmul.mubr.f32.gmra.mrb[0].mxu0 %v3636
        %v3793 = vpop.f32.mrb[0].mxu0
        %v3794 = vadd.f32 %v3660, %v3793
        %v3795 = vpop.f32.mrb[0].mxu0
        %3796 = vmatprep.mubr.f32.mxu0 0.0
        %3797 = vmatmul.mubr.f32.gmra.mrb[0].mxu0 %v3637
        %v3798 = vpop.f32.mrb[0].mxu0
        %v3799 = vadd.f32 %v3660, %v3798
        %v3800 = vpop.f32.mrb[0].mxu0
        %3801 = vmatprep.mubr.f32.mxu0 0.0
        %3802 = vmatmul.mubr.f32.gmra.mrb[0].mxu0 %v3638
        %v3803 = vpop.f32.mrb[0].mxu0
        %v3804 = vadd.f32 %v3660, %v3803
        %v3805 = vpop.f32.mrb[0].mxu0
        %3806 = vdwg.mxu0
        %3807 = vst [vmem:[%s593] sm:$0xff] %v3729
        %3808 = vst [vmem:[%s593 + $0x8] sm:$0xff] %v3734
        %3809 = vst [vmem:[%s593 + $0x10] sm:$0xff] %v3739
        %3810 = vst [vmem:[%s593 + $0x18] sm:$0xff] %v3744
        %3811 = vst [vmem:[%s593 + $0x20] sm:$0xff] %v3749
        %3812 = vst [vmem:[%s593 + $0x28] sm:$0xff] %v3754
        %3813 = vst [vmem:[%s593 + $0x30] sm:$0xff] %v3759
        %3814 = vst [vmem:[%s593 + $0x38] sm:$0xff] %v3764
        %3815 = vst [vmem:[%s593 + $0x40] sm:$0xff] %v3769
        %3816 = vst [vmem:[%s593 + $0x48] sm:$0xff] %v3774
        %3817 = vst [vmem:[%s593 + $0x50] sm:$0xff] %v3779
        %3818 = vst [vmem:[%s593 + $0x58] sm:$0xff] %v3784
        %3819 = vst [vmem:[%s593 + $0x60] sm:$0xff] %v3789
        %3820 = vst [vmem:[%s593 + $0x68] sm:$0xff] %v3794
        %3821 = vst [vmem:[%s593 + $0x70] sm:$0xff] %v3799
        %3822 = vst [vmem:[%s593 + $0x78] sm:$0xff] %v3804
        %v3823 = vadd.f32 %v2904, %v3150
        %v3824 = vadd.f32 %v2910, %v3151
        %v3825 = vadd.f32 %v2916, %v3152
        %v3826 = vadd.f32 %v2922, %v3153
        %v3827 = vadd.f32 %v2928, %v3154
        %v3828 = vadd.f32 %v2934, %v3155
        %v3829 = vadd.f32 %v2940, %v3156
        %v3830 = vadd.f32 %v2946, %v3157
        %v3831 = vadd.f32 %v2952, %v3158
        %v3832 = vadd.f32 %v2958, %v3159
        %v3833 = vadd.f32 %v2964, %v3160
        %v3834 = vadd.f32 %v2970, %v3161
        %v3835 = vadd.f32 %v2976, %v3162
        %v3836 = vadd.f32 %v2982, %v3163
        %v3837 = vadd.f32 %v2988, %v3164
        %v3838 = vadd.f32 %v2994, %v3165
        %v3839 = vadd.f32 %v3823, %v3729
        %v3840 = vadd.f32 %v3824, %v3734
        %v3841 = vadd.f32 %v3825, %v3739
        %v3842 = vadd.f32 %v3826, %v3744
        %v3843 = vadd.f32 %v3827, %v3749
        %v3844 = vadd.f32 %v3828, %v3754
        %v3845 = vadd.f32 %v3829, %v3759
        %v3846 = vadd.f32 %v3830, %v3764
        %v3847 = vadd.f32 %v3831, %v3769
        %v3848 = vadd.f32 %v3832, %v3774
        %v3849 = vadd.f32 %v3833, %v3779
        %v3850 = vadd.f32 %v3834, %v3784
        %v3851 = vadd.f32 %v3835, %v3789
        %v3852 = vadd.f32 %v3836, %v3794
        %v3853 = vadd.f32 %v3837, %v3799
        %v3854 = vadd.f32 %v3838, %v3804
        %3855 = vst [vmem:[%s565] sm:$0xff] %v3839
        %3856 = vst [vmem:[%s565 + $0x8] sm:$0xff] %v3840
        %3857 = vst [vmem:[%s565 + $0x10] sm:$0xff] %v3841
        %3858 = vst [vmem:[%s565 + $0x18] sm:$0xff] %v3842
        %3859 = vst [vmem:[%s565 + $0x20] sm:$0xff] %v3843
        %3860 = vst [vmem:[%s565 + $0x28] sm:$0xff] %v3844
        %3861 = vst [vmem:[%s565 + $0x30] sm:$0xff] %v3845
        %3862 = vst [vmem:[%s565 + $0x38] sm:$0xff] %v3846
        %3863 = vst [vmem:[%s565 + $0x40] sm:$0xff] %v3847
        %3864 = vst [vmem:[%s565 + $0x48] sm:$0xff] %v3848
        %3865 = vst [vmem:[%s565 + $0x50] sm:$0xff] %v3849
        %3866 = vst [vmem:[%s565 + $0x58] sm:$0xff] %v3850
        %3867 = vst [vmem:[%s565 + $0x60] sm:$0xff] %v3851
        %3868 = vst [vmem:[%s565 + $0x68] sm:$0xff] %v3852
        %3869 = vst [vmem:[%s565 + $0x70] sm:$0xff] %v3853
        %3870 = vst [vmem:[%s565 + $0x78] sm:$0xff] %v3854
        %s3871 = sand.u32 %s264, 1
        %s3872 = scalar_lea.sflag [#allocation4], %s3871
        %s3873 = sand.u32 %s264, 1
        %s3874 = smul.addr %s3873, 128
        %s3875 = scalar_lea.vmem [#allocation13], %s3874
        %s3876 = sand.u32 %s41, 1
        %s3877 = scalar_lea.sflag [#allocation15], %s3876
        %s3878 = sand.u32 %s290, 1
        %s3879 = smul.addr %s3878, 256
        %s3880 = scalar_lea.vmem [#allocation14], %s3879
        %s3881 = sand.u32 %s41, 1
        %s3882 = scalar_lea.sflag [#allocation15], %s3881
        %s3883 = sand.u32 %s316, 1
        %s3884 = smul.addr %s3883, 128
        %s3885 = scalar_lea.vmem [#allocation16], %s3884
        %s3886 = sand.u32 %s41, 1
        %s3887 = scalar_lea.sflag [#allocation18], %s3886
        %s3888 = sand.u32 %s342, 1
        %s3889 = smul.addr %s3888, 128
        %s3890 = scalar_lea.vmem [#allocation17], %s3889
        %s3891 = sand.u32 %s41, 1
        %s3892 = scalar_lea.sflag [#allocation18], %s3891
        %s3893 = sand.u32 %s368, 1
        %s3894 = smul.addr %s3893, 128
        %s3895 = scalar_lea.vmem [#allocation19], %s3894
        // Predicated region
        $region85: #{tpu_custom_call.1} parent=59 // pred_check
          %p3896 = pneg %p274
        $region86: #{tpu_custom_call.1} parent=59 // pred_check_branch
          %3898 = sbr.rel (%p3896) target = $region88
        $region87: #{tpu_custom_call.1} parent=59 // pred_region
          %s3899 = smul.u32 16, %s41
          %s3901 = ssub.s32 2048, 2048
          %3902 = vsyncadd %s3872, %s3901
          %s3903 = smul.addr %s3899, 128
          %s3904 = scalar_lea.hbm %s10, %s3903
          %s3905 = sshll.u32 %s3875, 4
          %s3906 = int_to_ptr.vmem [resolvable:$true] %s3905
          %3911 = dma.vmem_to_hbm [thread:$0]  %s3906, 2048, %s3904, %s3872, 128, 128, 8
        $region88: #{tpu_custom_call.1} parent=59 // pred_fallthru
          _
        // Predicated region
        $region89: #{tpu_custom_call.1} parent=59 // pred_check
          %p3912 = pneg %p300
        $region90: #{tpu_custom_call.1} parent=59 // pred_check_branch
          %3914 = sbr.rel (%p3912) target = $region92
        $region91: #{tpu_custom_call.1} parent=59 // pred_region
          %s3915 = smul.u32 16, %s41
          %s3917 = ssub.s32 4096, 4096
          %3918 = vsyncadd %s3877, %s3917
          %s3919 = smul.addr %s3915, 2
          %s3920 = smul.addr %s3919, 128
          %s3921 = scalar_lea.hbm %s11, %s3920
          %s3922 = sshll.u32 %s3880, 4
          %s3923 = int_to_ptr.vmem [resolvable:$true] %s3922
          %3928 = dma.vmem_to_hbm [thread:$0]  %s3923, 4096, %s3921, %s3877, 256, 256, 16
        $region92: #{tpu_custom_call.1} parent=59 // pred_fallthru
          _
        // Predicated region
        $region93: #{tpu_custom_call.1} parent=59 // pred_check
          %p3929 = pneg %p326
        $region94: #{tpu_custom_call.1} parent=59 // pred_check_branch
          %3931 = sbr.rel (%p3929) target = $region96
        $region95: #{tpu_custom_call.1} parent=59 // pred_region
          %s3932 = smul.u32 16, %s41
          %s3934 = ssub.s32 2048, 2048
          %3935 = vsyncadd %s3882, %s3934
          %s3936 = smul.addr %s3932, 128
          %s3937 = scalar_lea.hbm %s12, %s3936
          %s3938 = sshll.u32 %s3885, 4
          %s3939 = int_to_ptr.vmem [resolvable:$true] %s3938
          %3944 = dma.vmem_to_hbm [thread:$0]  %s3939, 2048, %s3937, %s3882, 128, 128, 8
        $region96: #{tpu_custom_call.1} parent=59 // pred_fallthru
          _
        // Predicated region
        $region97: #{tpu_custom_call.1} parent=59 // pred_check
          %p3945 = pneg %p352
        $region98: #{tpu_custom_call.1} parent=59 // pred_check_branch
          %3947 = sbr.rel (%p3945) target = $region100
        $region99: #{tpu_custom_call.1} parent=59 // pred_region
          %s3948 = smul.u32 16, %s41
          %s3950 = ssub.s32 2048, 2048
          %3951 = vsyncadd %s3887, %s3950
          %s3952 = smul.addr %s3948, 128
          %s3953 = scalar_lea.hbm %s13, %s3952
          %s3954 = sshll.u32 %s3890, 4
          %s3955 = int_to_ptr.vmem [resolvable:$true] %s3954
          %3960 = dma.vmem_to_hbm [thread:$0]  %s3955, 2048, %s3953, %s3887, 128, 128, 8
        $region100: #{tpu_custom_call.1} parent=59 // pred_fallthru
          _
        // Predicated region
        $region101: #{tpu_custom_call.1} parent=59 // pred_check
          %p3961 = pneg %p378
        $region102: #{tpu_custom_call.1} parent=59 // pred_check_branch
          %3963 = sbr.rel (%p3961) target = $region104
        $region103: #{tpu_custom_call.1} parent=59 // pred_region
          %s3964 = smul.u32 16, %s41
          %s3966 = ssub.s32 2048, 2048
          %3967 = vsyncadd %s3892, %s3966
          %s3968 = smul.addr %s3964, 128
          %s3969 = scalar_lea.hbm %s14, %s3968
          %s3970 = sshll.u32 %s3895, 4
          %s3971 = int_to_ptr.vmem [resolvable:$true] %s3970
          %3976 = dma.vmem_to_hbm [thread:$0]  %s3971, 2048, %s3969, %s3892, 128, 128, 8
        $region104: #{tpu_custom_call.1} parent=59 // pred_fallthru
          _
      $region60: #{tpu_custom_call.1} parent=5 // pred_fallthru
        _
      %p3977 = scmp.le.s32.totalorder 2, %s36
      // Predicated region
      $region105: #{tpu_custom_call.1} parent=5 // pred_check
        %p3978 = pneg %p3977
      $region106: #{tpu_custom_call.1} parent=5 // pred_check_branch
        %3980 = sbr.rel (%p3978) target = $region108
      $region107: #{tpu_custom_call.1} parent=5 // pred_region
        %s3981 = ssub.s32 %s36, 2
        // Predicated region
        $region109: #{tpu_custom_call.1} parent=107 // pred_check
          %p3982 = pneg %p280
        $region110: #{tpu_custom_call.1} parent=107 // pred_check_branch
          %3984 = sbr.rel (%p3982) target = $region112
        $region111: #{tpu_custom_call.1} parent=107 // pred_region
          %s3985 = sand.u32 %s265, 1
          %s3986 = scalar_lea.sflag [#allocation4], %s3985
          %s3987 = sand.u32 %s265, 1
          %s3988 = smul.addr %s3987, 128
          %s3989 = scalar_lea.vmem [#allocation13], %s3988
          %3990 = dma.done %s3986, 2048
        $region112: #{tpu_custom_call.1} parent=107 // pred_fallthru
          _
        // Predicated region
        $region113: #{tpu_custom_call.1} parent=107 // pred_check
          %p3991 = pneg %p306
        $region114: #{tpu_custom_call.1} parent=107 // pred_check_branch
          %3993 = sbr.rel (%p3991) target = $region116
        $region115: #{tpu_custom_call.1} parent=107 // pred_region
          %s3994 = sand.u32 %s42, 1
          %s3995 = scalar_lea.sflag [#allocation15], %s3994
          %s3996 = sand.u32 %s291, 1
          %s3997 = smul.addr %s3996, 256
          %s3998 = scalar_lea.vmem [#allocation14], %s3997
          %3999 = dma.done %s3995, 4096
        $region116: #{tpu_custom_call.1} parent=107 // pred_fallthru
          _
        // Predicated region
        $region117: #{tpu_custom_call.1} parent=107 // pred_check
          %p4000 = pneg %p332
        $region118: #{tpu_custom_call.1} parent=107 // pred_check_branch
          %4002 = sbr.rel (%p4000) target = $region120
        $region119: #{tpu_custom_call.1} parent=107 // pred_region
          %s4003 = sand.u32 %s42, 1
          %s4004 = scalar_lea.sflag [#allocation15], %s4003
          %s4005 = sand.u32 %s317, 1
          %s4006 = smul.addr %s4005, 128
          %s4007 = scalar_lea.vmem [#allocation16], %s4006
          %4008 = dma.done %s4004, 2048
        $region120: #{tpu_custom_call.1} parent=107 // pred_fallthru
          _
        // Predicated region
        $region121: #{tpu_custom_call.1} parent=107 // pred_check
          %p4009 = pneg %p358
        $region122: #{tpu_custom_call.1} parent=107 // pred_check_branch
          %4011 = sbr.rel (%p4009) target = $region124
        $region123: #{tpu_custom_call.1} parent=107 // pred_region
          %s4012 = sand.u32 %s42, 1
          %s4013 = scalar_lea.sflag [#allocation18], %s4012
          %s4014 = sand.u32 %s343, 1
          %s4015 = smul.addr %s4014, 128
          %s4016 = scalar_lea.vmem [#allocation17], %s4015
          %4017 = dma.done %s4013, 2048
        $region124: #{tpu_custom_call.1} parent=107 // pred_fallthru
          _
        // Predicated region
        $region125: #{tpu_custom_call.1} parent=107 // pred_check
          %p4018 = pneg %p384
        $region126: #{tpu_custom_call.1} parent=107 // pred_check_branch
          %4020 = sbr.rel (%p4018) target = $region128
        $region127: #{tpu_custom_call.1} parent=107 // pred_region
          %s4021 = sand.u32 %s42, 1
          %s4022 = scalar_lea.sflag [#allocation18], %s4021
          %s4023 = sand.u32 %s369, 1
          %s4024 = smul.addr %s4023, 128
          %s4025 = scalar_lea.vmem [#allocation19], %s4024
          %4026 = dma.done %s4022, 2048
        $region128: #{tpu_custom_call.1} parent=107 // pred_fallthru
          _
      $region108: #{tpu_custom_call.1} parent=5 // pred_fallthru
        _
    $region6: #{tpu_custom_call.1} parent=1 // loop_footer
      %s40 = sadd.s32 1, %s36
    $region7: #{tpu_custom_call.1} parent=1 // loop_footer_branch
      %35 = sbr.rel target = $region3
    $region8: #{tpu_custom_call.1} parent=1 // loop_exit
      _
    %4027 = vsyncpa [#allocation3], 1
    %s4028 = scalar_lea.sflag [#allocation3], 1
    %4029 = vsyncpa %s4028, 1
    %4030 = vsyncpa [#allocation6], 1
    %4031 = vsyncpa [#allocation9], 1
    %4032 = vsyncpa [#allocation12], 1
    %4033 = vsyncpa [#allocation4], 1
    %s4034 = scalar_lea.sflag [#allocation4], 1
    %4035 = vsyncpa %s4034, 1
    %4036 = vsyncpa [#allocation15], 1
    %s4037 = scalar_lea.sflag [#allocation15], 1
    %4038 = vsyncpa %s4037, 1
    %4039 = vsyncpa [#allocation18], 1
    %s4040 = scalar_lea.sflag [#allocation18], 1
    %4041 = vsyncpa %s4040, 1

</llo_original>
